<compile_context>
chip_gen: v7x
topology: tpu7x:2x2x1
jax: 0.10.0
libtpu: 0.0.40
codegen_flags: <defaults>
</compile_context>

<pallas_src>
import jax
import jax.numpy as jnp
from jax import lax
from jax.experimental import pallas as pl
from jax.experimental.pallas import tpu as pltpu


# ---------------------------------------------------------------------------
# Pallas kernel: one (batch-block, T-chunk) of the LSTM recurrence + Linear.
# ---------------------------------------------------------------------------
def lstm_linear_kernel(x_ref, h0_ref, c0_ref, wih_ref, whh_ref,
                       wlin_ref, blin_ref, out_ref,
                       h_carry, c_carry, gx_ref, hseq_ref):
    # x_ref   : (T_tile*BB, DP)  bf16, time-major flattened (t, b) rows;
    #                            column 116 carries a constant 1.0 (bias).
    # h0_ref  : (BB, HP)  f32    initial hidden state of this batch block
    # c0_ref  : (BB, HP)  f32    initial cell state
    # wih_ref : (DP, 4*HP) bf16  input->gates (transposed, gate-padded,
    #                            bias folded into row 116)
    # whh_ref : (HP, 4*HP) bf16  hidden->gates (transposed, gate-padded)
    # wlin_ref: (HP, CP)  bf16   final linear weight (transposed, padded)
    # blin_ref: (1, CP)   f32    final linear bias (padded)
    # out_ref : (T_tile*BB, CP) f32
    # h_carry, c_carry : (BB, HP) f32 VMEM scratch (persist across time chunks)
    # gx_ref  : (T_tile*BB, 4*HP) f32 VMEM scratch (input projection + bias)
    # hseq_ref: (T_tile*BB, HP)  f32 VMEM scratch (hidden states of this chunk)
    BB = h0_ref.shape[0]
    HP = whh_ref.shape[0]
    T_tile = x_ref.shape[0] // BB

    # Re-initialize the carried state at time-chunk 0 of every batch block.
    @pl.when(pl.program_id(1) == 0)
    def _init():
        h_carry[...] = h0_ref[...]
        c_carry[...] = c0_ref[...]

    # (1) Bulk input projection for the whole chunk (bias folded into W_ih via
    #     the 1.0 column of x): one bf16 MXU matmul, f32 accumulation.
    gx_ref[...] = jnp.dot(x_ref[...], wih_ref[...],
                          preferred_element_type=jnp.float32)

    # (2) Recurrence: per step only h @ W_hh (bf16 operands) + pointwise gate
    #     math.  Gate slices are 128-lane aligned because HP == 128.
    def step(t, carry):
        h, c = carry
        base = pl.multiple_of(t * BB, BB)
        gates = (gx_ref[pl.ds(base, BB), :]
                 + jnp.dot(h.astype(jnp.bfloat16), whh_ref[...],
                           preferred_element_type=jnp.float32))  # (BB, 4*HP)
        # PyTorch LSTM gate order: input, forget, cell(g), output
        i_g = jax.nn.sigmoid(gates[:, 0 * HP:1 * HP])
        f_g = jax.nn.sigmoid(gates[:, 1 * HP:2 * HP])
        g_g = jnp.tanh(gates[:, 2 * HP:3 * HP])
        o_g = jax.nn.sigmoid(gates[:, 3 * HP:4 * HP])
        c_new = f_g * c + i_g * g_g
        h_new = o_g * jnp.tanh(c_new)
        hseq_ref[pl.ds(base, BB), :] = h_new
        return h_new, c_new

    unroll = True if T_tile <= 32 else 8
    h_fin, c_fin = lax.fori_loop(0, T_tile, step,
                                 (h_carry[...], c_carry[...]),
                                 unroll=unroll)
    h_carry[...] = h_fin
    c_carry[...] = c_fin

    # (3) Bulk output projection (bf16 operands) + one lane-dense store.
    out_ref[...] = (jnp.dot(hseq_ref[...].astype(jnp.bfloat16), wlin_ref[...],
                            preferred_element_type=jnp.float32)
                    + blin_ref[...]).astype(out_ref.dtype)


def _choose_t_tile(T, BB, DP, GP, HP, CP, vmem_budget_bytes=16 * 1024 * 1024):
    """Pick the time-chunk size so the per-chunk VMEM working set stays within
    a budget that is safe on v7x (64 MiB physical) as well as v5e/v6e."""
    per_row = BB * (
        2 * DP * 2        # x block, double-buffered, bf16
        + GP * 4          # gx scratch, f32
        + HP * 4          # hseq scratch, f32
        + 2 * CP * 4)     # out block, double-buffered, f32
    max_rows = max(2, vmem_budget_bytes // per_row)
    t_tile = min(T, max_rows, 256)
    return int(((t_tile + 1) // 2) * 2)   # keep it even (bf16 sublane packing)


def lstm_linear_pallas(x, h0, c0, w_ih_t, w_hh_t, w_lin_t, b_lin,
                       n_classes, hidden_size, input_len):
    # x: (B, T, D) batch-first float32; weights already padded/transposed/bf16.
    B, T, D = x.shape
    DP = w_ih_t.shape[0]        # 128
    GP = w_ih_t.shape[1]        # 4 * HP = 512
    HP = w_hh_t.shape[0]        # 128
    CP = w_lin_t.shape[1]       # 128
    BB = 8                      # batch rows per block (sublane tile)
    BP = ((B + BB - 1) // BB) * BB
    num_bb = BP // BB

    T_tile = _choose_t_tile(T, BB, DP, GP, HP, CP)
    num_chunks = pl.cdiv(T, T_tile)
    TP = num_chunks * T_tile

    # Time-major, padded; bias column (index input_len) set to 1.0 so the gate
    # bias (folded into W_ih row input_len) is picked up by the input matmul.
    x_tm = jnp.transpose(x, (1, 0, 2))                                # (T,B,D)
    x_p = jnp.pad(x_tm, ((0, TP - T), (0, BP - B), (0, DP - D)))
    x_p = x_p.at[:, :, input_len].set(1.0)
    # (TP, BP, DP) -> (num_bb, TP*BB, DP): lane/sublane-aligned 2-D slabs per
    # batch block, no in-kernel reshapes.
    x_p = (x_p.reshape(TP, num_bb, BB, DP)
              .transpose(1, 0, 2, 3)
              .reshape(num_bb, TP * BB, DP)
              .astype(jnp.bfloat16))

    h0_p = jnp.pad(h0, ((0, BP - B), (0, HP - hidden_size)))
    c0_p = jnp.pad(c0, ((0, BP - B), (0, HP - hidden_size)))
    h0_p = h0_p.reshape(num_bb, BB, HP)
    c0_p = c0_p.reshape(num_bb, BB, HP)

    grid_spec = pltpu.PrefetchScalarGridSpec(
        num_scalar_prefetch=0,
        grid=(num_bb, num_chunks),          # batch blocks parallel, time serial
        in_specs=[
            pl.BlockSpec((None, T_tile * BB, DP), lambda b, t: (b, t, 0)),  # x
            pl.BlockSpec((None, BB, HP), lambda b, t: (b, 0, 0)),           # h0
            pl.BlockSpec((None, BB, HP), lambda b, t: (b, 0, 0)),           # c0
            pl.BlockSpec((DP, GP), lambda b, t: (0, 0)),                    # W_ih^T
            pl.BlockSpec((HP, GP), lambda b, t: (0, 0)),                    # W_hh^T
            pl.BlockSpec((HP, CP), lambda b, t: (0, 0)),                    # W_lin^T
            pl.BlockSpec((1, CP), lambda b, t: (0, 0)),                     # b_lin
        ],
        out_specs=pl.BlockSpec((None, T_tile * BB, CP), lambda b, t: (b, t, 0)),
        scratch_shapes=[
            pltpu.VMEM((BB, HP), jnp.float32),            # h carry
            pltpu.VMEM((BB, HP), jnp.float32),            # c carry
            pltpu.VMEM((T_tile * BB, GP), jnp.float32),   # x projection (+bias)
            pltpu.VMEM((T_tile * BB, HP), jnp.float32),   # h sequence
        ])

    out_p = pl.pallas_call(
        lstm_linear_kernel,
        out_shape=jax.ShapeDtypeStruct((num_bb, TP * BB, CP), jnp.float32),
        grid_spec=grid_spec,
        compiler_params=pltpu.CompilerParams(
            dimension_semantics=("parallel", "arbitrary"),
            vmem_limit_bytes=32 * 1024 * 1024),           # safe on v5e/v6e/v7x
    )(x_p, h0_p, c0_p, w_ih_t, w_hh_t, w_lin_t, b_lin)

    # Strip padding, restore batch-first layout.
    out = (out_p.reshape(num_bb, TP, BB, CP)
                .transpose(1, 0, 2, 3)
                .reshape(TP, BP, CP))[:T, :B, :n_classes]
    return jnp.transpose(out, (1, 0, 2))


# ---------------------------------------------------------------------------
# Plain-JAX glue matching the PyTorch helpers
# ---------------------------------------------------------------------------
def concatenate_characters(characters):
    # characters: (B, T, E)
    zeros = jnp.zeros_like(characters[:, 0:1, :])
    padded = jnp.concatenate((characters, zeros), axis=1)     # (B, T+1, E)
    temp1 = padded[:, :-1, :]
    temp2 = padded[:, 1:, :]
    return jnp.concatenate((temp1, temp2), axis=-1)           # (B, T, 2E)


def concatenate_tensors_elementwise(t1, t2):
    return jnp.concatenate((t1, t2), axis=-1)


def concatenate_tensors_feature3(t1, t2):
    return jnp.concatenate((t1, t2[:, :, None]), axis=2)


def _pad_gate_rows(w, H, HP):
    """Pad a torch gate-stacked array (4*H, ...) to (4*HP, ...) per gate block."""
    w4 = w.reshape((4, H) + w.shape[1:])
    pad_cfg = ((0, 0), (0, HP - H)) + ((0, 0),) * (w.ndim - 1)
    return jnp.pad(w4, pad_cfg).reshape((4 * HP,) + w.shape[1:])


# ---------------------------------------------------------------------------
# Char_model in JAX, with deterministic synthetic parameters
# ---------------------------------------------------------------------------
class CharModel:
    H_PAD = 128    # hidden padded to a full lane tile
    D_PAD = 128    # input feature (116) padded to 128
    C_PAD = 128    # n_classes (17) padded to 128

    def __init__(self, key, vocab_size=42, embedding_dim=50, hidden_size=50,
                 n_classes=17):
        input_len = 2 * embedding_dim + 15 + 1                # 116
        self.vocab_size = vocab_size
        self.embedding_dim = embedding_dim
        self.hidden_size = hidden_size
        self.n_classes = n_classes
        self.input_len = input_len

        ks = jax.random.split(key, 8)
        s = 0.1
        H, HP, DP, CP = hidden_size, self.H_PAD, self.D_PAD, self.C_PAD

        self.emb_char = s * jax.random.normal(
            ks[0], (vocab_size, embedding_dim), jnp.float32)
        self.emb_diac = s * jax.random.normal(ks[1], (14, 15), jnp.float32)

        # torch-layout LSTM / Linear params (kept for the pure-JAX reference)
        self.w_ih = s * jax.random.normal(ks[2], (4 * H, input_len), jnp.float32)
        self.w_hh = s * jax.random.normal(ks[3], (4 * H, H), jnp.float32)
        self.b_ih = s * jax.random.normal(ks[4], (4 * H,), jnp.float32)
        self.b_hh = s * jax.random.normal(ks[5], (4 * H,), jnp.float32)
        self.w_lin = s * jax.random.normal(ks[6], (n_classes, H), jnp.float32)
        self.b_lin = s * jax.random.normal(ks[7], (n_classes,), jnp.float32)

        # Kernel-facing padded / transposed params.  Padding rows/cols are zero
        # so padded hidden lanes provably stay zero; bias is folded into
        # W_ih^T row `input_len` (x carries a constant 1.0 in that column).
        w_ih_p = _pad_gate_rows(self.w_ih, H, HP)                     # (4HP,116)
        w_ih_p = jnp.pad(w_ih_p, ((0, 0), (0, DP - input_len)))       # (4HP,128)
        b_p = _pad_gate_rows(self.b_ih + self.b_hh, H, HP)            # (4HP,)
        w_ih_p = w_ih_p.at[:, input_len].set(b_p)                     # fold bias
        self.w_ih_t_p = jnp.transpose(w_ih_p).astype(jnp.bfloat16)    # (128,512)

        w_hh_p = _pad_gate_rows(self.w_hh, H, HP)                     # (4HP,50)
        w_hh_p = jnp.pad(w_hh_p, ((0, 0), (0, HP - H)))               # (4HP,128)
        self.w_hh_t_p = jnp.transpose(w_hh_p).astype(jnp.bfloat16)    # (128,512)

        w_lin_p = jnp.pad(self.w_lin,
                          ((0, CP - n_classes), (0, HP - H)))         # (128,128)
        self.w_lin_t_p = jnp.transpose(w_lin_p).astype(jnp.bfloat16)  # (HP,CP)
        self.b_lin_p = jnp.pad(self.b_lin, (0, CP - n_classes))[None, :]

    # ------------------------------------------------------------------ glue
    def _embed(self, sentences, diacritics_list, segments):
        # TODO(synk): embedding gathers stay in plain JAX (no useful Pallas form).
        sentences_embedded = jnp.take(self.emb_char, sentences, axis=0)
        diacritics_embedded = jnp.take(self.emb_diac, diacritics_list, axis=0)
        sentences_embedded = concatenate_characters(sentences_embedded)
        sentences_embedded = concatenate_tensors_elementwise(
            sentences_embedded, diacritics_embedded)
        sentences_embedded = concatenate_tensors_feature3(
            sentences_embedded, segments.astype(jnp.float32))   # (B, T, 116)
        return sentences_embedded

    def _initial_state(self, B, h_0, c_0):
        if h_0 is None or c_0 is None:
            h_0 = jnp.zeros((B, self.hidden_size), jnp.float32)
            c_0 = jnp.zeros((B, self.hidden_size), jnp.float32)
        else:
            # torch passes (num_layers, B, H); accept that or (B, H)
            h_0 = jnp.reshape(h_0, (B, self.hidden_size)).astype(jnp.float32)
            c_0 = jnp.reshape(c_0, (B, self.hidden_size)).astype(jnp.float32)
        return h_0, c_0

    # ------------------------------------------------------------ Pallas path
    def __call__(self, sentences, diacritics_list, segments,
                 h_0=None, c_0=None):
        x = self._embed(sentences, diacritics_list, segments)   # (B, T, 116)
        B = x.shape[0]
        h_0, c_0 = self._initial_state(B, h_0, c_0)
        return lstm_linear_pallas(
            x, h_0, c_0, self.w_ih_t_p, self.w_hh_t_p,
            self.w_lin_t_p, self.b_lin_p,
            n_classes=self.n_classes, hidden_size=self.hidden_size,
            input_len=self.input_len)

    # -------------------------------------------------------- pure-JAX check
    def reference(self, sentences, diacritics_list, segments,
                  h_0=None, c_0=None):
        x = self._embed(sentences, diacritics_list, segments)   # (B, T, 116)
        B = x.shape[0]
        H = self.hidden_size
        h, c = self._initial_state(B, h_0, c_0)
        w_ih_T, w_hh_T = self.w_ih.T, self.w_hh.T
        bias = self.b_ih + self.b_hh

        def step(carry, x_t):
            h, c = carry
            gates = (jnp.dot(x_t, w_ih_T, precision=lax.Precision.HIGHEST)
                     + jnp.dot(h, w_hh_T, precision=lax.Precision.HIGHEST)
                     + bias)
            i_g = jax.nn.sigmoid(gates[:, 0:H])
            f_g = jax.nn.sigmoid(gates[:, H:2 * H])
            g_g = jnp.tanh(gates[:, 2 * H:3 * H])
            o_g = jax.nn.sigmoid(gates[:, 3 * H:4 * H])
            c_new = f_g * c + i_g * g_g
            h_new = o_g * jnp.tanh(c_new)
            return (h_new, c_new), h_new

        (_, _), hs = lax.scan(step, (h, c), jnp.transpose(x, (1, 0, 2)))
        hs = jnp.transpose(hs, (1, 0, 2))                        # (B, T, H)
        return (jnp.dot(hs, self.w_lin.T, precision=lax.Precision.HIGHEST)
                + self.b_lin)


if __name__ == "__main__":
    key = jax.random.PRNGKey(0)
    k_param, k_sent, k_diac, k_seg = jax.random.split(key, 4)

    B, T = 2, 8
    model = CharModel(k_param)

    sentences = jax.random.randint(k_sent, (B, T), 0, 42, dtype=jnp.int32)
    diacritics = jax.random.randint(k_diac, (B, T), 0, 14, dtype=jnp.int32)
    segments = jax.random.randint(k_seg, (B, T), 0, 2).astype(jnp.float32)

    out = model(sentences, diacritics, segments)
    out = jax.block_until_ready(out)

    assert out.shape == (B, T, 17), out.shape
    assert bool(jnp.all(jnp.isfinite(out)))

    ref = jax.block_until_ready(model.reference(sentences, diacritics, segments))
    max_err = float(jnp.max(jnp.abs(out - ref)))
    assert max_err < 2e-2, f"mismatch vs reference: max_err={max_err}"

    print("KERNEL_OK")
</pallas_src>

<mosaic_0001>
module attributes {stable_mosaic.version = 11 : i64} {
  func.func @lstm_linear_kernel(%arg0: i32, %arg1: i32, %arg2: memref<1x64x128xbf16, #tpu.memory_space<vmem>>, %arg3: memref<1x8x128xf32, #tpu.memory_space<vmem>>, %arg4: memref<1x8x128xf32, #tpu.memory_space<vmem>>, %arg5: memref<128x512xbf16, #tpu.memory_space<vmem>>, %arg6: memref<128x512xbf16, #tpu.memory_space<vmem>>, %arg7: memref<128x128xbf16, #tpu.memory_space<vmem>>, %arg8: memref<1x128xf32, #tpu.memory_space<vmem>>, %arg9: memref<1x64x128xf32, #tpu.memory_space<vmem>>, %arg10: memref<8x128xf32, #tpu.memory_space<vmem>>, %arg11: memref<8x128xf32, #tpu.memory_space<vmem>>, %arg12: memref<64x512xf32, #tpu.memory_space<vmem>>, %arg13: memref<64x128xf32, #tpu.memory_space<vmem>>) attributes {dimension_semantics = [#tpu.dimension_semantics<parallel>, #tpu.dimension_semantics<arbitrary>], iteration_bounds = array<i64: 1, 1>, scalar_prefetch = 0 : i64, scratch_operands = 4 : i64, tpu.core_type = #tpu.core_type<tc>, window_params = [{transform_indices = @transform_0, window_bounds = array<i64: 1, 64, 128>}, {transform_indices = @transform_1, window_bounds = array<i64: 1, 8, 128>}, {transform_indices = @transform_2, window_bounds = array<i64: 1, 8, 128>}, {pipeline_mode = #tpu.pipeline_mode<synchronous>, transform_indices = @transform_3, window_bounds = array<i64: 128, 512>}, {pipeline_mode = #tpu.pipeline_mode<synchronous>, transform_indices = @transform_4, window_bounds = array<i64: 128, 512>}, {pipeline_mode = #tpu.pipeline_mode<synchronous>, transform_indices = @transform_5, window_bounds = array<i64: 128, 128>}, {pipeline_mode = #tpu.pipeline_mode<synchronous>, transform_indices = @transform_6, window_bounds = array<i64: 1, 128>}, {transform_indices = @transform_7, window_bounds = array<i64: 1, 64, 128>}]} {
    %c0_i32 = arith.constant 0 : i32
    %0 = arith.cmpi eq, %arg1, %c0_i32 : i32
    %1 = arith.extui %0 : i1 to i32
    %c0_i32_0 = arith.constant 0 : i32
    %2 = arith.cmpi ne, %1, %c0_i32_0 : i32
    scf.if %2 {
      %c0_98 = arith.constant 0 : index
      %c0_99 = arith.constant 0 : index
      %c0_100 = arith.constant 0 : index
      %302 = vector.load %arg3[%c0_98, %c0_99, %c0_100] : memref<1x8x128xf32, #tpu.memory_space<vmem>>, vector<1x8x128xf32>
      %303 = vector.shape_cast %302 : vector<1x8x128xf32> to vector<8x128xf32>
      %c0_101 = arith.constant 0 : index
      %c0_102 = arith.constant 0 : index
      %304 = vector.load %arg10[%c0_101, %c0_102] : memref<8x128xf32, #tpu.memory_space<vmem>>, vector<8x128xf32>
      tpu.vector_store %arg10[%c0_101, %c0_102], %303 {strides = array<i32>} : memref<8x128xf32, #tpu.memory_space<vmem>>, vector<8x128xf32>,
      %c0_103 = arith.constant 0 : index
      %c0_104 = arith.constant 0 : index
      %c0_105 = arith.constant 0 : index
      %305 = vector.load %arg4[%c0_103, %c0_104, %c0_105] : memref<1x8x128xf32, #tpu.memory_space<vmem>>, vector<1x8x128xf32>
      %306 = vector.shape_cast %305 : vector<1x8x128xf32> to vector<8x128xf32>
      %c0_106 = arith.constant 0 : index
      %c0_107 = arith.constant 0 : index
      %307 = vector.load %arg11[%c0_106, %c0_107] : memref<8x128xf32, #tpu.memory_space<vmem>>, vector<8x128xf32>
      tpu.vector_store %arg11[%c0_106, %c0_107], %306 {strides = array<i32>} : memref<8x128xf32, #tpu.memory_space<vmem>>, vector<8x128xf32>,
    } else {
    }
    %c0 = arith.constant 0 : index
    %c0_1 = arith.constant 0 : index
    %c0_2 = arith.constant 0 : index
    %3 = vector.load %arg2[%c0, %c0_1, %c0_2] : memref<1x64x128xbf16, #tpu.memory_space<vmem>>, vector<1x64x128xbf16>
    %4 = vector.shape_cast %3 : vector<1x64x128xbf16> to vector<64x128xbf16>
    %c0_3 = arith.constant 0 : index
    %c0_4 = arith.constant 0 : index
    %5 = vector.load %arg5[%c0_3, %c0_4] : memref<128x512xbf16, #tpu.memory_space<vmem>>, vector<128x512xbf16>
    %cst = arith.constant dense<0.000000e+00> : vector<64x512xf32>
    %6 = tpu.matmul %4, %5, %cst {dimension_numbers = #tpu.dot_dimension_numbers<[1], [0], [0], [1], [0, 0, 1, 1], [], []>} : vector<64x128xbf16>, vector<128x512xbf16>, vector<64x512xf32> -> vector<64x512xf32>
    %c0_5 = arith.constant 0 : index
    %c0_6 = arith.constant 0 : index
    %7 = vector.load %arg12[%c0_5, %c0_6] : memref<64x512xf32, #tpu.memory_space<vmem>>, vector<64x512xf32>
    tpu.vector_store %arg12[%c0_5, %c0_6], %6 {strides = array<i32>} : memref<64x512xf32, #tpu.memory_space<vmem>>, vector<64x512xf32>,
    %c0_7 = arith.constant 0 : index
    %c0_8 = arith.constant 0 : index
    %8 = vector.load %arg10[%c0_7, %c0_8] : memref<8x128xf32, #tpu.memory_space<vmem>>, vector<8x128xf32>
    %c0_9 = arith.constant 0 : index
    %c0_10 = arith.constant 0 : index
    %9 = vector.load %arg11[%c0_9, %c0_10] : memref<8x128xf32, #tpu.memory_space<vmem>>, vector<8x128xf32>
    %c0_i32_11 = arith.constant 0 : i32
    %c8_i32 = arith.constant 8 : i32
    %10 = arith.muli %c0_i32_11, %c8_i32 : i32
    %11 = tpu.assume_multiple %10, 8 : i32
    %12 = arith.index_cast %11 : i32 to index
    %c0_12 = arith.constant 0 : index
    %13 = vector.load %arg12[%12, %c0_12] : memref<64x512xf32, #tpu.memory_space<vmem>>, vector<8x512xf32>
    %14 = arith.truncf %8 : vector<8x128xf32> to vector<8x128xbf16>
    %c0_13 = arith.constant 0 : index
    %c0_14 = arith.constant 0 : index
    %15 = vector.load %arg6[%c0_13, %c0_14] : memref<128x512xbf16, #tpu.memory_space<vmem>>, vector<128x512xbf16>
    %cst_15 = arith.constant dense<0.000000e+00> : vector<8x512xf32>
    %16 = tpu.matmul %14, %15, %cst_15 {dimension_numbers = #tpu.dot_dimension_numbers<[1], [0], [0], [1], [0, 0, 1, 1], [], []>} : vector<8x128xbf16>, vector<128x512xbf16>, vector<8x512xf32> -> vector<8x512xf32>
    %17 = arith.addf %13, %16 : vector<8x512xf32>
    %18 = vector.extract_strided_slice %17 {offsets = [0, 0], sizes = [8, 128], strides = [1, 1]} : vector<8x512xf32> to vector<8x128xf32>
    %19 = arith.negf %18 : vector<8x128xf32>
    %20 = math.exp %19 : vector<8x128xf32>
    %cst_16 = arith.constant 1.000000e+00 : f32
    %21 = vector.broadcast %cst_16 : f32 to vector<8x128xf32>
    %22 = arith.addf %21, %20 : vector<8x128xf32>
    %23 = arith.divf %21, %22 : vector<8x128xf32>
    %24 = vector.extract_strided_slice %17 {offsets = [0, 128], sizes = [8, 128], strides = [1, 1]} : vector<8x512xf32> to vector<8x128xf32>
    %25 = arith.negf %24 : vector<8x128xf32>
    %26 = math.exp %25 : vector<8x128xf32>
    %cst_17 = arith.constant 1.000000e+00 : f32
    %27 = vector.broadcast %cst_17 : f32 to vector<8x128xf32>
    %28 = arith.addf %27, %26 : vector<8x128xf32>
    %29 = arith.divf %27, %28 : vector<8x128xf32>
    %30 = vector.extract_strided_slice %17 {offsets = [0, 256], sizes = [8, 128], strides = [1, 1]} : vector<8x512xf32> to vector<8x128xf32>
    %31 = math.tanh %30 : vector<8x128xf32>
    %32 = vector.extract_strided_slice %17 {offsets = [0, 384], sizes = [8, 128], strides = [1, 1]} : vector<8x512xf32> to vector<8x128xf32>
    %33 = arith.negf %32 : vector<8x128xf32>
    %34 = math.exp %33 : vector<8x128xf32>
    %cst_18 = arith.constant 1.000000e+00 : f32
    %35 = vector.broadcast %cst_18 : f32 to vector<8x128xf32>
    %36 = arith.addf %35, %34 : vector<8x128xf32>
    %37 = arith.divf %35, %36 : vector<8x128xf32>
    %38 = arith.mulf %29, %9 : vector<8x128xf32>
    %39 = arith.mulf %23, %31 : vector<8x128xf32>
    %40 = arith.addf %38, %39 : vector<8x128xf32>
    %41 = math.tanh %40 : vector<8x128xf32>
    %42 = arith.mulf %37, %41 : vector<8x128xf32>
    %43 = arith.index_cast %11 : i32 to index
    %c0_19 = arith.constant 0 : index
    %44 = vector.load %arg13[%43, %c0_19] : memref<64x128xf32, #tpu.memory_space<vmem>>, vector<8x128xf32>
    tpu.vector_store %arg13[%43, %c0_19], %42 {strides = array<i32>} : memref<64x128xf32, #tpu.memory_space<vmem>>, vector<8x128xf32>,
    %c1_i32 = arith.constant 1 : i32
    %c8_i32_20 = arith.constant 8 : i32
    %45 = arith.muli %c1_i32, %c8_i32_20 : i32
    %46 = tpu.assume_multiple %45, 8 : i32
    %47 = arith.index_cast %46 : i32 to index
    %c0_21 = arith.constant 0 : index
    %48 = vector.load %arg12[%47, %c0_21] : memref<64x512xf32, #tpu.memory_space<vmem>>, vector<8x512xf32>
    %49 = arith.truncf %42 : vector<8x128xf32> to vector<8x128xbf16>
    %c0_22 = arith.constant 0 : index
    %c0_23 = arith.constant 0 : index
    %50 = vector.load %arg6[%c0_22, %c0_23] : memref<128x512xbf16, #tpu.memory_space<vmem>>, vector<128x512xbf16>
    %cst_24 = arith.constant dense<0.000000e+00> : vector<8x512xf32>
    %51 = tpu.matmul %49, %50, %cst_24 {dimension_numbers = #tpu.dot_dimension_numbers<[1], [0], [0], [1], [0, 0, 1, 1], [], []>} : vector<8x128xbf16>, vector<128x512xbf16>, vector<8x512xf32> -> vector<8x512xf32>
    %52 = arith.addf %48, %51 : vector<8x512xf32>
    %53 = vector.extract_strided_slice %52 {offsets = [0, 0], sizes = [8, 128], strides = [1, 1]} : vector<8x512xf32> to vector<8x128xf32>
    %54 = arith.negf %53 : vector<8x128xf32>
    %55 = math.exp %54 : vector<8x128xf32>
    %cst_25 = arith.constant 1.000000e+00 : f32
    %56 = vector.broadcast %cst_25 : f32 to vector<8x128xf32>
    %57 = arith.addf %56, %55 : vector<8x128xf32>
    %58 = arith.divf %56, %57 : vector<8x128xf32>
    %59 = vector.extract_strided_slice %52 {offsets = [0, 128], sizes = [8, 128], strides = [1, 1]} : vector<8x512xf32> to vector<8x128xf32>
    %60 = arith.negf %59 : vector<8x128xf32>
    %61 = math.exp %60 : vector<8x128xf32>
    %cst_26 = arith.constant 1.000000e+00 : f32
    %62 = vector.broadcast %cst_26 : f32 to vector<8x128xf32>
    %63 = arith.addf %62, %61 : vector<8x128xf32>
    %64 = arith.divf %62, %63 : vector<8x128xf32>
    %65 = vector.extract_strided_slice %52 {offsets = [0, 256], sizes = [8, 128], strides = [1, 1]} : vector<8x512xf32> to vector<8x128xf32>
    %66 = math.tanh %65 : vector<8x128xf32>
    %67 = vector.extract_strided_slice %52 {offsets = [0, 384], sizes = [8, 128], strides = [1, 1]} : vector<8x512xf32> to vector<8x128xf32>
    %68 = arith.negf %67 : vector<8x128xf32>
    %69 = math.exp %68 : vector<8x128xf32>
    %cst_27 = arith.constant 1.000000e+00 : f32
    %70 = vector.broadcast %cst_27 : f32 to vector<8x128xf32>
    %71 = arith.addf %70, %69 : vector<8x128xf32>
    %72 = arith.divf %70, %71 : vector<8x128xf32>
    %73 = arith.mulf %64, %40 : vector<8x128xf32>
    %74 = arith.mulf %58, %66 : vector<8x128xf32>
    %75 = arith.addf %73, %74 : vector<8x128xf32>
    %76 = math.tanh %75 : vector<8x128xf32>
    %77 = arith.mulf %72, %76 : vector<8x128xf32>
    %78 = arith.index_cast %46 : i32 to index
    %c0_28 = arith.constant 0 : index
    %79 = vector.load %arg13[%78, %c0_28] : memref<64x128xf32, #tpu.memory_space<vmem>>, vector<8x128xf32>
    tpu.vector_store %arg13[%78, %c0_28], %77 {strides = array<i32>} : memref<64x128xf32, #tpu.memory_space<vmem>>, vector<8x128xf32>,
    %c2_i32 = arith.constant 2 : i32
    %c8_i32_29 = arith.constant 8 : i32
    %80 = arith.muli %c2_i32, %c8_i32_29 : i32
    %81 = tpu.assume_multiple %80, 8 : i32
    %82 = arith.index_cast %81 : i32 to index
    %c0_30 = arith.constant 0 : index
    %83 = vector.load %arg12[%82, %c0_30] : memref<64x512xf32, #tpu.memory_space<vmem>>, vector<8x512xf32>
    %84 = arith.truncf %77 : vector<8x128xf32> to vector<8x128xbf16>
    %c0_31 = arith.constant 0 : index
    %c0_32 = arith.constant 0 : index
    %85 = vector.load %arg6[%c0_31, %c0_32] : memref<128x512xbf16, #tpu.memory_space<vmem>>, vector<128x512xbf16>
    %cst_33 = arith.constant dense<0.000000e+00> : vector<8x512xf32>
    %86 = tpu.matmul %84, %85, %cst_33 {dimension_numbers = #tpu.dot_dimension_numbers<[1], [0], [0], [1], [0, 0, 1, 1], [], []>} : vector<8x128xbf16>, vector<128x512xbf16>, vector<8x512xf32> -> vector<8x512xf32>
    %87 = arith.addf %83, %86 : vector<8x512xf32>
    %88 = vector.extract_strided_slice %87 {offsets = [0, 0], sizes = [8, 128], strides = [1, 1]} : vector<8x512xf32> to vector<8x128xf32>
    %89 = arith.negf %88 : vector<8x128xf32>
    %90 = math.exp %89 : vector<8x128xf32>
    %cst_34 = arith.constant 1.000000e+00 : f32
    %91 = vector.broadcast %cst_34 : f32 to vector<8x128xf32>
    %92 = arith.addf %91, %90 : vector<8x128xf32>
    %93 = arith.divf %91, %92 : vector<8x128xf32>
    %94 = vector.extract_strided_slice %87 {offsets = [0, 128], sizes = [8, 128], strides = [1, 1]} : vector<8x512xf32> to vector<8x128xf32>
    %95 = arith.negf %94 : vector<8x128xf32>
    %96 = math.exp %95 : vector<8x128xf32>
    %cst_35 = arith.constant 1.000000e+00 : f32
    %97 = vector.broadcast %cst_35 : f32 to vector<8x128xf32>
    %98 = arith.addf %97, %96 : vector<8x128xf32>
    %99 = arith.divf %97, %98 : vector<8x128xf32>
    %100 = vector.extract_strided_slice %87 {offsets = [0, 256], sizes = [8, 128], strides = [1, 1]} : vector<8x512xf32> to vector<8x128xf32>
    %101 = math.tanh %100 : vector<8x128xf32>
    %102 = vector.extract_strided_slice %87 {offsets = [0, 384], sizes = [8, 128], strides = [1, 1]} : vector<8x512xf32> to vector<8x128xf32>
    %103 = arith.negf %102 : vector<8x128xf32>
    %104 = math.exp %103 : vector<8x128xf32>
    %cst_36 = arith.constant 1.000000e+00 : f32
    %105 = vector.broadcast %cst_36 : f32 to vector<8x128xf32>
    %106 = arith.addf %105, %104 : vector<8x128xf32>
    %107 = arith.divf %105, %106 : vector<8x128xf32>
    %108 = arith.mulf %99, %75 : vector<8x128xf32>
    %109 = arith.mulf %93, %101 : vector<8x128xf32>
    %110 = arith.addf %108, %109 : vector<8x128xf32>
    %111 = math.tanh %110 : vector<8x128xf32>
    %112 = arith.mulf %107, %111 : vector<8x128xf32>
    %113 = arith.index_cast %81 : i32 to index
    %c0_37 = arith.constant 0 : index
    %114 = vector.load %arg13[%113, %c0_37] : memref<64x128xf32, #tpu.memory_space<vmem>>, vector<8x128xf32>
    tpu.vector_store %arg13[%113, %c0_37], %112 {strides = array<i32>} : memref<64x128xf32, #tpu.memory_space<vmem>>, vector<8x128xf32>,
    %c3_i32 = arith.constant 3 : i32
    %c8_i32_38 = arith.constant 8 : i32
    %115 = arith.muli %c3_i32, %c8_i32_38 : i32
    %116 = tpu.assume_multiple %115, 8 : i32
    %117 = arith.index_cast %116 : i32 to index
    %c0_39 = arith.constant 0 : index
    %118 = vector.load %arg12[%117, %c0_39] : memref<64x512xf32, #tpu.memory_space<vmem>>, vector<8x512xf32>
    %119 = arith.truncf %112 : vector<8x128xf32> to vector<8x128xbf16>
    %c0_40 = arith.constant 0 : index
    %c0_41 = arith.constant 0 : index
    %120 = vector.load %arg6[%c0_40, %c0_41] : memref<128x512xbf16, #tpu.memory_space<vmem>>, vector<128x512xbf16>
    %cst_42 = arith.constant dense<0.000000e+00> : vector<8x512xf32>
    %121 = tpu.matmul %119, %120, %cst_42 {dimension_numbers = #tpu.dot_dimension_numbers<[1], [0], [0], [1], [0, 0, 1, 1], [], []>} : vector<8x128xbf16>, vector<128x512xbf16>, vector<8x512xf32> -> vector<8x512xf32>
    %122 = arith.addf %118, %121 : vector<8x512xf32>
    %123 = vector.extract_strided_slice %122 {offsets = [0, 0], sizes = [8, 128], strides = [1, 1]} : vector<8x512xf32> to vector<8x128xf32>
    %124 = arith.negf %123 : vector<8x128xf32>
    %125 = math.exp %124 : vector<8x128xf32>
    %cst_43 = arith.constant 1.000000e+00 : f32
    %126 = vector.broadcast %cst_43 : f32 to vector<8x128xf32>
    %127 = arith.addf %126, %125 : vector<8x128xf32>
    %128 = arith.divf %126, %127 : vector<8x128xf32>
    %129 = vector.extract_strided_slice %122 {offsets = [0, 128], sizes = [8, 128], strides = [1, 1]} : vector<8x512xf32> to vector<8x128xf32>
    %130 = arith.negf %129 : vector<8x128xf32>
    %131 = math.exp %130 : vector<8x128xf32>
    %cst_44 = arith.constant 1.000000e+00 : f32
    %132 = vector.broadcast %cst_44 : f32 to vector<8x128xf32>
    %133 = arith.addf %132, %131 : vector<8x128xf32>
    %134 = arith.divf %132, %133 : vector<8x128xf32>
    %135 = vector.extract_strided_slice %122 {offsets = [0, 256], sizes = [8, 128], strides = [1, 1]} : vector<8x512xf32> to vector<8x128xf32>
    %136 = math.tanh %135 : vector<8x128xf32>
    %137 = vector.extract_strided_slice %122 {offsets = [0, 384], sizes = [8, 128], strides = [1, 1]} : vector<8x512xf32> to vector<8x128xf32>
    %138 = arith.negf %137 : vector<8x128xf32>
    %139 = math.exp %138 : vector<8x128xf32>
    %cst_45 = arith.constant 1.000000e+00 : f32
    %140 = vector.broadcast %cst_45 : f32 to vector<8x128xf32>
    %141 = arith.addf %140, %139 : vector<8x128xf32>
    %142 = arith.divf %140, %141 : vector<8x128xf32>
    %143 = arith.mulf %134, %110 : vector<8x128xf32>
    %144 = arith.mulf %128, %136 : vector<8x128xf32>
    %145 = arith.addf %143, %144 : vector<8x128xf32>
    %146 = math.tanh %145 : vector<8x128xf32>
    %147 = arith.mulf %142, %146 : vector<8x128xf32>
    %148 = arith.index_cast %116 : i32 to index
    %c0_46 = arith.constant 0 : index
    %149 = vector.load %arg13[%148, %c0_46] : memref<64x128xf32, #tpu.memory_space<vmem>>, vector<8x128xf32>
    tpu.vector_store %arg13[%148, %c0_46], %147 {strides = array<i32>} : memref<64x128xf32, #tpu.memory_space<vmem>>, vector<8x128xf32>,
    %c4_i32 = arith.constant 4 : i32
    %c8_i32_47 = arith.constant 8 : i32
    %150 = arith.muli %c4_i32, %c8_i32_47 : i32
    %151 = tpu.assume_multiple %150, 8 : i32
    %152 = arith.index_cast %151 : i32 to index
    %c0_48 = arith.constant 0 : index
    %153 = vector.load %arg12[%152, %c0_48] : memref<64x512xf32, #tpu.memory_space<vmem>>, vector<8x512xf32>
    %154 = arith.truncf %147 : vector<8x128xf32> to vector<8x128xbf16>
    %c0_49 = arith.constant 0 : index
    %c0_50 = arith.constant 0 : index
    %155 = vector.load %arg6[%c0_49, %c0_50] : memref<128x512xbf16, #tpu.memory_space<vmem>>, vector<128x512xbf16>
    %cst_51 = arith.constant dense<0.000000e+00> : vector<8x512xf32>
    %156 = tpu.matmul %154, %155, %cst_51 {dimension_numbers = #tpu.dot_dimension_numbers<[1], [0], [0], [1], [0, 0, 1, 1], [], []>} : vector<8x128xbf16>, vector<128x512xbf16>, vector<8x512xf32> -> vector<8x512xf32>
    %157 = arith.addf %153, %156 : vector<8x512xf32>
    %158 = vector.extract_strided_slice %157 {offsets = [0, 0], sizes = [8, 128], strides = [1, 1]} : vector<8x512xf32> to vector<8x128xf32>
    %159 = arith.negf %158 : vector<8x128xf32>
    %160 = math.exp %159 : vector<8x128xf32>
    %cst_52 = arith.constant 1.000000e+00 : f32
    %161 = vector.broadcast %cst_52 : f32 to vector<8x128xf32>
    %162 = arith.addf %161, %160 : vector<8x128xf32>
    %163 = arith.divf %161, %162 : vector<8x128xf32>
    %164 = vector.extract_strided_slice %157 {offsets = [0, 128], sizes = [8, 128], strides = [1, 1]} : vector<8x512xf32> to vector<8x128xf32>
    %165 = arith.negf %164 : vector<8x128xf32>
    %166 = math.exp %165 : vector<8x128xf32>
    %cst_53 = arith.constant 1.000000e+00 : f32
    %167 = vector.broadcast %cst_53 : f32 to vector<8x128xf32>
    %168 = arith.addf %167, %166 : vector<8x128xf32>
    %169 = arith.divf %167, %168 : vector<8x128xf32>
    %170 = vector.extract_strided_slice %157 {offsets = [0, 256], sizes = [8, 128], strides = [1, 1]} : vector<8x512xf32> to vector<8x128xf32>
    %171 = math.tanh %170 : vector<8x128xf32>
    %172 = vector.extract_strided_slice %157 {offsets = [0, 384], sizes = [8, 128], strides = [1, 1]} : vector<8x512xf32> to vector<8x128xf32>
    %173 = arith.negf %172 : vector<8x128xf32>
    %174 = math.exp %173 : vector<8x128xf32>
    %cst_54 = arith.constant 1.000000e+00 : f32
    %175 = vector.broadcast %cst_54 : f32 to vector<8x128xf32>
    %176 = arith.addf %175, %174 : vector<8x128xf32>
    %177 = arith.divf %175, %176 : vector<8x128xf32>
    %178 = arith.mulf %169, %145 : vector<8x128xf32>
    %179 = arith.mulf %163, %171 : vector<8x128xf32>
    %180 = arith.addf %178, %179 : vector<8x128xf32>
    %181 = math.tanh %180 : vector<8x128xf32>
    %182 = arith.mulf %177, %181 : vector<8x128xf32>
    %183 = arith.index_cast %151 : i32 to index
    %c0_55 = arith.constant 0 : index
    %184 = vector.load %arg13[%183, %c0_55] : memref<64x128xf32, #tpu.memory_space<vmem>>, vector<8x128xf32>
    tpu.vector_store %arg13[%183, %c0_55], %182 {strides = array<i32>} : memref<64x128xf32, #tpu.memory_space<vmem>>, vector<8x128xf32>,
    %c5_i32 = arith.constant 5 : i32
    %c8_i32_56 = arith.constant 8 : i32
    %185 = arith.muli %c5_i32, %c8_i32_56 : i32
    %186 = tpu.assume_multiple %185, 8 : i32
    %187 = arith.index_cast %186 : i32 to index
    %c0_57 = arith.constant 0 : index
    %188 = vector.load %arg12[%187, %c0_57] : memref<64x512xf32, #tpu.memory_space<vmem>>, vector<8x512xf32>
    %189 = arith.truncf %182 : vector<8x128xf32> to vector<8x128xbf16>
    %c0_58 = arith.constant 0 : index
    %c0_59 = arith.constant 0 : index
    %190 = vector.load %arg6[%c0_58, %c0_59] : memref<128x512xbf16, #tpu.memory_space<vmem>>, vector<128x512xbf16>
    %cst_60 = arith.constant dense<0.000000e+00> : vector<8x512xf32>
    %191 = tpu.matmul %189, %190, %cst_60 {dimension_numbers = #tpu.dot_dimension_numbers<[1], [0], [0], [1], [0, 0, 1, 1], [], []>} : vector<8x128xbf16>, vector<128x512xbf16>, vector<8x512xf32> -> vector<8x512xf32>
    %192 = arith.addf %188, %191 : vector<8x512xf32>
    %193 = vector.extract_strided_slice %192 {offsets = [0, 0], sizes = [8, 128], strides = [1, 1]} : vector<8x512xf32> to vector<8x128xf32>
    %194 = arith.negf %193 : vector<8x128xf32>
    %195 = math.exp %194 : vector<8x128xf32>
    %cst_61 = arith.constant 1.000000e+00 : f32
    %196 = vector.broadcast %cst_61 : f32 to vector<8x128xf32>
    %197 = arith.addf %196, %195 : vector<8x128xf32>
    %198 = arith.divf %196, %197 : vector<8x128xf32>
    %199 = vector.extract_strided_slice %192 {offsets = [0, 128], sizes = [8, 128], strides = [1, 1]} : vector<8x512xf32> to vector<8x128xf32>
    %200 = arith.negf %199 : vector<8x128xf32>
    %201 = math.exp %200 : vector<8x128xf32>
    %cst_62 = arith.constant 1.000000e+00 : f32
    %202 = vector.broadcast %cst_62 : f32 to vector<8x128xf32>
    %203 = arith.addf %202, %201 : vector<8x128xf32>
    %204 = arith.divf %202, %203 : vector<8x128xf32>
    %205 = vector.extract_strided_slice %192 {offsets = [0, 256], sizes = [8, 128], strides = [1, 1]} : vector<8x512xf32> to vector<8x128xf32>
    %206 = math.tanh %205 : vector<8x128xf32>
    %207 = vector.extract_strided_slice %192 {offsets = [0, 384], sizes = [8, 128], strides = [1, 1]} : vector<8x512xf32> to vector<8x128xf32>
    %208 = arith.negf %207 : vector<8x128xf32>
    %209 = math.exp %208 : vector<8x128xf32>
    %cst_63 = arith.constant 1.000000e+00 : f32
    %210 = vector.broadcast %cst_63 : f32 to vector<8x128xf32>
    %211 = arith.addf %210, %209 : vector<8x128xf32>
    %212 = arith.divf %210, %211 : vector<8x128xf32>
    %213 = arith.mulf %204, %180 : vector<8x128xf32>
    %214 = arith.mulf %198, %206 : vector<8x128xf32>
    %215 = arith.addf %213, %214 : vector<8x128xf32>
    %216 = math.tanh %215 : vector<8x128xf32>
    %217 = arith.mulf %212, %216 : vector<8x128xf32>
    %218 = arith.index_cast %186 : i32 to index
    %c0_64 = arith.constant 0 : index
    %219 = vector.load %arg13[%218, %c0_64] : memref<64x128xf32, #tpu.memory_space<vmem>>, vector<8x128xf32>
    tpu.vector_store %arg13[%218, %c0_64], %217 {strides = array<i32>} : memref<64x128xf32, #tpu.memory_space<vmem>>, vector<8x128xf32>,
    %c6_i32 = arith.constant 6 : i32
    %c8_i32_65 = arith.constant 8 : i32
    %220 = arith.muli %c6_i32, %c8_i32_65 : i32
    %221 = tpu.assume_multiple %220, 8 : i32
    %222 = arith.index_cast %221 : i32 to index
    %c0_66 = arith.constant 0 : index
    %223 = vector.load %arg12[%222, %c0_66] : memref<64x512xf32, #tpu.memory_space<vmem>>, vector<8x512xf32>
    %224 = arith.truncf %217 : vector<8x128xf32> to vector<8x128xbf16>
    %c0_67 = arith.constant 0 : index
    %c0_68 = arith.constant 0 : index
    %225 = vector.load %arg6[%c0_67, %c0_68] : memref<128x512xbf16, #tpu.memory_space<vmem>>, vector<128x512xbf16>
    %cst_69 = arith.constant dense<0.000000e+00> : vector<8x512xf32>
    %226 = tpu.matmul %224, %225, %cst_69 {dimension_numbers = #tpu.dot_dimension_numbers<[1], [0], [0], [1], [0, 0, 1, 1], [], []>} : vector<8x128xbf16>, vector<128x512xbf16>, vector<8x512xf32> -> vector<8x512xf32>
    %227 = arith.addf %223, %226 : vector<8x512xf32>
    %228 = vector.extract_strided_slice %227 {offsets = [0, 0], sizes = [8, 128], strides = [1, 1]} : vector<8x512xf32> to vector<8x128xf32>
    %229 = arith.negf %228 : vector<8x128xf32>
    %230 = math.exp %229 : vector<8x128xf32>
    %cst_70 = arith.constant 1.000000e+00 : f32
    %231 = vector.broadcast %cst_70 : f32 to vector<8x128xf32>
    %232 = arith.addf %231, %230 : vector<8x128xf32>
    %233 = arith.divf %231, %232 : vector<8x128xf32>
    %234 = vector.extract_strided_slice %227 {offsets = [0, 128], sizes = [8, 128], strides = [1, 1]} : vector<8x512xf32> to vector<8x128xf32>
    %235 = arith.negf %234 : vector<8x128xf32>
    %236 = math.exp %235 : vector<8x128xf32>
    %cst_71 = arith.constant 1.000000e+00 : f32
    %237 = vector.broadcast %cst_71 : f32 to vector<8x128xf32>
    %238 = arith.addf %237, %236 : vector<8x128xf32>
    %239 = arith.divf %237, %238 : vector<8x128xf32>
    %240 = vector.extract_strided_slice %227 {offsets = [0, 256], sizes = [8, 128], strides = [1, 1]} : vector<8x512xf32> to vector<8x128xf32>
    %241 = math.tanh %240 : vector<8x128xf32>
    %242 = vector.extract_strided_slice %227 {offsets = [0, 384], sizes = [8, 128], strides = [1, 1]} : vector<8x512xf32> to vector<8x128xf32>
    %243 = arith.negf %242 : vector<8x128xf32>
    %244 = math.exp %243 : vector<8x128xf32>
    %cst_72 = arith.constant 1.000000e+00 : f32
    %245 = vector.broadcast %cst_72 : f32 to vector<8x128xf32>
    %246 = arith.addf %245, %244 : vector<8x128xf32>
    %247 = arith.divf %245, %246 : vector<8x128xf32>
    %248 = arith.mulf %239, %215 : vector<8x128xf32>
    %249 = arith.mulf %233, %241 : vector<8x128xf32>
    %250 = arith.addf %248, %249 : vector<8x128xf32>
    %251 = math.tanh %250 : vector<8x128xf32>
    %252 = arith.mulf %247, %251 : vector<8x128xf32>
    %253 = arith.index_cast %221 : i32 to index
    %c0_73 = arith.constant 0 : index
    %254 = vector.load %arg13[%253, %c0_73] : memref<64x128xf32, #tpu.memory_space<vmem>>, vector<8x128xf32>
    tpu.vector_store %arg13[%253, %c0_73], %252 {strides = array<i32>} : memref<64x128xf32, #tpu.memory_space<vmem>>, vector<8x128xf32>,
    %c7_i32 = arith.constant 7 : i32
    %c8_i32_74 = arith.constant 8 : i32
    %255 = arith.muli %c7_i32, %c8_i32_74 : i32
    %256 = tpu.assume_multiple %255, 8 : i32
    %257 = arith.index_cast %256 : i32 to index
    %c0_75 = arith.constant 0 : index
    %258 = vector.load %arg12[%257, %c0_75] : memref<64x512xf32, #tpu.memory_space<vmem>>, vector<8x512xf32>
    %259 = arith.truncf %252 : vector<8x128xf32> to vector<8x128xbf16>
    %c0_76 = arith.constant 0 : index
    %c0_77 = arith.constant 0 : index
    %260 = vector.load %arg6[%c0_76, %c0_77] : memref<128x512xbf16, #tpu.memory_space<vmem>>, vector<128x512xbf16>
    %cst_78 = arith.constant dense<0.000000e+00> : vector<8x512xf32>
    %261 = tpu.matmul %259, %260, %cst_78 {dimension_numbers = #tpu.dot_dimension_numbers<[1], [0], [0], [1], [0, 0, 1, 1], [], []>} : vector<8x128xbf16>, vector<128x512xbf16>, vector<8x512xf32> -> vector<8x512xf32>
    %262 = arith.addf %258, %261 : vector<8x512xf32>
    %263 = vector.extract_strided_slice %262 {offsets = [0, 0], sizes = [8, 128], strides = [1, 1]} : vector<8x512xf32> to vector<8x128xf32>
    %264 = arith.negf %263 : vector<8x128xf32>
    %265 = math.exp %264 : vector<8x128xf32>
    %cst_79 = arith.constant 1.000000e+00 : f32
    %266 = vector.broadcast %cst_79 : f32 to vector<8x128xf32>
    %267 = arith.addf %266, %265 : vector<8x128xf32>
    %268 = arith.divf %266, %267 : vector<8x128xf32>
    %269 = vector.extract_strided_slice %262 {offsets = [0, 128], sizes = [8, 128], strides = [1, 1]} : vector<8x512xf32> to vector<8x128xf32>
    %270 = arith.negf %269 : vector<8x128xf32>
    %271 = math.exp %270 : vector<8x128xf32>
    %cst_80 = arith.constant 1.000000e+00 : f32
    %272 = vector.broadcast %cst_80 : f32 to vector<8x128xf32>
    %273 = arith.addf %272, %271 : vector<8x128xf32>
    %274 = arith.divf %272, %273 : vector<8x128xf32>
    %275 = vector.extract_strided_slice %262 {offsets = [0, 256], sizes = [8, 128], strides = [1, 1]} : vector<8x512xf32> to vector<8x128xf32>
    %276 = math.tanh %275 : vector<8x128xf32>
    %277 = vector.extract_strided_slice %262 {offsets = [0, 384], sizes = [8, 128], strides = [1, 1]} : vector<8x512xf32> to vector<8x128xf32>
    %278 = arith.negf %277 : vector<8x128xf32>
    %279 = math.exp %278 : vector<8x128xf32>
    %cst_81 = arith.constant 1.000000e+00 : f32
    %280 = vector.broadcast %cst_81 : f32 to vector<8x128xf32>
    %281 = arith.addf %280, %279 : vector<8x128xf32>
    %282 = arith.divf %280, %281 : vector<8x128xf32>
    %283 = arith.mulf %274, %250 : vector<8x128xf32>
    %284 = arith.mulf %268, %276 : vector<8x128xf32>
    %285 = arith.addf %283, %284 : vector<8x128xf32>
    %286 = math.tanh %285 : vector<8x128xf32>
    %287 = arith.mulf %282, %286 : vector<8x128xf32>
    %288 = arith.index_cast %256 : i32 to index
    %c0_82 = arith.constant 0 : index
    %289 = vector.load %arg13[%288, %c0_82] : memref<64x128xf32, #tpu.memory_space<vmem>>, vector<8x128xf32>
    tpu.vector_store %arg13[%288, %c0_82], %287 {strides = array<i32>} : memref<64x128xf32, #tpu.memory_space<vmem>>, vector<8x128xf32>,
    %c8_i32_83 = arith.constant 8 : i32
    %c0_84 = arith.constant 0 : index
    %c0_85 = arith.constant 0 : index
    %290 = vector.load %arg10[%c0_84, %c0_85] : memref<8x128xf32, #tpu.memory_space<vmem>>, vector<8x128xf32>
    tpu.vector_store %arg10[%c0_84, %c0_85], %287 {strides = array<i32>} : memref<8x128xf32, #tpu.memory_space<vmem>>, vector<8x128xf32>,
    %c0_86 = arith.constant 0 : index
    %c0_87 = arith.constant 0 : index
    %291 = vector.load %arg11[%c0_86, %c0_87] : memref<8x128xf32, #tpu.memory_space<vmem>>, vector<8x128xf32>
    tpu.vector_store %arg11[%c0_86, %c0_87], %285 {strides = array<i32>} : memref<8x128xf32, #tpu.memory_space<vmem>>, vector<8x128xf32>,
    %c0_88 = arith.constant 0 : index
    %c0_89 = arith.constant 0 : index
    %292 = vector.load %arg13[%c0_88, %c0_89] : memref<64x128xf32, #tpu.memory_space<vmem>>, vector<64x128xf32>
    %293 = arith.truncf %292 : vector<64x128xf32> to vector<64x128xbf16>
    %c0_90 = arith.constant 0 : index
    %c0_91 = arith.constant 0 : index
    %294 = vector.load %arg7[%c0_90, %c0_91] : memref<128x128xbf16, #tpu.memory_space<vmem>>, vector<128x128xbf16>
    %cst_92 = arith.constant dense<0.000000e+00> : vector<64x128xf32>
    %295 = tpu.matmul %293, %294, %cst_92 {dimension_numbers = #tpu.dot_dimension_numbers<[1], [0], [0], [1], [0, 0, 1, 1], [], []>} : vector<64x128xbf16>, vector<128x128xbf16>, vector<64x128xf32> -> vector<64x128xf32>
    %c0_93 = arith.constant 0 : index
    %c0_94 = arith.constant 0 : index
    %296 = vector.load %arg8[%c0_93, %c0_94] : memref<1x128xf32, #tpu.memory_space<vmem>>, vector<1x128xf32>
    %297 = vector.broadcast %296 : vector<1x128xf32> to vector<64x128xf32>
    %298 = arith.addf %295, %297 : vector<64x128xf32>
    %c0_95 = arith.constant 0 : index
    %c0_96 = arith.constant 0 : index
    %c0_97 = arith.constant 0 : index
    %299 = vector.load %arg9[%c0_95, %c0_96, %c0_97] : memref<1x64x128xf32, #tpu.memory_space<vmem>>, vector<1x64x128xf32>
    %300 = vector.shape_cast %299 : vector<1x64x128xf32> to vector<64x128xf32>
    %301 = vector.shape_cast %298 : vector<64x128xf32> to vector<1x64x128xf32>
    tpu.vector_store %arg9[%c0_95, %c0_96, %c0_97], %301 {strides = array<i32>} : memref<1x64x128xf32, #tpu.memory_space<vmem>>, vector<1x64x128xf32>,
    return
  }
  func.func @transform_0(%arg0: i32, %arg1: i32) -> (i32, i32, i32) {
    %c0_i32 = arith.constant 0 : i32
    %c0_i32_0 = arith.constant 0 : i32
    return %arg0, %arg1, %c0_i32 : i32, i32, i32
  }
  func.func @transform_1(%arg0: i32, %arg1: i32) -> (i32, i32, i32) {
    %c0_i32 = arith.constant 0 : i32
    %c0_i32_0 = arith.constant 0 : i32
    %c0_i32_1 = arith.constant 0 : i32
    return %arg0, %c0_i32, %c0_i32_0 : i32, i32, i32
  }
  func.func @transform_2(%arg0: i32, %arg1: i32) -> (i32, i32, i32) {
    %c0_i32 = arith.constant 0 : i32
    %c0_i32_0 = arith.constant 0 : i32
    %c0_i32_1 = arith.constant 0 : i32
    return %arg0, %c0_i32, %c0_i32_0 : i32, i32, i32
  }
  func.func @transform_3(%arg0: i32, %arg1: i32) -> (i32, i32) {
    %c0_i32 = arith.constant 0 : i32
    %c0_i32_0 = arith.constant 0 : i32
    %c0_i32_1 = arith.constant 0 : i32
    return %c0_i32, %c0_i32_0 : i32, i32
  }
  func.func @transform_4(%arg0: i32, %arg1: i32) -> (i32, i32) {
    %c0_i32 = arith.constant 0 : i32
    %c0_i32_0 = arith.constant 0 : i32
    %c0_i32_1 = arith.constant 0 : i32
    return %c0_i32, %c0_i32_0 : i32, i32
  }
  func.func @transform_5(%arg0: i32, %arg1: i32) -> (i32, i32) {
    %c0_i32 = arith.constant 0 : i32
    %c0_i32_0 = arith.constant 0 : i32
    %c0_i32_1 = arith.constant 0 : i32
    return %c0_i32, %c0_i32_0 : i32, i32
  }
  func.func @transform_6(%arg0: i32, %arg1: i32) -> (i32, i32) {
    %c0_i32 = arith.constant 0 : i32
    %c0_i32_0 = arith.constant 0 : i32
    %c0_i32_1 = arith.constant 0 : i32
    return %c0_i32, %c0_i32_0 : i32, i32
  }
  func.func @transform_7(%arg0: i32, %arg1: i32) -> (i32, i32, i32) {
    %c0_i32 = arith.constant 0 : i32
    %c0_i32_0 = arith.constant 0 : i32
    return %arg0, %arg1, %c0_i32 : i32, i32, i32
  }
}

</mosaic_0001>

<llo_original>
// kernel: tpu_custom_call.1
$region0: #{tpu_custom_call.1}
  #allocation0 [shape = 'u32[]', space=smem, size = 0x4, offset = 0x4, fixed_abs, tag = 'smem constant byte address 0x4 - core index']
  #allocation1 [shape = 'u32[144,128]{1,0:T(1,128)}', space=vmem, size = 0x12000, scoped, tag = 'internal scratch']
  #allocation2 [shape = 'f32[8,128]{1,0:T(8,128)}', space=vmem, size = 0x1000, scoped, tag = 'scratch operand']
  #allocation3 [shape = 'f32[8,128]{1,0:T(8,128)}', space=vmem, size = 0x1000, scoped, tag = 'scratch operand']
  #allocation4 [shape = 'f32[64,512]{1,0:T(8,128)}', space=vmem, size = 0x20000, scoped, tag = 'scratch operand']
  #allocation5 [shape = 'f32[64,128]{1,0:T(8,128)}', space=vmem, size = 0x8000, scoped, tag = 'scratch operand']
  %s0 = inlined_call_operand.hbm [shape: bf16[1,64,128], index: 0, kind: input, shape index: {}]
  %s1 = inlined_call_operand.hbm [shape: f32[1,8,128], index: 1, kind: input, shape index: {}]
  %s2 = inlined_call_operand.hbm [shape: f32[1,8,128], index: 2, kind: input, shape index: {}]
  %s3 = inlined_call_operand.hbm [shape: bf16[128,512], index: 3, kind: input, shape index: {}]
  %s4 = inlined_call_operand.hbm [shape: bf16[128,512], index: 4, kind: input, shape index: {}]
  %s5 = inlined_call_operand.hbm [shape: bf16[128,128], index: 5, kind: input, shape index: {}]
  %s6 = inlined_call_operand.vmem [shape: f32[1,128], index: 6, kind: input, shape index: {}]
  %s7 = inlined_call_operand.hbm [shape: f32[1,64,128], index: 7, kind: output, shape index: {}]
  %s8 = sld [smem:[#allocation0]]
  $region66: #{tpu_custom_call.1} parent=0
    _
  %s10 = ssub.s32 1, %s8
  %s11 = scalar_select 0, %s10, %s8
  $region1: #{tpu_custom_call.1} parent=0
    #allocation6 [shape = 'u8[16384]{0}', space=vmem, size = 0x4000, scoped, tag = 'input window, operand 0, single buffered']
    #allocation7 [shape = 's32[1]{0}', space=sflag, size = 0x4, scoped, tag = 'scoped memory for tpu_custom_call.1']
    #allocation8 [shape = 's32[1]{0}', space=sflag, size = 0x4, scoped, tag = 'scoped memory for tpu_custom_call.1']
    #allocation9 [shape = 'u8[4096]{0}', space=vmem, size = 0x1000, scoped, tag = 'input window, operand 1, single buffered']
    #allocation10 [shape = 's32[1]{0}', space=sflag, size = 0x4, scoped, tag = 'scoped memory for tpu_custom_call.1']
    #allocation11 [shape = 'u8[4096]{0}', space=vmem, size = 0x1000, scoped, tag = 'input window, operand 2, single buffered']
    #allocation12 [shape = 'u8[131072]{0}', space=vmem, size = 0x20000, scoped, tag = 'input window, operand 3, single buffered']
    #allocation13 [shape = 's32[1]{0}', space=sflag, size = 0x4, scoped, tag = 'scoped memory for tpu_custom_call.1']
    #allocation14 [shape = 'u8[131072]{0}', space=vmem, size = 0x20000, scoped, tag = 'input window, operand 4, single buffered']
    #allocation15 [shape = 'u8[32768]{0}', space=vmem, size = 0x8000, scoped, tag = 'input window, operand 5, single buffered']
    #allocation16 [shape = 's32[1]{0}', space=sflag, size = 0x4, scoped, tag = 'scoped memory for tpu_custom_call.1']
    #allocation17 [shape = 'u8[32768]{0}', space=vmem, size = 0x8000, scoped, tag = 'output window, operand 0, single buffered']
    %12 = vsyncpa [#allocation7], 0
    %13 = vsyncpa [#allocation10], 0
    %14 = vsyncpa [#allocation13], 0
    %15 = vsyncpa [#allocation16], 0
    %16 = vsyncpa [#allocation8], 0
    // Predicated region
    $region2: #{tpu_custom_call.1} parent=1 // pred_check
      _
    $region3: #{tpu_custom_call.1} parent=1 // pred_check_branch
      %18 = sbr.rel (0) target = $region5
    $region4: #{tpu_custom_call.1} parent=1 // pred_region
      %s20 = ssub.s32 512, 512
      %21 = vsyncadd [#allocation7], %s20
      %s22 = sshll.u32 [#allocation6], 4
      %s23 = int_to_ptr.vmem [resolvable:$true] %s22
      %28 = dma.hbm_to_vmem [thread:$0]  %s0, 512, %s23, [#allocation7], 64, 64, 4
    $region5: #{tpu_custom_call.1} parent=1 // pred_fallthru
      _
    // Predicated region
    $region6: #{tpu_custom_call.1} parent=1 // pred_check
      _
    $region7: #{tpu_custom_call.1} parent=1 // pred_check_branch
      %30 = sbr.rel (0) target = $region9
    $region8: #{tpu_custom_call.1} parent=1 // pred_region
      %s32 = ssub.s32 128, 128
      %33 = vsyncadd [#allocation10], %s32
      %s35 = sshll.u32 [#allocation9], 4
      %s36 = int_to_ptr.vmem [resolvable:$true] %s35
      %38 = dma.hbm_to_vmem [thread:$0]  %s1, 128, %s36, [#allocation10]
    $region9: #{tpu_custom_call.1} parent=1 // pred_fallthru
      _
    // Predicated region
    $region10: #{tpu_custom_call.1} parent=1 // pred_check
      _
    $region11: #{tpu_custom_call.1} parent=1 // pred_check_branch
      %40 = sbr.rel (0) target = $region13
    $region12: #{tpu_custom_call.1} parent=1 // pred_region
      %s42 = ssub.s32 128, 128
      %43 = vsyncadd [#allocation10], %s42
      %s45 = sshll.u32 [#allocation11], 4
      %s46 = int_to_ptr.vmem [resolvable:$true] %s45
      %48 = dma.hbm_to_vmem [thread:$0]  %s2, 128, %s46, [#allocation10]
    $region13: #{tpu_custom_call.1} parent=1 // pred_fallthru
      _
    // Predicated region
    $region14: #{tpu_custom_call.1} parent=1 // pred_check
      _
    $region15: #{tpu_custom_call.1} parent=1 // pred_check_branch
      %50 = sbr.rel (0) target = $region17
    $region16: #{tpu_custom_call.1} parent=1 // pred_region
      %s52 = ssub.s32 4096, 4096
      %53 = vsyncadd [#allocation13], %s52
      %s54 = sshll.u32 [#allocation12], 4
      %s55 = int_to_ptr.vmem [resolvable:$true] %s54
      %60 = dma.hbm_to_vmem [thread:$0]  %s3, 4096, %s55, [#allocation13], 256, 256, 16
    $region17: #{tpu_custom_call.1} parent=1 // pred_fallthru
      _
    // Predicated region
    $region18: #{tpu_custom_call.1} parent=1 // pred_check
      _
    $region19: #{tpu_custom_call.1} parent=1 // pred_check_branch
      %62 = sbr.rel (0) target = $region21
    $region20: #{tpu_custom_call.1} parent=1 // pred_region
      %s64 = ssub.s32 4096, 4096
      %65 = vsyncadd [#allocation13], %s64
      %s66 = sshll.u32 [#allocation14], 4
      %s67 = int_to_ptr.vmem [resolvable:$true] %s66
      %72 = dma.hbm_to_vmem [thread:$0]  %s4, 4096, %s67, [#allocation13], 256, 256, 16
    $region21: #{tpu_custom_call.1} parent=1 // pred_fallthru
      _
    // Predicated region
    $region22: #{tpu_custom_call.1} parent=1 // pred_check
      _
    $region23: #{tpu_custom_call.1} parent=1 // pred_check_branch
      %74 = sbr.rel (0) target = $region25
    $region24: #{tpu_custom_call.1} parent=1 // pred_region
      %s76 = ssub.s32 1024, 1024
      %77 = vsyncadd [#allocation16], %s76
      %s78 = sshll.u32 [#allocation15], 4
      %s79 = int_to_ptr.vmem [resolvable:$true] %s78
      %84 = dma.hbm_to_vmem [thread:$0]  %s5, 1024, %s79, [#allocation16], 64, 64, 4
    $region25: #{tpu_custom_call.1} parent=1 // pred_fallthru
      _
    // Predicated region
    $region26: #{tpu_custom_call.1} parent=1 // pred_check
      _
    $region27: #{tpu_custom_call.1} parent=1 // pred_check_branch
      %86 = sbr.rel (0) target = $region29
    $region28: #{tpu_custom_call.1} parent=1 // pred_region
      _
    $region29: #{tpu_custom_call.1} parent=1 // pred_fallthru
      _
    // Predicated region
    $region30: #{tpu_custom_call.1} parent=1 // pred_check
      _
    $region31: #{tpu_custom_call.1} parent=1 // pred_check_branch
      %88 = sbr.rel (0) target = $region33
    $region32: #{tpu_custom_call.1} parent=1 // pred_region
      %89 = dma.done [#allocation7], 512
    $region33: #{tpu_custom_call.1} parent=1 // pred_fallthru
      _
    // Predicated region
    $region34: #{tpu_custom_call.1} parent=1 // pred_check
      _
    $region35: #{tpu_custom_call.1} parent=1 // pred_check_branch
      %91 = sbr.rel (0) target = $region37
    $region36: #{tpu_custom_call.1} parent=1 // pred_region
      %92 = dma.done [#allocation10], 128
    $region37: #{tpu_custom_call.1} parent=1 // pred_fallthru
      _
    // Predicated region
    $region38: #{tpu_custom_call.1} parent=1 // pred_check
      _
    $region39: #{tpu_custom_call.1} parent=1 // pred_check_branch
      %94 = sbr.rel (0) target = $region41
    $region40: #{tpu_custom_call.1} parent=1 // pred_region
      %95 = dma.done [#allocation10], 128
    $region41: #{tpu_custom_call.1} parent=1 // pred_fallthru
      _
    // Predicated region
    $region42: #{tpu_custom_call.1} parent=1 // pred_check
      _
    $region43: #{tpu_custom_call.1} parent=1 // pred_check_branch
      %97 = sbr.rel (0) target = $region45
    $region44: #{tpu_custom_call.1} parent=1 // pred_region
      %98 = dma.done [#allocation13], 4096
    $region45: #{tpu_custom_call.1} parent=1 // pred_fallthru
      _
    // Predicated region
    $region46: #{tpu_custom_call.1} parent=1 // pred_check
      _
    $region47: #{tpu_custom_call.1} parent=1 // pred_check_branch
      %100 = sbr.rel (0) target = $region49
    $region48: #{tpu_custom_call.1} parent=1 // pred_region
      %101 = dma.done [#allocation13], 4096
    $region49: #{tpu_custom_call.1} parent=1 // pred_fallthru
      _
    // Predicated region
    $region50: #{tpu_custom_call.1} parent=1 // pred_check
      _
    $region51: #{tpu_custom_call.1} parent=1 // pred_check_branch
      %103 = sbr.rel (0) target = $region53
    $region52: #{tpu_custom_call.1} parent=1 // pred_region
      %104 = dma.done [#allocation16], 1024
    $region53: #{tpu_custom_call.1} parent=1 // pred_fallthru
      _
    %p106 = scmp.eq.s32.totalorder 0, 0
    // Predicated region
    $region54: #{tpu_custom_call.1} parent=1 // pred_check
      %p107 = pneg %p106
    $region55: #{tpu_custom_call.1} parent=1 // pred_check_branch
      %109 = sbr.rel (%p107) target = $region57
    $region56: #{tpu_custom_call.1} parent=1 // pred_region
      %v110 = vld [vmem:[#allocation9] sm:$0xff]
      %111 = vst [vmem:[#allocation2] sm:$0xff] %v110
      %v112 = vld [vmem:[#allocation11] sm:$0xff]
      %113 = vst [vmem:[#allocation3] sm:$0xff] %v112
    $region57: #{tpu_custom_call.1} parent=1 // pred_fallthru
      _
    %v114 = vld [vmem:[#allocation6] sm:$0xf]
    %v115 = vld [vmem:[#allocation6 + $0x4] sm:$0xf]
    %v116 = vld [vmem:[#allocation6 + $0x8] sm:$0xf]
    %v117 = vld [vmem:[#allocation6 + $0xc] sm:$0xf]
    %v118 = vld [vmem:[#allocation6 + $0x10] sm:$0xf]
    %v119 = vld [vmem:[#allocation6 + $0x14] sm:$0xf]
    %v120 = vld [vmem:[#allocation6 + $0x18] sm:$0xf]
    %v121 = vld [vmem:[#allocation6 + $0x1c] sm:$0xf]
    %v122 = vld [vmem:[#allocation12] sm:$0xff]
    %v123 = vld [vmem:[#allocation12 + $0x8] sm:$0xff]
    %v124 = vld [vmem:[#allocation12 + $0x10] sm:$0xff]
    %v125 = vld [vmem:[#allocation12 + $0x18] sm:$0xff]
    %v126 = vld [vmem:[#allocation12 + $0x20] sm:$0xff]
    %v127 = vld [vmem:[#allocation12 + $0x28] sm:$0xff]
    %v128 = vld [vmem:[#allocation12 + $0x30] sm:$0xff]
    %v129 = vld [vmem:[#allocation12 + $0x38] sm:$0xff]
    %v130 = vld [vmem:[#allocation12 + $0x40] sm:$0xff]
    %v131 = vld [vmem:[#allocation12 + $0x48] sm:$0xff]
    %v132 = vld [vmem:[#allocation12 + $0x50] sm:$0xff]
    %v133 = vld [vmem:[#allocation12 + $0x58] sm:$0xff]
    %v134 = vld [vmem:[#allocation12 + $0x60] sm:$0xff]
    %v135 = vld [vmem:[#allocation12 + $0x68] sm:$0xff]
    %v136 = vld [vmem:[#allocation12 + $0x70] sm:$0xff]
    %v137 = vld [vmem:[#allocation12 + $0x78] sm:$0xff]
    %v138 = vld [vmem:[#allocation12 + $0x80] sm:$0xff]
    %v139 = vld [vmem:[#allocation12 + $0x88] sm:$0xff]
    %v140 = vld [vmem:[#allocation12 + $0x90] sm:$0xff]
    %v141 = vld [vmem:[#allocation12 + $0x98] sm:$0xff]
    %v142 = vld [vmem:[#allocation12 + $0xa0] sm:$0xff]
    %v143 = vld [vmem:[#allocation12 + $0xa8] sm:$0xff]
    %v144 = vld [vmem:[#allocation12 + $0xb0] sm:$0xff]
    %v145 = vld [vmem:[#allocation12 + $0xb8] sm:$0xff]
    %v146 = vld [vmem:[#allocation12 + $0xc0] sm:$0xff]
    %v147 = vld [vmem:[#allocation12 + $0xc8] sm:$0xff]
    %v148 = vld [vmem:[#allocation12 + $0xd0] sm:$0xff]
    %v149 = vld [vmem:[#allocation12 + $0xd8] sm:$0xff]
    %v150 = vld [vmem:[#allocation12 + $0xe0] sm:$0xff]
    %v151 = vld [vmem:[#allocation12 + $0xe8] sm:$0xff]
    %v152 = vld [vmem:[#allocation12 + $0xf0] sm:$0xff]
    %v153 = vld [vmem:[#allocation12 + $0xf8] sm:$0xff]
    %v162 = vunpack.c.l.b16 %v114
    %v163 = vunpack.c.l.b16 %v115
    %v164 = vunpack.c.l.b16 %v116
    %v165 = vunpack.c.l.b16 %v117
    %v166 = vunpack.c.l.b16 %v118
    %v167 = vunpack.c.l.b16 %v119
    %v168 = vunpack.c.l.b16 %v120
    %v169 = vunpack.c.l.b16 %v121
    %v170 = vpack.c.b16 %v163, %v162
    %v171 = vpack.c.b16 %v165, %v164
    %v172 = vpack.c.b16 %v167, %v166
    %v173 = vpack.c.b16 %v169, %v168
    %v210 = vunpack.c.l.b16 %v122
    %v211 = vunpack.c.h.b16 %v122
    %v212 = vunpack.c.l.b16 %v123
    %v213 = vunpack.c.h.b16 %v123
    %v214 = vunpack.c.l.b16 %v124
    %v215 = vunpack.c.h.b16 %v124
    %v216 = vunpack.c.l.b16 %v125
    %v217 = vunpack.c.h.b16 %v125
    %v218 = vunpack.c.l.b16 %v126
    %v219 = vunpack.c.h.b16 %v126
    %v220 = vunpack.c.l.b16 %v127
    %v221 = vunpack.c.h.b16 %v127
    %v222 = vunpack.c.l.b16 %v128
    %v223 = vunpack.c.h.b16 %v128
    %v224 = vunpack.c.l.b16 %v129
    %v225 = vunpack.c.h.b16 %v129
    %v226 = vunpack.c.l.b16 %v130
    %v227 = vunpack.c.h.b16 %v130
    %v228 = vunpack.c.l.b16 %v131
    %v229 = vunpack.c.h.b16 %v131
    %v230 = vunpack.c.l.b16 %v132
    %v231 = vunpack.c.h.b16 %v132
    %v232 = vunpack.c.l.b16 %v133
    %v233 = vunpack.c.h.b16 %v133
    %v234 = vunpack.c.l.b16 %v134
    %v235 = vunpack.c.h.b16 %v134
    %v236 = vunpack.c.l.b16 %v135
    %v237 = vunpack.c.h.b16 %v135
    %v238 = vunpack.c.l.b16 %v136
    %v239 = vunpack.c.h.b16 %v136
    %v240 = vunpack.c.l.b16 %v137
    %v241 = vunpack.c.h.b16 %v137
    %v242 = vunpack.c.l.b16 %v138
    %v243 = vunpack.c.h.b16 %v138
    %v244 = vunpack.c.l.b16 %v139
    %v245 = vunpack.c.h.b16 %v139
    %v246 = vunpack.c.l.b16 %v140
    %v247 = vunpack.c.h.b16 %v140
    %v248 = vunpack.c.l.b16 %v141
    %v249 = vunpack.c.h.b16 %v141
    %v250 = vunpack.c.l.b16 %v142
    %v251 = vunpack.c.h.b16 %v142
    %v252 = vunpack.c.l.b16 %v143
    %v253 = vunpack.c.h.b16 %v143
    %v254 = vunpack.c.l.b16 %v144
    %v255 = vunpack.c.h.b16 %v144
    %v256 = vunpack.c.l.b16 %v145
    %v257 = vunpack.c.h.b16 %v145
    %v258 = vunpack.c.l.b16 %v146
    %v259 = vunpack.c.h.b16 %v146
    %v260 = vunpack.c.l.b16 %v147
    %v261 = vunpack.c.h.b16 %v147
    %v262 = vunpack.c.l.b16 %v148
    %v263 = vunpack.c.h.b16 %v148
    %v264 = vunpack.c.l.b16 %v149
    %v265 = vunpack.c.h.b16 %v149
    %v266 = vunpack.c.l.b16 %v150
    %v267 = vunpack.c.h.b16 %v150
    %v268 = vunpack.c.l.b16 %v151
    %v269 = vunpack.c.h.b16 %v151
    %v270 = vunpack.c.l.b16 %v152
    %v271 = vunpack.c.h.b16 %v152
    %v272 = vunpack.c.l.b16 %v153
    %v273 = vunpack.c.h.b16 %v153
    %v274 = vpack.c.b16 %v214, %v210
    %v275 = vpack.c.b16 %v215, %v211
    %v276 = vpack.c.b16 %v216, %v212
    %v277 = vpack.c.b16 %v217, %v213
    %v278 = vpack.c.b16 %v222, %v218
    %v279 = vpack.c.b16 %v223, %v219
    %v280 = vpack.c.b16 %v224, %v220
    %v281 = vpack.c.b16 %v225, %v221
    %v282 = vpack.c.b16 %v230, %v226
    %v283 = vpack.c.b16 %v231, %v227
    %v284 = vpack.c.b16 %v232, %v228
    %v285 = vpack.c.b16 %v233, %v229
    %v286 = vpack.c.b16 %v238, %v234
    %v287 = vpack.c.b16 %v239, %v235
    %v288 = vpack.c.b16 %v240, %v236
    %v289 = vpack.c.b16 %v241, %v237
    %v290 = vpack.c.b16 %v246, %v242
    %v291 = vpack.c.b16 %v247, %v243
    %v292 = vpack.c.b16 %v248, %v244
    %v293 = vpack.c.b16 %v249, %v245
    %v294 = vpack.c.b16 %v254, %v250
    %v295 = vpack.c.b16 %v255, %v251
    %v296 = vpack.c.b16 %v256, %v252
    %v297 = vpack.c.b16 %v257, %v253
    %v298 = vpack.c.b16 %v262, %v258
    %v299 = vpack.c.b16 %v263, %v259
    %v300 = vpack.c.b16 %v264, %v260
    %v301 = vpack.c.b16 %v265, %v261
    %v302 = vpack.c.b16 %v270, %v266
    %v303 = vpack.c.b16 %v271, %v267
    %v304 = vpack.c.b16 %v272, %v268
    %v305 = vpack.c.b16 %v273, %v269
    %338 = vmatprep.subr.bf16.mxu0 %v275
    %339 = vmatpush1.bf16.msra.mxu0 %v274
    %340 = vmatprep.subr.bf16.mxu0 %v279
    %341 = vmatpush1.bf16.msra.mxu0 %v278
    %342 = vmatprep.subr.bf16.mxu0 %v283
    %343 = vmatpush1.bf16.msra.mxu0 %v282
    %344 = vmatprep.subr.bf16.mxu0 %v287
    %345 = vmatpush1.bf16.msra.mxu0 %v286
    %346 = vmatprep.subr.bf16.mxu0 %v291
    %347 = vmatpush1.bf16.msra.mxu0 %v290
    %348 = vmatprep.subr.bf16.mxu0 %v295
    %349 = vmatpush1.bf16.msra.mxu0 %v294
    %350 = vmatprep.subr.bf16.mxu0 %v299
    %351 = vmatpush1.bf16.msra.mxu0 %v298
    %352 = vmatprep.subr.bf16.mxu0 %v303
    %353 = vmatpush1.bf16.msra.mxu0 %v302
    %354 = vmatprep.subr.bf16.mxu0 0
    %355 = vmatpush1.bf16.msra.mxu0 0
    %356 = vmatprep.subr.bf16.mxu0 0
    %357 = vmatpush1.bf16.msra.mxu0 0
    %358 = vmatprep.subr.bf16.mxu0 0
    %359 = vmatpush1.bf16.msra.mxu0 0
    %360 = vmatprep.subr.bf16.mxu0 0
    %361 = vmatpush1.bf16.msra.mxu0 0
    %362 = vmatprep.subr.bf16.mxu0 0
    %363 = vmatpush1.bf16.msra.mxu0 0
    %364 = vmatprep.subr.bf16.mxu0 0
    %365 = vmatpush1.bf16.msra.mxu0 0
    %366 = vmatprep.subr.bf16.mxu0 0
    %367 = vmatpush1.bf16.msra.mxu0 0
    %368 = vmatprep.subr.bf16.mxu0 0
    %369 = vmatpush1.bf16.msra.mxu0 0
    %370 = vmatprep.mubr.bf16.mxu0 0
    %371 = vmatmul.mubr.bf16.gmra.mrb[0].mxu0 %v170
    %v372 = vpop.f32.mrb[0].mxu0
    %v373 = vadd.f32 0.0, %v372
    %v374 = vpop.f32.mrb[0].mxu0
    %v375 = vadd.f32 0.0, %v374
    %v376 = vpop.f32.mrb[0].mxu0
    %v377 = vadd.f32 0.0, %v376
    %v378 = vpop.f32.mrb[0].mxu0
    %v379 = vadd.f32 0.0, %v378
    %380 = vmatprep.mubr.bf16.mxu0 0
    %381 = vmatmul.mubr.bf16.gmra.mrb[0].mxu0 %v171
    %v382 = vpop.f32.mrb[0].mxu0
    %v383 = vadd.f32 0.0, %v382
    %v384 = vpop.f32.mrb[0].mxu0
    %v385 = vadd.f32 0.0, %v384
    %v386 = vpop.f32.mrb[0].mxu0
    %v387 = vadd.f32 0.0, %v386
    %v388 = vpop.f32.mrb[0].mxu0
    %v389 = vadd.f32 0.0, %v388
    %390 = vmatprep.mubr.bf16.mxu0 0
    %391 = vmatmul.mubr.bf16.gmra.mrb[0].mxu0 %v172
    %v392 = vpop.f32.mrb[0].mxu0
    %v393 = vadd.f32 0.0, %v392
    %v394 = vpop.f32.mrb[0].mxu0
    %v395 = vadd.f32 0.0, %v394
    %v396 = vpop.f32.mrb[0].mxu0
    %v397 = vadd.f32 0.0, %v396
    %v398 = vpop.f32.mrb[0].mxu0
    %v399 = vadd.f32 0.0, %v398
    %400 = vmatprep.mubr.bf16.mxu0 0
    %401 = vmatmul.mubr.bf16.gmra.mrb[0].mxu0 %v173
    %v402 = vpop.f32.mrb[0].mxu0
    %v403 = vadd.f32 0.0, %v402
    %v404 = vpop.f32.mrb[0].mxu0
    %v405 = vadd.f32 0.0, %v404
    %v406 = vpop.f32.mrb[0].mxu0
    %v407 = vadd.f32 0.0, %v406
    %v408 = vpop.f32.mrb[0].mxu0
    %v409 = vadd.f32 0.0, %v408
    %410 = vdwg.mxu0
    %411 = vmatprep.subr.bf16.mxu0 %v277
    %412 = vmatpush1.bf16.msra.mxu0 %v276
    %413 = vmatprep.subr.bf16.mxu0 %v281
    %414 = vmatpush1.bf16.msra.mxu0 %v280
    %415 = vmatprep.subr.bf16.mxu0 %v285
    %416 = vmatpush1.bf16.msra.mxu0 %v284
    %417 = vmatprep.subr.bf16.mxu0 %v289
    %418 = vmatpush1.bf16.msra.mxu0 %v288
    %419 = vmatprep.subr.bf16.mxu0 %v293
    %420 = vmatpush1.bf16.msra.mxu0 %v292
    %421 = vmatprep.subr.bf16.mxu0 %v297
    %422 = vmatpush1.bf16.msra.mxu0 %v296
    %423 = vmatprep.subr.bf16.mxu0 %v301
    %424 = vmatpush1.bf16.msra.mxu0 %v300
    %425 = vmatprep.subr.bf16.mxu0 %v305
    %426 = vmatpush1.bf16.msra.mxu0 %v304
    %427 = vmatprep.subr.bf16.mxu0 0
    %428 = vmatpush1.bf16.msra.mxu0 0
    %429 = vmatprep.subr.bf16.mxu0 0
    %430 = vmatpush1.bf16.msra.mxu0 0
    %431 = vmatprep.subr.bf16.mxu0 0
    %432 = vmatpush1.bf16.msra.mxu0 0
    %433 = vmatprep.subr.bf16.mxu0 0
    %434 = vmatpush1.bf16.msra.mxu0 0
    %435 = vmatprep.subr.bf16.mxu0 0
    %436 = vmatpush1.bf16.msra.mxu0 0
    %437 = vmatprep.subr.bf16.mxu0 0
    %438 = vmatpush1.bf16.msra.mxu0 0
    %439 = vmatprep.subr.bf16.mxu0 0
    %440 = vmatpush1.bf16.msra.mxu0 0
    %441 = vmatprep.subr.bf16.mxu0 0
    %442 = vmatpush1.bf16.msra.mxu0 0
    %443 = vmatprep.mubr.bf16.mxu0 0
    %444 = vmatmul.mubr.bf16.gmra.mrb[0].mxu0 %v170
    %v445 = vpop.f32.mrb[0].mxu0
    %v446 = vadd.f32 0.0, %v445
    %v447 = vpop.f32.mrb[0].mxu0
    %v448 = vadd.f32 0.0, %v447
    %v449 = vpop.f32.mrb[0].mxu0
    %v450 = vadd.f32 0.0, %v449
    %v451 = vpop.f32.mrb[0].mxu0
    %v452 = vadd.f32 0.0, %v451
    %453 = vmatprep.mubr.bf16.mxu0 0
    %454 = vmatmul.mubr.bf16.gmra.mrb[0].mxu0 %v171
    %v455 = vpop.f32.mrb[0].mxu0
    %v456 = vadd.f32 0.0, %v455
    %v457 = vpop.f32.mrb[0].mxu0
    %v458 = vadd.f32 0.0, %v457
    %v459 = vpop.f32.mrb[0].mxu0
    %v460 = vadd.f32 0.0, %v459
    %v461 = vpop.f32.mrb[0].mxu0
    %v462 = vadd.f32 0.0, %v461
    %463 = vmatprep.mubr.bf16.mxu0 0
    %464 = vmatmul.mubr.bf16.gmra.mrb[0].mxu0 %v172
    %v465 = vpop.f32.mrb[0].mxu0
    %v466 = vadd.f32 0.0, %v465
    %v467 = vpop.f32.mrb[0].mxu0
    %v468 = vadd.f32 0.0, %v467
    %v469 = vpop.f32.mrb[0].mxu0
    %v470 = vadd.f32 0.0, %v469
    %v471 = vpop.f32.mrb[0].mxu0
    %v472 = vadd.f32 0.0, %v471
    %473 = vmatprep.mubr.bf16.mxu0 0
    %474 = vmatmul.mubr.bf16.gmra.mrb[0].mxu0 %v173
    %v475 = vpop.f32.mrb[0].mxu0
    %v476 = vadd.f32 0.0, %v475
    %v477 = vpop.f32.mrb[0].mxu0
    %v478 = vadd.f32 0.0, %v477
    %v479 = vpop.f32.mrb[0].mxu0
    %v480 = vadd.f32 0.0, %v479
    %v481 = vpop.f32.mrb[0].mxu0
    %v482 = vadd.f32 0.0, %v481
    %483 = vdwg.mxu0
    %484 = vst [vmem:[#allocation4] sm:$0xff] %v373
    %485 = vst [vmem:[#allocation4 + $0x8] sm:$0xff] %v375
    %486 = vst [vmem:[#allocation4 + $0x10] sm:$0xff] %v446
    %487 = vst [vmem:[#allocation4 + $0x18] sm:$0xff] %v448
    %488 = vst [vmem:[#allocation4 + $0x20] sm:$0xff] %v377
    %489 = vst [vmem:[#allocation4 + $0x28] sm:$0xff] %v379
    %490 = vst [vmem:[#allocation4 + $0x30] sm:$0xff] %v450
    %491 = vst [vmem:[#allocation4 + $0x38] sm:$0xff] %v452
    %492 = vst [vmem:[#allocation4 + $0x40] sm:$0xff] %v383
    %493 = vst [vmem:[#allocation4 + $0x48] sm:$0xff] %v385
    %494 = vst [vmem:[#allocation4 + $0x50] sm:$0xff] %v456
    %495 = vst [vmem:[#allocation4 + $0x58] sm:$0xff] %v458
    %496 = vst [vmem:[#allocation4 + $0x60] sm:$0xff] %v387
    %497 = vst [vmem:[#allocation4 + $0x68] sm:$0xff] %v389
    %498 = vst [vmem:[#allocation4 + $0x70] sm:$0xff] %v460
    %499 = vst [vmem:[#allocation4 + $0x78] sm:$0xff] %v462
    %500 = vst [vmem:[#allocation4 + $0x80] sm:$0xff] %v393
    %501 = vst [vmem:[#allocation4 + $0x88] sm:$0xff] %v395
    %502 = vst [vmem:[#allocation4 + $0x90] sm:$0xff] %v466
    %503 = vst [vmem:[#allocation4 + $0x98] sm:$0xff] %v468
    %504 = vst [vmem:[#allocation4 + $0xa0] sm:$0xff] %v397
    %505 = vst [vmem:[#allocation4 + $0xa8] sm:$0xff] %v399
    %506 = vst [vmem:[#allocation4 + $0xb0] sm:$0xff] %v470
    %507 = vst [vmem:[#allocation4 + $0xb8] sm:$0xff] %v472
    %508 = vst [vmem:[#allocation4 + $0xc0] sm:$0xff] %v403
    %509 = vst [vmem:[#allocation4 + $0xc8] sm:$0xff] %v405
    %510 = vst [vmem:[#allocation4 + $0xd0] sm:$0xff] %v476
    %511 = vst [vmem:[#allocation4 + $0xd8] sm:$0xff] %v478
    %512 = vst [vmem:[#allocation4 + $0xe0] sm:$0xff] %v407
    %513 = vst [vmem:[#allocation4 + $0xe8] sm:$0xff] %v409
    %514 = vst [vmem:[#allocation4 + $0xf0] sm:$0xff] %v480
    %515 = vst [vmem:[#allocation4 + $0xf8] sm:$0xff] %v482
    %v516 = vld [vmem:[#allocation2] sm:$0xff]
    %v517 = vld [vmem:[#allocation3] sm:$0xff]
    %s518 = smul.u32 0, 4
    %s519 = smul.addr %s518, 8
    %s520 = scalar_lea.vmem [#allocation4], %s519
    %v521 = vld [vmem:[%s520] sm:$0xff]
    %v522 = vld [vmem:[%s520 + $0x8] sm:$0xff]
    %v523 = vld [vmem:[%s520 + $0x10] sm:$0xff]
    %v524 = vld [vmem:[%s520 + $0x18] sm:$0xff]
    %v525 = vpack.c.bf16 %v516, %v516
    %v526 = vld [vmem:[#allocation14] sm:$0xff]
    %v527 = vld [vmem:[#allocation14 + $0x8] sm:$0xff]
    %v528 = vld [vmem:[#allocation14 + $0x10] sm:$0xff]
    %v529 = vld [vmem:[#allocation14 + $0x18] sm:$0xff]
    %v530 = vld [vmem:[#allocation14 + $0x20] sm:$0xff]
    %v531 = vld [vmem:[#allocation14 + $0x28] sm:$0xff]
    %v532 = vld [vmem:[#allocation14 + $0x30] sm:$0xff]
    %v533 = vld [vmem:[#allocation14 + $0x38] sm:$0xff]
    %v534 = vld [vmem:[#allocation14 + $0x40] sm:$0xff]
    %v535 = vld [vmem:[#allocation14 + $0x48] sm:$0xff]
    %v536 = vld [vmem:[#allocation14 + $0x50] sm:$0xff]
    %v537 = vld [vmem:[#allocation14 + $0x58] sm:$0xff]
    %v538 = vld [vmem:[#allocation14 + $0x60] sm:$0xff]
    %v539 = vld [vmem:[#allocation14 + $0x68] sm:$0xff]
    %v540 = vld [vmem:[#allocation14 + $0x70] sm:$0xff]
    %v541 = vld [vmem:[#allocation14 + $0x78] sm:$0xff]
    %v542 = vld [vmem:[#allocation14 + $0x80] sm:$0xff]
    %v543 = vld [vmem:[#allocation14 + $0x88] sm:$0xff]
    %v544 = vld [vmem:[#allocation14 + $0x90] sm:$0xff]
    %v545 = vld [vmem:[#allocation14 + $0x98] sm:$0xff]
    %v546 = vld [vmem:[#allocation14 + $0xa0] sm:$0xff]
    %v547 = vld [vmem:[#allocation14 + $0xa8] sm:$0xff]
    %v548 = vld [vmem:[#allocation14 + $0xb0] sm:$0xff]
    %v549 = vld [vmem:[#allocation14 + $0xb8] sm:$0xff]
    %v550 = vld [vmem:[#allocation14 + $0xc0] sm:$0xff]
    %v551 = vld [vmem:[#allocation14 + $0xc8] sm:$0xff]
    %v552 = vld [vmem:[#allocation14 + $0xd0] sm:$0xff]
    %v553 = vld [vmem:[#allocation14 + $0xd8] sm:$0xff]
    %v554 = vld [vmem:[#allocation14 + $0xe0] sm:$0xff]
    %v555 = vld [vmem:[#allocation14 + $0xe8] sm:$0xff]
    %v556 = vld [vmem:[#allocation14 + $0xf0] sm:$0xff]
    %v557 = vld [vmem:[#allocation14 + $0xf8] sm:$0xff]
    %v590 = vunpack.c.l.b16 %v526
    %v591 = vunpack.c.h.b16 %v526
    %v592 = vunpack.c.l.b16 %v527
    %v593 = vunpack.c.h.b16 %v527
    %v594 = vunpack.c.l.b16 %v528
    %v595 = vunpack.c.h.b16 %v528
    %v596 = vunpack.c.l.b16 %v529
    %v597 = vunpack.c.h.b16 %v529
    %v598 = vunpack.c.l.b16 %v530
    %v599 = vunpack.c.h.b16 %v530
    %v600 = vunpack.c.l.b16 %v531
    %v601 = vunpack.c.h.b16 %v531
    %v602 = vunpack.c.l.b16 %v532
    %v603 = vunpack.c.h.b16 %v532
    %v604 = vunpack.c.l.b16 %v533
    %v605 = vunpack.c.h.b16 %v533
    %v606 = vunpack.c.l.b16 %v534
    %v607 = vunpack.c.h.b16 %v534
    %v608 = vunpack.c.l.b16 %v535
    %v609 = vunpack.c.h.b16 %v535
    %v610 = vunpack.c.l.b16 %v536
    %v611 = vunpack.c.h.b16 %v536
    %v612 = vunpack.c.l.b16 %v537
    %v613 = vunpack.c.h.b16 %v537
    %v614 = vunpack.c.l.b16 %v538
    %v615 = vunpack.c.h.b16 %v538
    %v616 = vunpack.c.l.b16 %v539
    %v617 = vunpack.c.h.b16 %v539
    %v618 = vunpack.c.l.b16 %v540
    %v619 = vunpack.c.h.b16 %v540
    %v620 = vunpack.c.l.b16 %v541
    %v621 = vunpack.c.h.b16 %v541
    %v622 = vunpack.c.l.b16 %v542
    %v623 = vunpack.c.h.b16 %v542
    %v624 = vunpack.c.l.b16 %v543
    %v625 = vunpack.c.h.b16 %v543
    %v626 = vunpack.c.l.b16 %v544
    %v627 = vunpack.c.h.b16 %v544
    %v628 = vunpack.c.l.b16 %v545
    %v629 = vunpack.c.h.b16 %v545
    %v630 = vunpack.c.l.b16 %v546
    %v631 = vunpack.c.h.b16 %v546
    %v632 = vunpack.c.l.b16 %v547
    %v633 = vunpack.c.h.b16 %v547
    %v634 = vunpack.c.l.b16 %v548
    %v635 = vunpack.c.h.b16 %v548
    %v636 = vunpack.c.l.b16 %v549
    %v637 = vunpack.c.h.b16 %v549
    %v638 = vunpack.c.l.b16 %v550
    %v639 = vunpack.c.h.b16 %v550
    %v640 = vunpack.c.l.b16 %v551
    %v641 = vunpack.c.h.b16 %v551
    %v642 = vunpack.c.l.b16 %v552
    %v643 = vunpack.c.h.b16 %v552
    %v644 = vunpack.c.l.b16 %v553
    %v645 = vunpack.c.h.b16 %v553
    %v646 = vunpack.c.l.b16 %v554
    %v647 = vunpack.c.h.b16 %v554
    %v648 = vunpack.c.l.b16 %v555
    %v649 = vunpack.c.h.b16 %v555
    %v650 = vunpack.c.l.b16 %v556
    %v651 = vunpack.c.h.b16 %v556
    %v652 = vunpack.c.l.b16 %v557
    %v653 = vunpack.c.h.b16 %v557
    %v654 = vpack.c.b16 %v594, %v590
    %v655 = vpack.c.b16 %v595, %v591
    %v656 = vpack.c.b16 %v596, %v592
    %v657 = vpack.c.b16 %v597, %v593
    %v658 = vpack.c.b16 %v602, %v598
    %v659 = vpack.c.b16 %v603, %v599
    %v660 = vpack.c.b16 %v604, %v600
    %v661 = vpack.c.b16 %v605, %v601
    %v662 = vpack.c.b16 %v610, %v606
    %v663 = vpack.c.b16 %v611, %v607
    %v664 = vpack.c.b16 %v612, %v608
    %v665 = vpack.c.b16 %v613, %v609
    %v666 = vpack.c.b16 %v618, %v614
    %v667 = vpack.c.b16 %v619, %v615
    %v668 = vpack.c.b16 %v620, %v616
    %v669 = vpack.c.b16 %v621, %v617
    %v670 = vpack.c.b16 %v626, %v622
    %v671 = vpack.c.b16 %v627, %v623
    %v672 = vpack.c.b16 %v628, %v624
    %v673 = vpack.c.b16 %v629, %v625
    %v674 = vpack.c.b16 %v634, %v630
    %v675 = vpack.c.b16 %v635, %v631
    %v676 = vpack.c.b16 %v636, %v632
    %v677 = vpack.c.b16 %v637, %v633
    %v678 = vpack.c.b16 %v642, %v638
    %v679 = vpack.c.b16 %v643, %v639
    %v680 = vpack.c.b16 %v644, %v640
    %v681 = vpack.c.b16 %v645, %v641
    %v682 = vpack.c.b16 %v650, %v646
    %v683 = vpack.c.b16 %v651, %v647
    %v684 = vpack.c.b16 %v652, %v648
    %v685 = vpack.c.b16 %v653, %v649
    %718 = vmatprep.subr.bf16.mxu0 %v655
    %719 = vmatpush1.bf16.msra.mxu0 %v654
    %720 = vmatprep.subr.bf16.mxu0 %v659
    %721 = vmatpush1.bf16.msra.mxu0 %v658
    %722 = vmatprep.subr.bf16.mxu0 %v663
    %723 = vmatpush1.bf16.msra.mxu0 %v662
    %724 = vmatprep.subr.bf16.mxu0 %v667
    %725 = vmatpush1.bf16.msra.mxu0 %v666
    %726 = vmatprep.subr.bf16.mxu0 %v671
    %727 = vmatpush1.bf16.msra.mxu0 %v670
    %728 = vmatprep.subr.bf16.mxu0 %v675
    %729 = vmatpush1.bf16.msra.mxu0 %v674
    %730 = vmatprep.subr.bf16.mxu0 %v679
    %731 = vmatpush1.bf16.msra.mxu0 %v678
    %732 = vmatprep.subr.bf16.mxu0 %v683
    %733 = vmatpush1.bf16.msra.mxu0 %v682
    %734 = vmatprep.subr.bf16.mxu0 0
    %735 = vmatpush1.bf16.msra.mxu0 0
    %736 = vmatprep.subr.bf16.mxu0 0
    %737 = vmatpush1.bf16.msra.mxu0 0
    %738 = vmatprep.subr.bf16.mxu0 0
    %739 = vmatpush1.bf16.msra.mxu0 0
    %740 = vmatprep.subr.bf16.mxu0 0
    %741 = vmatpush1.bf16.msra.mxu0 0
    %742 = vmatprep.subr.bf16.mxu0 0
    %743 = vmatpush1.bf16.msra.mxu0 0
    %744 = vmatprep.subr.bf16.mxu0 0
    %745 = vmatpush1.bf16.msra.mxu0 0
    %746 = vmatprep.subr.bf16.mxu0 0
    %747 = vmatpush1.bf16.msra.mxu0 0
    %748 = vmatprep.subr.bf16.mxu0 0
    %749 = vmatpush1.bf16.msra.mxu0 0
    %750 = vmatprep.mubr.bf16.mxu0 0
    %751 = vmatmul.mubr.bf16.gmra.mrb[0].mxu0 %v525
    %v752 = vpop.f32.mrb[0].mxu0
    %v753 = vadd.f32 0.0, %v752
    %v754 = vpop.f32.mrb[0].mxu0
    %v755 = vadd.f32 0.0, %v754
    %v756 = vpop.f32.mrb[0].mxu0
    %v757 = vpop.f32.mrb[0].mxu0
    %758 = vdwg.mxu0
    %759 = vmatprep.subr.bf16.mxu0 %v657
    %760 = vmatpush1.bf16.msra.mxu0 %v656
    %761 = vmatprep.subr.bf16.mxu0 %v661
    %762 = vmatpush1.bf16.msra.mxu0 %v660
    %763 = vmatprep.subr.bf16.mxu0 %v665
    %764 = vmatpush1.bf16.msra.mxu0 %v664
    %765 = vmatprep.subr.bf16.mxu0 %v669
    %766 = vmatpush1.bf16.msra.mxu0 %v668
    %767 = vmatprep.subr.bf16.mxu0 %v673
    %768 = vmatpush1.bf16.msra.mxu0 %v672
    %769 = vmatprep.subr.bf16.mxu0 %v677
    %770 = vmatpush1.bf16.msra.mxu0 %v676
    %771 = vmatprep.subr.bf16.mxu0 %v681
    %772 = vmatpush1.bf16.msra.mxu0 %v680
    %773 = vmatprep.subr.bf16.mxu0 %v685
    %774 = vmatpush1.bf16.msra.mxu0 %v684
    %775 = vmatprep.subr.bf16.mxu0 0
    %776 = vmatpush1.bf16.msra.mxu0 0
    %777 = vmatprep.subr.bf16.mxu0 0
    %778 = vmatpush1.bf16.msra.mxu0 0
    %779 = vmatprep.subr.bf16.mxu0 0
    %780 = vmatpush1.bf16.msra.mxu0 0
    %781 = vmatprep.subr.bf16.mxu0 0
    %782 = vmatpush1.bf16.msra.mxu0 0
    %783 = vmatprep.subr.bf16.mxu0 0
    %784 = vmatpush1.bf16.msra.mxu0 0
    %785 = vmatprep.subr.bf16.mxu0 0
    %786 = vmatpush1.bf16.msra.mxu0 0
    %787 = vmatprep.subr.bf16.mxu0 0
    %788 = vmatpush1.bf16.msra.mxu0 0
    %789 = vmatprep.subr.bf16.mxu0 0
    %790 = vmatpush1.bf16.msra.mxu0 0
    %791 = vmatprep.mubr.bf16.mxu0 0
    %792 = vmatmul.mubr.bf16.gmra.mrb[0].mxu0 %v525
    %v793 = vpop.f32.mrb[0].mxu0
    %v794 = vadd.f32 0.0, %v793
    %v795 = vpop.f32.mrb[0].mxu0
    %v796 = vadd.f32 0.0, %v795
    %v797 = vpop.f32.mrb[0].mxu0
    %v798 = vpop.f32.mrb[0].mxu0
    %799 = vdwg.mxu0
    %v800 = vadd.f32 %v521, %v753
    %v801 = vadd.f32 %v522, %v755
    %v802 = vadd.f32 %v523, %v794
    %v803 = vadd.f32 %v524, %v796
    %v804 = vxor.u32 %v800, 2147483648
    %v805 = vmul.f32 %v804, 1.442695
    %v806 = vpow.pop %v805
    %v807 = vadd.f32 %v806, 1.0
    %v808 = vrcp.pop %v807
    %v809 = vmul.f32 1.0, %v808
    %v810 = vxor.u32 %v801, 2147483648
    %v811 = vmul.f32 %v810, 1.442695
    %v812 = vpow.pop %v811
    %v813 = vadd.f32 %v812, 1.0
    %v814 = vrcp.pop %v813
    %v815 = vmul.f32 1.0, %v814
    %v816 = vtanh.pop %v802
    %v817 = vxor.u32 %v803, 2147483648
    %v818 = vmul.f32 %v817, 1.442695
    %v819 = vpow.pop %v818
    %v820 = vadd.f32 %v819, 1.0
    %v821 = vrcp.pop %v820
    %v822 = vmul.f32 1.0, %v821
    %v823 = vmul.f32 %v815, %v517
    %v824 = vmul.f32 %v809, %v816
    %v825 = vadd.f32 %v823, %v824
    %v826 = vtanh.pop %v825
    %v827 = vmul.f32 %v822, %v826
    %828 = vst [vmem:[#allocation5] sm:$0xff] %v827
    %s829 = smul.u32 1, 4
    %s830 = smul.addr %s829, 8
    %s831 = scalar_lea.vmem [#allocation4], %s830
    %v832 = vld [vmem:[%s831] sm:$0xff]
    %v833 = vld [vmem:[%s831 + $0x8] sm:$0xff]
    %v834 = vld [vmem:[%s831 + $0x10] sm:$0xff]
    %v835 = vld [vmem:[%s831 + $0x18] sm:$0xff]
    %v836 = vpack.c.bf16 %v827, %v827
    %v837 = vld [vmem:[#allocation14] sm:$0xff]
    %v838 = vld [vmem:[#allocation14 + $0x8] sm:$0xff]
    %v839 = vld [vmem:[#allocation14 + $0x10] sm:$0xff]
    %v840 = vld [vmem:[#allocation14 + $0x18] sm:$0xff]
    %v841 = vld [vmem:[#allocation14 + $0x20] sm:$0xff]
    %v842 = vld [vmem:[#allocation14 + $0x28] sm:$0xff]
    %v843 = vld [vmem:[#allocation14 + $0x30] sm:$0xff]
    %v844 = vld [vmem:[#allocation14 + $0x38] sm:$0xff]
    %v845 = vld [vmem:[#allocation14 + $0x40] sm:$0xff]
    %v846 = vld [vmem:[#allocation14 + $0x48] sm:$0xff]
    %v847 = vld [vmem:[#allocation14 + $0x50] sm:$0xff]
    %v848 = vld [vmem:[#allocation14 + $0x58] sm:$0xff]
    %v849 = vld [vmem:[#allocation14 + $0x60] sm:$0xff]
    %v850 = vld [vmem:[#allocation14 + $0x68] sm:$0xff]
    %v851 = vld [vmem:[#allocation14 + $0x70] sm:$0xff]
    %v852 = vld [vmem:[#allocation14 + $0x78] sm:$0xff]
    %v853 = vld [vmem:[#allocation14 + $0x80] sm:$0xff]
    %v854 = vld [vmem:[#allocation14 + $0x88] sm:$0xff]
    %v855 = vld [vmem:[#allocation14 + $0x90] sm:$0xff]
    %v856 = vld [vmem:[#allocation14 + $0x98] sm:$0xff]
    %v857 = vld [vmem:[#allocation14 + $0xa0] sm:$0xff]
    %v858 = vld [vmem:[#allocation14 + $0xa8] sm:$0xff]
    %v859 = vld [vmem:[#allocation14 + $0xb0] sm:$0xff]
    %v860 = vld [vmem:[#allocation14 + $0xb8] sm:$0xff]
    %v861 = vld [vmem:[#allocation14 + $0xc0] sm:$0xff]
    %v862 = vld [vmem:[#allocation14 + $0xc8] sm:$0xff]
    %v863 = vld [vmem:[#allocation14 + $0xd0] sm:$0xff]
    %v864 = vld [vmem:[#allocation14 + $0xd8] sm:$0xff]
    %v865 = vld [vmem:[#allocation14 + $0xe0] sm:$0xff]
    %v866 = vld [vmem:[#allocation14 + $0xe8] sm:$0xff]
    %v867 = vld [vmem:[#allocation14 + $0xf0] sm:$0xff]
    %v868 = vld [vmem:[#allocation14 + $0xf8] sm:$0xff]
    %v901 = vunpack.c.l.b16 %v837
    %v902 = vunpack.c.h.b16 %v837
    %v903 = vunpack.c.l.b16 %v838
    %v904 = vunpack.c.h.b16 %v838
    %v905 = vunpack.c.l.b16 %v839
    %v906 = vunpack.c.h.b16 %v839
    %v907 = vunpack.c.l.b16 %v840
    %v908 = vunpack.c.h.b16 %v840
    %v909 = vunpack.c.l.b16 %v841
    %v910 = vunpack.c.h.b16 %v841
    %v911 = vunpack.c.l.b16 %v842
    %v912 = vunpack.c.h.b16 %v842
    %v913 = vunpack.c.l.b16 %v843
    %v914 = vunpack.c.h.b16 %v843
    %v915 = vunpack.c.l.b16 %v844
    %v916 = vunpack.c.h.b16 %v844
    %v917 = vunpack.c.l.b16 %v845
    %v918 = vunpack.c.h.b16 %v845
    %v919 = vunpack.c.l.b16 %v846
    %v920 = vunpack.c.h.b16 %v846
    %v921 = vunpack.c.l.b16 %v847
    %v922 = vunpack.c.h.b16 %v847
    %v923 = vunpack.c.l.b16 %v848
    %v924 = vunpack.c.h.b16 %v848
    %v925 = vunpack.c.l.b16 %v849
    %v926 = vunpack.c.h.b16 %v849
    %v927 = vunpack.c.l.b16 %v850
    %v928 = vunpack.c.h.b16 %v850
    %v929 = vunpack.c.l.b16 %v851
    %v930 = vunpack.c.h.b16 %v851
    %v931 = vunpack.c.l.b16 %v852
    %v932 = vunpack.c.h.b16 %v852
    %v933 = vunpack.c.l.b16 %v853
    %v934 = vunpack.c.h.b16 %v853
    %v935 = vunpack.c.l.b16 %v854
    %v936 = vunpack.c.h.b16 %v854
    %v937 = vunpack.c.l.b16 %v855
    %v938 = vunpack.c.h.b16 %v855
    %v939 = vunpack.c.l.b16 %v856
    %v940 = vunpack.c.h.b16 %v856
    %v941 = vunpack.c.l.b16 %v857
    %v942 = vunpack.c.h.b16 %v857
    %v943 = vunpack.c.l.b16 %v858
    %v944 = vunpack.c.h.b16 %v858
    %v945 = vunpack.c.l.b16 %v859
    %v946 = vunpack.c.h.b16 %v859
    %v947 = vunpack.c.l.b16 %v860
    %v948 = vunpack.c.h.b16 %v860
    %v949 = vunpack.c.l.b16 %v861
    %v950 = vunpack.c.h.b16 %v861
    %v951 = vunpack.c.l.b16 %v862
    %v952 = vunpack.c.h.b16 %v862
    %v953 = vunpack.c.l.b16 %v863
    %v954 = vunpack.c.h.b16 %v863
    %v955 = vunpack.c.l.b16 %v864
    %v956 = vunpack.c.h.b16 %v864
    %v957 = vunpack.c.l.b16 %v865
    %v958 = vunpack.c.h.b16 %v865
    %v959 = vunpack.c.l.b16 %v866
    %v960 = vunpack.c.h.b16 %v866
    %v961 = vunpack.c.l.b16 %v867
    %v962 = vunpack.c.h.b16 %v867
    %v963 = vunpack.c.l.b16 %v868
    %v964 = vunpack.c.h.b16 %v868
    %v965 = vpack.c.b16 %v905, %v901
    %v966 = vpack.c.b16 %v906, %v902
    %v967 = vpack.c.b16 %v907, %v903
    %v968 = vpack.c.b16 %v908, %v904
    %v969 = vpack.c.b16 %v913, %v909
    %v970 = vpack.c.b16 %v914, %v910
    %v971 = vpack.c.b16 %v915, %v911
    %v972 = vpack.c.b16 %v916, %v912
    %v973 = vpack.c.b16 %v921, %v917
    %v974 = vpack.c.b16 %v922, %v918
    %v975 = vpack.c.b16 %v923, %v919
    %v976 = vpack.c.b16 %v924, %v920
    %v977 = vpack.c.b16 %v929, %v925
    %v978 = vpack.c.b16 %v930, %v926
    %v979 = vpack.c.b16 %v931, %v927
    %v980 = vpack.c.b16 %v932, %v928
    %v981 = vpack.c.b16 %v937, %v933
    %v982 = vpack.c.b16 %v938, %v934
    %v983 = vpack.c.b16 %v939, %v935
    %v984 = vpack.c.b16 %v940, %v936
    %v985 = vpack.c.b16 %v945, %v941
    %v986 = vpack.c.b16 %v946, %v942
    %v987 = vpack.c.b16 %v947, %v943
    %v988 = vpack.c.b16 %v948, %v944
    %v989 = vpack.c.b16 %v953, %v949
    %v990 = vpack.c.b16 %v954, %v950
    %v991 = vpack.c.b16 %v955, %v951
    %v992 = vpack.c.b16 %v956, %v952
    %v993 = vpack.c.b16 %v961, %v957
    %v994 = vpack.c.b16 %v962, %v958
    %v995 = vpack.c.b16 %v963, %v959
    %v996 = vpack.c.b16 %v964, %v960
    %1029 = vmatprep.subr.bf16.mxu0 %v966
    %1030 = vmatpush1.bf16.msra.mxu0 %v965
    %1031 = vmatprep.subr.bf16.mxu0 %v970
    %1032 = vmatpush1.bf16.msra.mxu0 %v969
    %1033 = vmatprep.subr.bf16.mxu0 %v974
    %1034 = vmatpush1.bf16.msra.mxu0 %v973
    %1035 = vmatprep.subr.bf16.mxu0 %v978
    %1036 = vmatpush1.bf16.msra.mxu0 %v977
    %1037 = vmatprep.subr.bf16.mxu0 %v982
    %1038 = vmatpush1.bf16.msra.mxu0 %v981
    %1039 = vmatprep.subr.bf16.mxu0 %v986
    %1040 = vmatpush1.bf16.msra.mxu0 %v985
    %1041 = vmatprep.subr.bf16.mxu0 %v990
    %1042 = vmatpush1.bf16.msra.mxu0 %v989
    %1043 = vmatprep.subr.bf16.mxu0 %v994
    %1044 = vmatpush1.bf16.msra.mxu0 %v993
    %1045 = vmatprep.subr.bf16.mxu0 0
    %1046 = vmatpush1.bf16.msra.mxu0 0
    %1047 = vmatprep.subr.bf16.mxu0 0
    %1048 = vmatpush1.bf16.msra.mxu0 0
    %1049 = vmatprep.subr.bf16.mxu0 0
    %1050 = vmatpush1.bf16.msra.mxu0 0
    %1051 = vmatprep.subr.bf16.mxu0 0
    %1052 = vmatpush1.bf16.msra.mxu0 0
    %1053 = vmatprep.subr.bf16.mxu0 0
    %1054 = vmatpush1.bf16.msra.mxu0 0
    %1055 = vmatprep.subr.bf16.mxu0 0
    %1056 = vmatpush1.bf16.msra.mxu0 0
    %1057 = vmatprep.subr.bf16.mxu0 0
    %1058 = vmatpush1.bf16.msra.mxu0 0
    %1059 = vmatprep.subr.bf16.mxu0 0
    %1060 = vmatpush1.bf16.msra.mxu0 0
    %1061 = vmatprep.mubr.bf16.mxu0 0
    %1062 = vmatmul.mubr.bf16.gmra.mrb[0].mxu0 %v836
    %v1063 = vpop.f32.mrb[0].mxu0
    %v1064 = vadd.f32 0.0, %v1063
    %v1065 = vpop.f32.mrb[0].mxu0
    %v1066 = vadd.f32 0.0, %v1065
    %v1067 = vpop.f32.mrb[0].mxu0
    %v1068 = vpop.f32.mrb[0].mxu0
    %1069 = vdwg.mxu0
    %1070 = vmatprep.subr.bf16.mxu0 %v968
    %1071 = vmatpush1.bf16.msra.mxu0 %v967
    %1072 = vmatprep.subr.bf16.mxu0 %v972
    %1073 = vmatpush1.bf16.msra.mxu0 %v971
    %1074 = vmatprep.subr.bf16.mxu0 %v976
    %1075 = vmatpush1.bf16.msra.mxu0 %v975
    %1076 = vmatprep.subr.bf16.mxu0 %v980
    %1077 = vmatpush1.bf16.msra.mxu0 %v979
    %1078 = vmatprep.subr.bf16.mxu0 %v984
    %1079 = vmatpush1.bf16.msra.mxu0 %v983
    %1080 = vmatprep.subr.bf16.mxu0 %v988
    %1081 = vmatpush1.bf16.msra.mxu0 %v987
    %1082 = vmatprep.subr.bf16.mxu0 %v992
    %1083 = vmatpush1.bf16.msra.mxu0 %v991
    %1084 = vmatprep.subr.bf16.mxu0 %v996
    %1085 = vmatpush1.bf16.msra.mxu0 %v995
    %1086 = vmatprep.subr.bf16.mxu0 0
    %1087 = vmatpush1.bf16.msra.mxu0 0
    %1088 = vmatprep.subr.bf16.mxu0 0
    %1089 = vmatpush1.bf16.msra.mxu0 0
    %1090 = vmatprep.subr.bf16.mxu0 0
    %1091 = vmatpush1.bf16.msra.mxu0 0
    %1092 = vmatprep.subr.bf16.mxu0 0
    %1093 = vmatpush1.bf16.msra.mxu0 0
    %1094 = vmatprep.subr.bf16.mxu0 0
    %1095 = vmatpush1.bf16.msra.mxu0 0
    %1096 = vmatprep.subr.bf16.mxu0 0
    %1097 = vmatpush1.bf16.msra.mxu0 0
    %1098 = vmatprep.subr.bf16.mxu0 0
    %1099 = vmatpush1.bf16.msra.mxu0 0
    %1100 = vmatprep.subr.bf16.mxu0 0
    %1101 = vmatpush1.bf16.msra.mxu0 0
    %1102 = vmatprep.mubr.bf16.mxu0 0
    %1103 = vmatmul.mubr.bf16.gmra.mrb[0].mxu0 %v836
    %v1104 = vpop.f32.mrb[0].mxu0
    %v1105 = vadd.f32 0.0, %v1104
    %v1106 = vpop.f32.mrb[0].mxu0
    %v1107 = vadd.f32 0.0, %v1106
    %v1108 = vpop.f32.mrb[0].mxu0
    %v1109 = vpop.f32.mrb[0].mxu0
    %1110 = vdwg.mxu0
    %v1111 = vadd.f32 %v832, %v1064
    %v1112 = vadd.f32 %v833, %v1066
    %v1113 = vadd.f32 %v834, %v1105
    %v1114 = vadd.f32 %v835, %v1107
    %v1115 = vxor.u32 %v1111, 2147483648
    %v1116 = vmul.f32 %v1115, 1.442695
    %v1117 = vpow.pop %v1116
    %v1118 = vadd.f32 %v1117, 1.0
    %v1119 = vrcp.pop %v1118
    %v1120 = vmul.f32 1.0, %v1119
    %v1121 = vxor.u32 %v1112, 2147483648
    %v1122 = vmul.f32 %v1121, 1.442695
    %v1123 = vpow.pop %v1122
    %v1124 = vadd.f32 %v1123, 1.0
    %v1125 = vrcp.pop %v1124
    %v1126 = vmul.f32 1.0, %v1125
    %v1127 = vtanh.pop %v1113
    %v1128 = vxor.u32 %v1114, 2147483648
    %v1129 = vmul.f32 %v1128, 1.442695
    %v1130 = vpow.pop %v1129
    %v1131 = vadd.f32 %v1130, 1.0
    %v1132 = vrcp.pop %v1131
    %v1133 = vmul.f32 1.0, %v1132
    %v1134 = vmul.f32 %v1126, %v825
    %v1135 = vmul.f32 %v1120, %v1127
    %v1136 = vadd.f32 %v1134, %v1135
    %v1137 = vtanh.pop %v1136
    %v1138 = vmul.f32 %v1133, %v1137
    %s1139 = scalar_lea.vmem [#allocation5], 8
    %1140 = vst [vmem:[%s1139] sm:$0xff] %v1138
    %s1141 = smul.u32 2, 4
    %s1142 = smul.addr %s1141, 8
    %s1143 = scalar_lea.vmem [#allocation4], %s1142
    %v1144 = vld [vmem:[%s1143] sm:$0xff]
    %v1145 = vld [vmem:[%s1143 + $0x8] sm:$0xff]
    %v1146 = vld [vmem:[%s1143 + $0x10] sm:$0xff]
    %v1147 = vld [vmem:[%s1143 + $0x18] sm:$0xff]
    %v1148 = vpack.c.bf16 %v1138, %v1138
    %v1149 = vld [vmem:[#allocation14] sm:$0xff]
    %v1150 = vld [vmem:[#allocation14 + $0x8] sm:$0xff]
    %v1151 = vld [vmem:[#allocation14 + $0x10] sm:$0xff]
    %v1152 = vld [vmem:[#allocation14 + $0x18] sm:$0xff]
    %v1153 = vld [vmem:[#allocation14 + $0x20] sm:$0xff]
    %v1154 = vld [vmem:[#allocation14 + $0x28] sm:$0xff]
    %v1155 = vld [vmem:[#allocation14 + $0x30] sm:$0xff]
    %v1156 = vld [vmem:[#allocation14 + $0x38] sm:$0xff]
    %v1157 = vld [vmem:[#allocation14 + $0x40] sm:$0xff]
    %v1158 = vld [vmem:[#allocation14 + $0x48] sm:$0xff]
    %v1159 = vld [vmem:[#allocation14 + $0x50] sm:$0xff]
    %v1160 = vld [vmem:[#allocation14 + $0x58] sm:$0xff]
    %v1161 = vld [vmem:[#allocation14 + $0x60] sm:$0xff]
    %v1162 = vld [vmem:[#allocation14 + $0x68] sm:$0xff]
    %v1163 = vld [vmem:[#allocation14 + $0x70] sm:$0xff]
    %v1164 = vld [vmem:[#allocation14 + $0x78] sm:$0xff]
    %v1165 = vld [vmem:[#allocation14 + $0x80] sm:$0xff]
    %v1166 = vld [vmem:[#allocation14 + $0x88] sm:$0xff]
    %v1167 = vld [vmem:[#allocation14 + $0x90] sm:$0xff]
    %v1168 = vld [vmem:[#allocation14 + $0x98] sm:$0xff]
    %v1169 = vld [vmem:[#allocation14 + $0xa0] sm:$0xff]
    %v1170 = vld [vmem:[#allocation14 + $0xa8] sm:$0xff]
    %v1171 = vld [vmem:[#allocation14 + $0xb0] sm:$0xff]
    %v1172 = vld [vmem:[#allocation14 + $0xb8] sm:$0xff]
    %v1173 = vld [vmem:[#allocation14 + $0xc0] sm:$0xff]
    %v1174 = vld [vmem:[#allocation14 + $0xc8] sm:$0xff]
    %v1175 = vld [vmem:[#allocation14 + $0xd0] sm:$0xff]
    %v1176 = vld [vmem:[#allocation14 + $0xd8] sm:$0xff]
    %v1177 = vld [vmem:[#allocation14 + $0xe0] sm:$0xff]
    %v1178 = vld [vmem:[#allocation14 + $0xe8] sm:$0xff]
    %v1179 = vld [vmem:[#allocation14 + $0xf0] sm:$0xff]
    %v1180 = vld [vmem:[#allocation14 + $0xf8] sm:$0xff]
    %v1213 = vunpack.c.l.b16 %v1149
    %v1214 = vunpack.c.h.b16 %v1149
    %v1215 = vunpack.c.l.b16 %v1150
    %v1216 = vunpack.c.h.b16 %v1150
    %v1217 = vunpack.c.l.b16 %v1151
    %v1218 = vunpack.c.h.b16 %v1151
    %v1219 = vunpack.c.l.b16 %v1152
    %v1220 = vunpack.c.h.b16 %v1152
    %v1221 = vunpack.c.l.b16 %v1153
    %v1222 = vunpack.c.h.b16 %v1153
    %v1223 = vunpack.c.l.b16 %v1154
    %v1224 = vunpack.c.h.b16 %v1154
    %v1225 = vunpack.c.l.b16 %v1155
    %v1226 = vunpack.c.h.b16 %v1155
    %v1227 = vunpack.c.l.b16 %v1156
    %v1228 = vunpack.c.h.b16 %v1156
    %v1229 = vunpack.c.l.b16 %v1157
    %v1230 = vunpack.c.h.b16 %v1157
    %v1231 = vunpack.c.l.b16 %v1158
    %v1232 = vunpack.c.h.b16 %v1158
    %v1233 = vunpack.c.l.b16 %v1159
    %v1234 = vunpack.c.h.b16 %v1159
    %v1235 = vunpack.c.l.b16 %v1160
    %v1236 = vunpack.c.h.b16 %v1160
    %v1237 = vunpack.c.l.b16 %v1161
    %v1238 = vunpack.c.h.b16 %v1161
    %v1239 = vunpack.c.l.b16 %v1162
    %v1240 = vunpack.c.h.b16 %v1162
    %v1241 = vunpack.c.l.b16 %v1163
    %v1242 = vunpack.c.h.b16 %v1163
    %v1243 = vunpack.c.l.b16 %v1164
    %v1244 = vunpack.c.h.b16 %v1164
    %v1245 = vunpack.c.l.b16 %v1165
    %v1246 = vunpack.c.h.b16 %v1165
    %v1247 = vunpack.c.l.b16 %v1166
    %v1248 = vunpack.c.h.b16 %v1166
    %v1249 = vunpack.c.l.b16 %v1167
    %v1250 = vunpack.c.h.b16 %v1167
    %v1251 = vunpack.c.l.b16 %v1168
    %v1252 = vunpack.c.h.b16 %v1168
    %v1253 = vunpack.c.l.b16 %v1169
    %v1254 = vunpack.c.h.b16 %v1169
    %v1255 = vunpack.c.l.b16 %v1170
    %v1256 = vunpack.c.h.b16 %v1170
    %v1257 = vunpack.c.l.b16 %v1171
    %v1258 = vunpack.c.h.b16 %v1171
    %v1259 = vunpack.c.l.b16 %v1172
    %v1260 = vunpack.c.h.b16 %v1172
    %v1261 = vunpack.c.l.b16 %v1173
    %v1262 = vunpack.c.h.b16 %v1173
    %v1263 = vunpack.c.l.b16 %v1174
    %v1264 = vunpack.c.h.b16 %v1174
    %v1265 = vunpack.c.l.b16 %v1175
    %v1266 = vunpack.c.h.b16 %v1175
    %v1267 = vunpack.c.l.b16 %v1176
    %v1268 = vunpack.c.h.b16 %v1176
    %v1269 = vunpack.c.l.b16 %v1177
    %v1270 = vunpack.c.h.b16 %v1177
    %v1271 = vunpack.c.l.b16 %v1178
    %v1272 = vunpack.c.h.b16 %v1178
    %v1273 = vunpack.c.l.b16 %v1179
    %v1274 = vunpack.c.h.b16 %v1179
    %v1275 = vunpack.c.l.b16 %v1180
    %v1276 = vunpack.c.h.b16 %v1180
    %v1277 = vpack.c.b16 %v1217, %v1213
    %v1278 = vpack.c.b16 %v1218, %v1214
    %v1279 = vpack.c.b16 %v1219, %v1215
    %v1280 = vpack.c.b16 %v1220, %v1216
    %v1281 = vpack.c.b16 %v1225, %v1221
    %v1282 = vpack.c.b16 %v1226, %v1222
    %v1283 = vpack.c.b16 %v1227, %v1223
    %v1284 = vpack.c.b16 %v1228, %v1224
    %v1285 = vpack.c.b16 %v1233, %v1229
    %v1286 = vpack.c.b16 %v1234, %v1230
    %v1287 = vpack.c.b16 %v1235, %v1231
    %v1288 = vpack.c.b16 %v1236, %v1232
    %v1289 = vpack.c.b16 %v1241, %v1237
    %v1290 = vpack.c.b16 %v1242, %v1238
    %v1291 = vpack.c.b16 %v1243, %v1239
    %v1292 = vpack.c.b16 %v1244, %v1240
    %v1293 = vpack.c.b16 %v1249, %v1245
    %v1294 = vpack.c.b16 %v1250, %v1246
    %v1295 = vpack.c.b16 %v1251, %v1247
    %v1296 = vpack.c.b16 %v1252, %v1248
    %v1297 = vpack.c.b16 %v1257, %v1253
    %v1298 = vpack.c.b16 %v1258, %v1254
    %v1299 = vpack.c.b16 %v1259, %v1255
    %v1300 = vpack.c.b16 %v1260, %v1256
    %v1301 = vpack.c.b16 %v1265, %v1261
    %v1302 = vpack.c.b16 %v1266, %v1262
    %v1303 = vpack.c.b16 %v1267, %v1263
    %v1304 = vpack.c.b16 %v1268, %v1264
    %v1305 = vpack.c.b16 %v1273, %v1269
    %v1306 = vpack.c.b16 %v1274, %v1270
    %v1307 = vpack.c.b16 %v1275, %v1271
    %v1308 = vpack.c.b16 %v1276, %v1272
    %1341 = vmatprep.subr.bf16.mxu0 %v1278
    %1342 = vmatpush1.bf16.msra.mxu0 %v1277
    %1343 = vmatprep.subr.bf16.mxu0 %v1282
    %1344 = vmatpush1.bf16.msra.mxu0 %v1281
    %1345 = vmatprep.subr.bf16.mxu0 %v1286
    %1346 = vmatpush1.bf16.msra.mxu0 %v1285
    %1347 = vmatprep.subr.bf16.mxu0 %v1290
    %1348 = vmatpush1.bf16.msra.mxu0 %v1289
    %1349 = vmatprep.subr.bf16.mxu0 %v1294
    %1350 = vmatpush1.bf16.msra.mxu0 %v1293
    %1351 = vmatprep.subr.bf16.mxu0 %v1298
    %1352 = vmatpush1.bf16.msra.mxu0 %v1297
    %1353 = vmatprep.subr.bf16.mxu0 %v1302
    %1354 = vmatpush1.bf16.msra.mxu0 %v1301
    %1355 = vmatprep.subr.bf16.mxu0 %v1306
    %1356 = vmatpush1.bf16.msra.mxu0 %v1305
    %1357 = vmatprep.subr.bf16.mxu0 0
    %1358 = vmatpush1.bf16.msra.mxu0 0
    %1359 = vmatprep.subr.bf16.mxu0 0
    %1360 = vmatpush1.bf16.msra.mxu0 0
    %1361 = vmatprep.subr.bf16.mxu0 0
    %1362 = vmatpush1.bf16.msra.mxu0 0
    %1363 = vmatprep.subr.bf16.mxu0 0
    %1364 = vmatpush1.bf16.msra.mxu0 0
    %1365 = vmatprep.subr.bf16.mxu0 0
    %1366 = vmatpush1.bf16.msra.mxu0 0
    %1367 = vmatprep.subr.bf16.mxu0 0
    %1368 = vmatpush1.bf16.msra.mxu0 0
    %1369 = vmatprep.subr.bf16.mxu0 0
    %1370 = vmatpush1.bf16.msra.mxu0 0
    %1371 = vmatprep.subr.bf16.mxu0 0
    %1372 = vmatpush1.bf16.msra.mxu0 0
    %1373 = vmatprep.mubr.bf16.mxu0 0
    %1374 = vmatmul.mubr.bf16.gmra.mrb[0].mxu0 %v1148
    %v1375 = vpop.f32.mrb[0].mxu0
    %v1376 = vadd.f32 0.0, %v1375
    %v1377 = vpop.f32.mrb[0].mxu0
    %v1378 = vadd.f32 0.0, %v1377
    %v1379 = vpop.f32.mrb[0].mxu0
    %v1380 = vpop.f32.mrb[0].mxu0
    %1381 = vdwg.mxu0
    %1382 = vmatprep.subr.bf16.mxu0 %v1280
    %1383 = vmatpush1.bf16.msra.mxu0 %v1279
    %1384 = vmatprep.subr.bf16.mxu0 %v1284
    %1385 = vmatpush1.bf16.msra.mxu0 %v1283
    %1386 = vmatprep.subr.bf16.mxu0 %v1288
    %1387 = vmatpush1.bf16.msra.mxu0 %v1287
    %1388 = vmatprep.subr.bf16.mxu0 %v1292
    %1389 = vmatpush1.bf16.msra.mxu0 %v1291
    %1390 = vmatprep.subr.bf16.mxu0 %v1296
    %1391 = vmatpush1.bf16.msra.mxu0 %v1295
    %1392 = vmatprep.subr.bf16.mxu0 %v1300
    %1393 = vmatpush1.bf16.msra.mxu0 %v1299
    %1394 = vmatprep.subr.bf16.mxu0 %v1304
    %1395 = vmatpush1.bf16.msra.mxu0 %v1303
    %1396 = vmatprep.subr.bf16.mxu0 %v1308
    %1397 = vmatpush1.bf16.msra.mxu0 %v1307
    %1398 = vmatprep.subr.bf16.mxu0 0
    %1399 = vmatpush1.bf16.msra.mxu0 0
    %1400 = vmatprep.subr.bf16.mxu0 0
    %1401 = vmatpush1.bf16.msra.mxu0 0
    %1402 = vmatprep.subr.bf16.mxu0 0
    %1403 = vmatpush1.bf16.msra.mxu0 0
    %1404 = vmatprep.subr.bf16.mxu0 0
    %1405 = vmatpush1.bf16.msra.mxu0 0
    %1406 = vmatprep.subr.bf16.mxu0 0
    %1407 = vmatpush1.bf16.msra.mxu0 0
    %1408 = vmatprep.subr.bf16.mxu0 0
    %1409 = vmatpush1.bf16.msra.mxu0 0
    %1410 = vmatprep.subr.bf16.mxu0 0
    %1411 = vmatpush1.bf16.msra.mxu0 0
    %1412 = vmatprep.subr.bf16.mxu0 0
    %1413 = vmatpush1.bf16.msra.mxu0 0
    %1414 = vmatprep.mubr.bf16.mxu0 0
    %1415 = vmatmul.mubr.bf16.gmra.mrb[0].mxu0 %v1148
    %v1416 = vpop.f32.mrb[0].mxu0
    %v1417 = vadd.f32 0.0, %v1416
    %v1418 = vpop.f32.mrb[0].mxu0
    %v1419 = vadd.f32 0.0, %v1418
    %v1420 = vpop.f32.mrb[0].mxu0
    %v1421 = vpop.f32.mrb[0].mxu0
    %1422 = vdwg.mxu0
    %v1423 = vadd.f32 %v1144, %v1376
    %v1424 = vadd.f32 %v1145, %v1378
    %v1425 = vadd.f32 %v1146, %v1417
    %v1426 = vadd.f32 %v1147, %v1419
    %v1427 = vxor.u32 %v1423, 2147483648
    %v1428 = vmul.f32 %v1427, 1.442695
    %v1429 = vpow.pop %v1428
    %v1430 = vadd.f32 %v1429, 1.0
    %v1431 = vrcp.pop %v1430
    %v1432 = vmul.f32 1.0, %v1431
    %v1433 = vxor.u32 %v1424, 2147483648
    %v1434 = vmul.f32 %v1433, 1.442695
    %v1435 = vpow.pop %v1434
    %v1436 = vadd.f32 %v1435, 1.0
    %v1437 = vrcp.pop %v1436
    %v1438 = vmul.f32 1.0, %v1437
    %v1439 = vtanh.pop %v1425
    %v1440 = vxor.u32 %v1426, 2147483648
    %v1441 = vmul.f32 %v1440, 1.442695
    %v1442 = vpow.pop %v1441
    %v1443 = vadd.f32 %v1442, 1.0
    %v1444 = vrcp.pop %v1443
    %v1445 = vmul.f32 1.0, %v1444
    %v1446 = vmul.f32 %v1438, %v1136
    %v1447 = vmul.f32 %v1432, %v1439
    %v1448 = vadd.f32 %v1446, %v1447
    %v1449 = vtanh.pop %v1448
    %v1450 = vmul.f32 %v1445, %v1449
    %s1451 = scalar_lea.vmem [#allocation5], 16
    %1452 = vst [vmem:[%s1451] sm:$0xff] %v1450
    %s1453 = smul.u32 3, 4
    %s1454 = smul.addr %s1453, 8
    %s1455 = scalar_lea.vmem [#allocation4], %s1454
    %v1456 = vld [vmem:[%s1455] sm:$0xff]
    %v1457 = vld [vmem:[%s1455 + $0x8] sm:$0xff]
    %v1458 = vld [vmem:[%s1455 + $0x10] sm:$0xff]
    %v1459 = vld [vmem:[%s1455 + $0x18] sm:$0xff]
    %v1460 = vpack.c.bf16 %v1450, %v1450
    %v1461 = vld [vmem:[#allocation14] sm:$0xff]
    %v1462 = vld [vmem:[#allocation14 + $0x8] sm:$0xff]
    %v1463 = vld [vmem:[#allocation14 + $0x10] sm:$0xff]
    %v1464 = vld [vmem:[#allocation14 + $0x18] sm:$0xff]
    %v1465 = vld [vmem:[#allocation14 + $0x20] sm:$0xff]
    %v1466 = vld [vmem:[#allocation14 + $0x28] sm:$0xff]
    %v1467 = vld [vmem:[#allocation14 + $0x30] sm:$0xff]
    %v1468 = vld [vmem:[#allocation14 + $0x38] sm:$0xff]
    %v1469 = vld [vmem:[#allocation14 + $0x40] sm:$0xff]
    %v1470 = vld [vmem:[#allocation14 + $0x48] sm:$0xff]
    %v1471 = vld [vmem:[#allocation14 + $0x50] sm:$0xff]
    %v1472 = vld [vmem:[#allocation14 + $0x58] sm:$0xff]
    %v1473 = vld [vmem:[#allocation14 + $0x60] sm:$0xff]
    %v1474 = vld [vmem:[#allocation14 + $0x68] sm:$0xff]
    %v1475 = vld [vmem:[#allocation14 + $0x70] sm:$0xff]
    %v1476 = vld [vmem:[#allocation14 + $0x78] sm:$0xff]
    %v1477 = vld [vmem:[#allocation14 + $0x80] sm:$0xff]
    %v1478 = vld [vmem:[#allocation14 + $0x88] sm:$0xff]
    %v1479 = vld [vmem:[#allocation14 + $0x90] sm:$0xff]
    %v1480 = vld [vmem:[#allocation14 + $0x98] sm:$0xff]
    %v1481 = vld [vmem:[#allocation14 + $0xa0] sm:$0xff]
    %v1482 = vld [vmem:[#allocation14 + $0xa8] sm:$0xff]
    %v1483 = vld [vmem:[#allocation14 + $0xb0] sm:$0xff]
    %v1484 = vld [vmem:[#allocation14 + $0xb8] sm:$0xff]
    %v1485 = vld [vmem:[#allocation14 + $0xc0] sm:$0xff]
    %v1486 = vld [vmem:[#allocation14 + $0xc8] sm:$0xff]
    %v1487 = vld [vmem:[#allocation14 + $0xd0] sm:$0xff]
    %v1488 = vld [vmem:[#allocation14 + $0xd8] sm:$0xff]
    %v1489 = vld [vmem:[#allocation14 + $0xe0] sm:$0xff]
    %v1490 = vld [vmem:[#allocation14 + $0xe8] sm:$0xff]
    %v1491 = vld [vmem:[#allocation14 + $0xf0] sm:$0xff]
    %v1492 = vld [vmem:[#allocation14 + $0xf8] sm:$0xff]
    %v1525 = vunpack.c.l.b16 %v1461
    %v1526 = vunpack.c.h.b16 %v1461
    %v1527 = vunpack.c.l.b16 %v1462
    %v1528 = vunpack.c.h.b16 %v1462
    %v1529 = vunpack.c.l.b16 %v1463
    %v1530 = vunpack.c.h.b16 %v1463
    %v1531 = vunpack.c.l.b16 %v1464
    %v1532 = vunpack.c.h.b16 %v1464
    %v1533 = vunpack.c.l.b16 %v1465
    %v1534 = vunpack.c.h.b16 %v1465
    %v1535 = vunpack.c.l.b16 %v1466
    %v1536 = vunpack.c.h.b16 %v1466
    %v1537 = vunpack.c.l.b16 %v1467
    %v1538 = vunpack.c.h.b16 %v1467
    %v1539 = vunpack.c.l.b16 %v1468
    %v1540 = vunpack.c.h.b16 %v1468
    %v1541 = vunpack.c.l.b16 %v1469
    %v1542 = vunpack.c.h.b16 %v1469
    %v1543 = vunpack.c.l.b16 %v1470
    %v1544 = vunpack.c.h.b16 %v1470
    %v1545 = vunpack.c.l.b16 %v1471
    %v1546 = vunpack.c.h.b16 %v1471
    %v1547 = vunpack.c.l.b16 %v1472
    %v1548 = vunpack.c.h.b16 %v1472
    %v1549 = vunpack.c.l.b16 %v1473
    %v1550 = vunpack.c.h.b16 %v1473
    %v1551 = vunpack.c.l.b16 %v1474
    %v1552 = vunpack.c.h.b16 %v1474
    %v1553 = vunpack.c.l.b16 %v1475
    %v1554 = vunpack.c.h.b16 %v1475
    %v1555 = vunpack.c.l.b16 %v1476
    %v1556 = vunpack.c.h.b16 %v1476
    %v1557 = vunpack.c.l.b16 %v1477
    %v1558 = vunpack.c.h.b16 %v1477
    %v1559 = vunpack.c.l.b16 %v1478
    %v1560 = vunpack.c.h.b16 %v1478
    %v1561 = vunpack.c.l.b16 %v1479
    %v1562 = vunpack.c.h.b16 %v1479
    %v1563 = vunpack.c.l.b16 %v1480
    %v1564 = vunpack.c.h.b16 %v1480
    %v1565 = vunpack.c.l.b16 %v1481
    %v1566 = vunpack.c.h.b16 %v1481
    %v1567 = vunpack.c.l.b16 %v1482
    %v1568 = vunpack.c.h.b16 %v1482
    %v1569 = vunpack.c.l.b16 %v1483
    %v1570 = vunpack.c.h.b16 %v1483
    %v1571 = vunpack.c.l.b16 %v1484
    %v1572 = vunpack.c.h.b16 %v1484
    %v1573 = vunpack.c.l.b16 %v1485
    %v1574 = vunpack.c.h.b16 %v1485
    %v1575 = vunpack.c.l.b16 %v1486
    %v1576 = vunpack.c.h.b16 %v1486
    %v1577 = vunpack.c.l.b16 %v1487
    %v1578 = vunpack.c.h.b16 %v1487
    %v1579 = vunpack.c.l.b16 %v1488
    %v1580 = vunpack.c.h.b16 %v1488
    %v1581 = vunpack.c.l.b16 %v1489
    %v1582 = vunpack.c.h.b16 %v1489
    %v1583 = vunpack.c.l.b16 %v1490
    %v1584 = vunpack.c.h.b16 %v1490
    %v1585 = vunpack.c.l.b16 %v1491
    %v1586 = vunpack.c.h.b16 %v1491
    %v1587 = vunpack.c.l.b16 %v1492
    %v1588 = vunpack.c.h.b16 %v1492
    %v1589 = vpack.c.b16 %v1529, %v1525
    %v1590 = vpack.c.b16 %v1530, %v1526
    %v1591 = vpack.c.b16 %v1531, %v1527
    %v1592 = vpack.c.b16 %v1532, %v1528
    %v1593 = vpack.c.b16 %v1537, %v1533
    %v1594 = vpack.c.b16 %v1538, %v1534
    %v1595 = vpack.c.b16 %v1539, %v1535
    %v1596 = vpack.c.b16 %v1540, %v1536
    %v1597 = vpack.c.b16 %v1545, %v1541
    %v1598 = vpack.c.b16 %v1546, %v1542
    %v1599 = vpack.c.b16 %v1547, %v1543
    %v1600 = vpack.c.b16 %v1548, %v1544
    %v1601 = vpack.c.b16 %v1553, %v1549
    %v1602 = vpack.c.b16 %v1554, %v1550
    %v1603 = vpack.c.b16 %v1555, %v1551
    %v1604 = vpack.c.b16 %v1556, %v1552
    %v1605 = vpack.c.b16 %v1561, %v1557
    %v1606 = vpack.c.b16 %v1562, %v1558
    %v1607 = vpack.c.b16 %v1563, %v1559
    %v1608 = vpack.c.b16 %v1564, %v1560
    %v1609 = vpack.c.b16 %v1569, %v1565
    %v1610 = vpack.c.b16 %v1570, %v1566
    %v1611 = vpack.c.b16 %v1571, %v1567
    %v1612 = vpack.c.b16 %v1572, %v1568
    %v1613 = vpack.c.b16 %v1577, %v1573
    %v1614 = vpack.c.b16 %v1578, %v1574
    %v1615 = vpack.c.b16 %v1579, %v1575
    %v1616 = vpack.c.b16 %v1580, %v1576
    %v1617 = vpack.c.b16 %v1585, %v1581
    %v1618 = vpack.c.b16 %v1586, %v1582
    %v1619 = vpack.c.b16 %v1587, %v1583
    %v1620 = vpack.c.b16 %v1588, %v1584
    %1653 = vmatprep.subr.bf16.mxu0 %v1590
    %1654 = vmatpush1.bf16.msra.mxu0 %v1589
    %1655 = vmatprep.subr.bf16.mxu0 %v1594
    %1656 = vmatpush1.bf16.msra.mxu0 %v1593
    %1657 = vmatprep.subr.bf16.mxu0 %v1598
    %1658 = vmatpush1.bf16.msra.mxu0 %v1597
    %1659 = vmatprep.subr.bf16.mxu0 %v1602
    %1660 = vmatpush1.bf16.msra.mxu0 %v1601
    %1661 = vmatprep.subr.bf16.mxu0 %v1606
    %1662 = vmatpush1.bf16.msra.mxu0 %v1605
    %1663 = vmatprep.subr.bf16.mxu0 %v1610
    %1664 = vmatpush1.bf16.msra.mxu0 %v1609
    %1665 = vmatprep.subr.bf16.mxu0 %v1614
    %1666 = vmatpush1.bf16.msra.mxu0 %v1613
    %1667 = vmatprep.subr.bf16.mxu0 %v1618
    %1668 = vmatpush1.bf16.msra.mxu0 %v1617
    %1669 = vmatprep.subr.bf16.mxu0 0
    %1670 = vmatpush1.bf16.msra.mxu0 0
    %1671 = vmatprep.subr.bf16.mxu0 0
    %1672 = vmatpush1.bf16.msra.mxu0 0
    %1673 = vmatprep.subr.bf16.mxu0 0
    %1674 = vmatpush1.bf16.msra.mxu0 0
    %1675 = vmatprep.subr.bf16.mxu0 0
    %1676 = vmatpush1.bf16.msra.mxu0 0
    %1677 = vmatprep.subr.bf16.mxu0 0
    %1678 = vmatpush1.bf16.msra.mxu0 0
    %1679 = vmatprep.subr.bf16.mxu0 0
    %1680 = vmatpush1.bf16.msra.mxu0 0
    %1681 = vmatprep.subr.bf16.mxu0 0
    %1682 = vmatpush1.bf16.msra.mxu0 0
    %1683 = vmatprep.subr.bf16.mxu0 0
    %1684 = vmatpush1.bf16.msra.mxu0 0
    %1685 = vmatprep.mubr.bf16.mxu0 0
    %1686 = vmatmul.mubr.bf16.gmra.mrb[0].mxu0 %v1460
    %v1687 = vpop.f32.mrb[0].mxu0
    %v1688 = vadd.f32 0.0, %v1687
    %v1689 = vpop.f32.mrb[0].mxu0
    %v1690 = vadd.f32 0.0, %v1689
    %v1691 = vpop.f32.mrb[0].mxu0
    %v1692 = vpop.f32.mrb[0].mxu0
    %1693 = vdwg.mxu0
    %1694 = vmatprep.subr.bf16.mxu0 %v1592
    %1695 = vmatpush1.bf16.msra.mxu0 %v1591
    %1696 = vmatprep.subr.bf16.mxu0 %v1596
    %1697 = vmatpush1.bf16.msra.mxu0 %v1595
    %1698 = vmatprep.subr.bf16.mxu0 %v1600
    %1699 = vmatpush1.bf16.msra.mxu0 %v1599
    %1700 = vmatprep.subr.bf16.mxu0 %v1604
    %1701 = vmatpush1.bf16.msra.mxu0 %v1603
    %1702 = vmatprep.subr.bf16.mxu0 %v1608
    %1703 = vmatpush1.bf16.msra.mxu0 %v1607
    %1704 = vmatprep.subr.bf16.mxu0 %v1612
    %1705 = vmatpush1.bf16.msra.mxu0 %v1611
    %1706 = vmatprep.subr.bf16.mxu0 %v1616
    %1707 = vmatpush1.bf16.msra.mxu0 %v1615
    %1708 = vmatprep.subr.bf16.mxu0 %v1620
    %1709 = vmatpush1.bf16.msra.mxu0 %v1619
    %1710 = vmatprep.subr.bf16.mxu0 0
    %1711 = vmatpush1.bf16.msra.mxu0 0
    %1712 = vmatprep.subr.bf16.mxu0 0
    %1713 = vmatpush1.bf16.msra.mxu0 0
    %1714 = vmatprep.subr.bf16.mxu0 0
    %1715 = vmatpush1.bf16.msra.mxu0 0
    %1716 = vmatprep.subr.bf16.mxu0 0
    %1717 = vmatpush1.bf16.msra.mxu0 0
    %1718 = vmatprep.subr.bf16.mxu0 0
    %1719 = vmatpush1.bf16.msra.mxu0 0
    %1720 = vmatprep.subr.bf16.mxu0 0
    %1721 = vmatpush1.bf16.msra.mxu0 0
    %1722 = vmatprep.subr.bf16.mxu0 0
    %1723 = vmatpush1.bf16.msra.mxu0 0
    %1724 = vmatprep.subr.bf16.mxu0 0
    %1725 = vmatpush1.bf16.msra.mxu0 0
    %1726 = vmatprep.mubr.bf16.mxu0 0
    %1727 = vmatmul.mubr.bf16.gmra.mrb[0].mxu0 %v1460
    %v1728 = vpop.f32.mrb[0].mxu0
    %v1729 = vadd.f32 0.0, %v1728
    %v1730 = vpop.f32.mrb[0].mxu0
    %v1731 = vadd.f32 0.0, %v1730
    %v1732 = vpop.f32.mrb[0].mxu0
    %v1733 = vpop.f32.mrb[0].mxu0
    %1734 = vdwg.mxu0
    %v1735 = vadd.f32 %v1456, %v1688
    %v1736 = vadd.f32 %v1457, %v1690
    %v1737 = vadd.f32 %v1458, %v1729
    %v1738 = vadd.f32 %v1459, %v1731
    %v1739 = vxor.u32 %v1735, 2147483648
    %v1740 = vmul.f32 %v1739, 1.442695
    %v1741 = vpow.pop %v1740
    %v1742 = vadd.f32 %v1741, 1.0
    %v1743 = vrcp.pop %v1742
    %v1744 = vmul.f32 1.0, %v1743
    %v1745 = vxor.u32 %v1736, 2147483648
    %v1746 = vmul.f32 %v1745, 1.442695
    %v1747 = vpow.pop %v1746
    %v1748 = vadd.f32 %v1747, 1.0
    %v1749 = vrcp.pop %v1748
    %v1750 = vmul.f32 1.0, %v1749
    %v1751 = vtanh.pop %v1737
    %v1752 = vxor.u32 %v1738, 2147483648
    %v1753 = vmul.f32 %v1752, 1.442695
    %v1754 = vpow.pop %v1753
    %v1755 = vadd.f32 %v1754, 1.0
    %v1756 = vrcp.pop %v1755
    %v1757 = vmul.f32 1.0, %v1756
    %v1758 = vmul.f32 %v1750, %v1448
    %v1759 = vmul.f32 %v1744, %v1751
    %v1760 = vadd.f32 %v1758, %v1759
    %v1761 = vtanh.pop %v1760
    %v1762 = vmul.f32 %v1757, %v1761
    %s1763 = scalar_lea.vmem [#allocation5], 24
    %1764 = vst [vmem:[%s1763] sm:$0xff] %v1762
    %s1765 = smul.u32 4, 4
    %s1766 = smul.addr %s1765, 8
    %s1767 = scalar_lea.vmem [#allocation4], %s1766
    %v1768 = vld [vmem:[%s1767] sm:$0xff]
    %v1769 = vld [vmem:[%s1767 + $0x8] sm:$0xff]
    %v1770 = vld [vmem:[%s1767 + $0x10] sm:$0xff]
    %v1771 = vld [vmem:[%s1767 + $0x18] sm:$0xff]
    %v1772 = vpack.c.bf16 %v1762, %v1762
    %v1773 = vld [vmem:[#allocation14] sm:$0xff]
    %v1774 = vld [vmem:[#allocation14 + $0x8] sm:$0xff]
    %v1775 = vld [vmem:[#allocation14 + $0x10] sm:$0xff]
    %v1776 = vld [vmem:[#allocation14 + $0x18] sm:$0xff]
    %v1777 = vld [vmem:[#allocation14 + $0x20] sm:$0xff]
    %v1778 = vld [vmem:[#allocation14 + $0x28] sm:$0xff]
    %v1779 = vld [vmem:[#allocation14 + $0x30] sm:$0xff]
    %v1780 = vld [vmem:[#allocation14 + $0x38] sm:$0xff]
    %v1781 = vld [vmem:[#allocation14 + $0x40] sm:$0xff]
    %v1782 = vld [vmem:[#allocation14 + $0x48] sm:$0xff]
    %v1783 = vld [vmem:[#allocation14 + $0x50] sm:$0xff]
    %v1784 = vld [vmem:[#allocation14 + $0x58] sm:$0xff]
    %v1785 = vld [vmem:[#allocation14 + $0x60] sm:$0xff]
    %v1786 = vld [vmem:[#allocation14 + $0x68] sm:$0xff]
    %v1787 = vld [vmem:[#allocation14 + $0x70] sm:$0xff]
    %v1788 = vld [vmem:[#allocation14 + $0x78] sm:$0xff]
    %v1789 = vld [vmem:[#allocation14 + $0x80] sm:$0xff]
    %v1790 = vld [vmem:[#allocation14 + $0x88] sm:$0xff]
    %v1791 = vld [vmem:[#allocation14 + $0x90] sm:$0xff]
    %v1792 = vld [vmem:[#allocation14 + $0x98] sm:$0xff]
    %v1793 = vld [vmem:[#allocation14 + $0xa0] sm:$0xff]
    %v1794 = vld [vmem:[#allocation14 + $0xa8] sm:$0xff]
    %v1795 = vld [vmem:[#allocation14 + $0xb0] sm:$0xff]
    %v1796 = vld [vmem:[#allocation14 + $0xb8] sm:$0xff]
    %v1797 = vld [vmem:[#allocation14 + $0xc0] sm:$0xff]
    %v1798 = vld [vmem:[#allocation14 + $0xc8] sm:$0xff]
    %v1799 = vld [vmem:[#allocation14 + $0xd0] sm:$0xff]
    %v1800 = vld [vmem:[#allocation14 + $0xd8] sm:$0xff]
    %v1801 = vld [vmem:[#allocation14 + $0xe0] sm:$0xff]
    %v1802 = vld [vmem:[#allocation14 + $0xe8] sm:$0xff]
    %v1803 = vld [vmem:[#allocation14 + $0xf0] sm:$0xff]
    %v1804 = vld [vmem:[#allocation14 + $0xf8] sm:$0xff]
    %v1837 = vunpack.c.l.b16 %v1773
    %v1838 = vunpack.c.h.b16 %v1773
    %v1839 = vunpack.c.l.b16 %v1774
    %v1840 = vunpack.c.h.b16 %v1774
    %v1841 = vunpack.c.l.b16 %v1775
    %v1842 = vunpack.c.h.b16 %v1775
    %v1843 = vunpack.c.l.b16 %v1776
    %v1844 = vunpack.c.h.b16 %v1776
    %v1845 = vunpack.c.l.b16 %v1777
    %v1846 = vunpack.c.h.b16 %v1777
    %v1847 = vunpack.c.l.b16 %v1778
    %v1848 = vunpack.c.h.b16 %v1778
    %v1849 = vunpack.c.l.b16 %v1779
    %v1850 = vunpack.c.h.b16 %v1779
    %v1851 = vunpack.c.l.b16 %v1780
    %v1852 = vunpack.c.h.b16 %v1780
    %v1853 = vunpack.c.l.b16 %v1781
    %v1854 = vunpack.c.h.b16 %v1781
    %v1855 = vunpack.c.l.b16 %v1782
    %v1856 = vunpack.c.h.b16 %v1782
    %v1857 = vunpack.c.l.b16 %v1783
    %v1858 = vunpack.c.h.b16 %v1783
    %v1859 = vunpack.c.l.b16 %v1784
    %v1860 = vunpack.c.h.b16 %v1784
    %v1861 = vunpack.c.l.b16 %v1785
    %v1862 = vunpack.c.h.b16 %v1785
    %v1863 = vunpack.c.l.b16 %v1786
    %v1864 = vunpack.c.h.b16 %v1786
    %v1865 = vunpack.c.l.b16 %v1787
    %v1866 = vunpack.c.h.b16 %v1787
    %v1867 = vunpack.c.l.b16 %v1788
    %v1868 = vunpack.c.h.b16 %v1788
    %v1869 = vunpack.c.l.b16 %v1789
    %v1870 = vunpack.c.h.b16 %v1789
    %v1871 = vunpack.c.l.b16 %v1790
    %v1872 = vunpack.c.h.b16 %v1790
    %v1873 = vunpack.c.l.b16 %v1791
    %v1874 = vunpack.c.h.b16 %v1791
    %v1875 = vunpack.c.l.b16 %v1792
    %v1876 = vunpack.c.h.b16 %v1792
    %v1877 = vunpack.c.l.b16 %v1793
    %v1878 = vunpack.c.h.b16 %v1793
    %v1879 = vunpack.c.l.b16 %v1794
    %v1880 = vunpack.c.h.b16 %v1794
    %v1881 = vunpack.c.l.b16 %v1795
    %v1882 = vunpack.c.h.b16 %v1795
    %v1883 = vunpack.c.l.b16 %v1796
    %v1884 = vunpack.c.h.b16 %v1796
    %v1885 = vunpack.c.l.b16 %v1797
    %v1886 = vunpack.c.h.b16 %v1797
    %v1887 = vunpack.c.l.b16 %v1798
    %v1888 = vunpack.c.h.b16 %v1798
    %v1889 = vunpack.c.l.b16 %v1799
    %v1890 = vunpack.c.h.b16 %v1799
    %v1891 = vunpack.c.l.b16 %v1800
    %v1892 = vunpack.c.h.b16 %v1800
    %v1893 = vunpack.c.l.b16 %v1801
    %v1894 = vunpack.c.h.b16 %v1801
    %v1895 = vunpack.c.l.b16 %v1802
    %v1896 = vunpack.c.h.b16 %v1802
    %v1897 = vunpack.c.l.b16 %v1803
    %v1898 = vunpack.c.h.b16 %v1803
    %v1899 = vunpack.c.l.b16 %v1804
    %v1900 = vunpack.c.h.b16 %v1804
    %v1901 = vpack.c.b16 %v1841, %v1837
    %v1902 = vpack.c.b16 %v1842, %v1838
    %v1903 = vpack.c.b16 %v1843, %v1839
    %v1904 = vpack.c.b16 %v1844, %v1840
    %v1905 = vpack.c.b16 %v1849, %v1845
    %v1906 = vpack.c.b16 %v1850, %v1846
    %v1907 = vpack.c.b16 %v1851, %v1847
    %v1908 = vpack.c.b16 %v1852, %v1848
    %v1909 = vpack.c.b16 %v1857, %v1853
    %v1910 = vpack.c.b16 %v1858, %v1854
    %v1911 = vpack.c.b16 %v1859, %v1855
    %v1912 = vpack.c.b16 %v1860, %v1856
    %v1913 = vpack.c.b16 %v1865, %v1861
    %v1914 = vpack.c.b16 %v1866, %v1862
    %v1915 = vpack.c.b16 %v1867, %v1863
    %v1916 = vpack.c.b16 %v1868, %v1864
    %v1917 = vpack.c.b16 %v1873, %v1869
    %v1918 = vpack.c.b16 %v1874, %v1870
    %v1919 = vpack.c.b16 %v1875, %v1871
    %v1920 = vpack.c.b16 %v1876, %v1872
    %v1921 = vpack.c.b16 %v1881, %v1877
    %v1922 = vpack.c.b16 %v1882, %v1878
    %v1923 = vpack.c.b16 %v1883, %v1879
    %v1924 = vpack.c.b16 %v1884, %v1880
    %v1925 = vpack.c.b16 %v1889, %v1885
    %v1926 = vpack.c.b16 %v1890, %v1886
    %v1927 = vpack.c.b16 %v1891, %v1887
    %v1928 = vpack.c.b16 %v1892, %v1888
    %v1929 = vpack.c.b16 %v1897, %v1893
    %v1930 = vpack.c.b16 %v1898, %v1894
    %v1931 = vpack.c.b16 %v1899, %v1895
    %v1932 = vpack.c.b16 %v1900, %v1896
    %1965 = vmatprep.subr.bf16.mxu0 %v1902
    %1966 = vmatpush1.bf16.msra.mxu0 %v1901
    %1967 = vmatprep.subr.bf16.mxu0 %v1906
    %1968 = vmatpush1.bf16.msra.mxu0 %v1905
    %1969 = vmatprep.subr.bf16.mxu0 %v1910
    %1970 = vmatpush1.bf16.msra.mxu0 %v1909
    %1971 = vmatprep.subr.bf16.mxu0 %v1914
    %1972 = vmatpush1.bf16.msra.mxu0 %v1913
    %1973 = vmatprep.subr.bf16.mxu0 %v1918
    %1974 = vmatpush1.bf16.msra.mxu0 %v1917
    %1975 = vmatprep.subr.bf16.mxu0 %v1922
    %1976 = vmatpush1.bf16.msra.mxu0 %v1921
    %1977 = vmatprep.subr.bf16.mxu0 %v1926
    %1978 = vmatpush1.bf16.msra.mxu0 %v1925
    %1979 = vmatprep.subr.bf16.mxu0 %v1930
    %1980 = vmatpush1.bf16.msra.mxu0 %v1929
    %1981 = vmatprep.subr.bf16.mxu0 0
    %1982 = vmatpush1.bf16.msra.mxu0 0
    %1983 = vmatprep.subr.bf16.mxu0 0
    %1984 = vmatpush1.bf16.msra.mxu0 0
    %1985 = vmatprep.subr.bf16.mxu0 0
    %1986 = vmatpush1.bf16.msra.mxu0 0
    %1987 = vmatprep.subr.bf16.mxu0 0
    %1988 = vmatpush1.bf16.msra.mxu0 0
    %1989 = vmatprep.subr.bf16.mxu0 0
    %1990 = vmatpush1.bf16.msra.mxu0 0
    %1991 = vmatprep.subr.bf16.mxu0 0
    %1992 = vmatpush1.bf16.msra.mxu0 0
    %1993 = vmatprep.subr.bf16.mxu0 0
    %1994 = vmatpush1.bf16.msra.mxu0 0
    %1995 = vmatprep.subr.bf16.mxu0 0
    %1996 = vmatpush1.bf16.msra.mxu0 0
    %1997 = vmatprep.mubr.bf16.mxu0 0
    %1998 = vmatmul.mubr.bf16.gmra.mrb[0].mxu0 %v1772
    %v1999 = vpop.f32.mrb[0].mxu0
    %v2000 = vadd.f32 0.0, %v1999
    %v2001 = vpop.f32.mrb[0].mxu0
    %v2002 = vadd.f32 0.0, %v2001
    %v2003 = vpop.f32.mrb[0].mxu0
    %v2004 = vpop.f32.mrb[0].mxu0
    %2005 = vdwg.mxu0
    %2006 = vmatprep.subr.bf16.mxu0 %v1904
    %2007 = vmatpush1.bf16.msra.mxu0 %v1903
    %2008 = vmatprep.subr.bf16.mxu0 %v1908
    %2009 = vmatpush1.bf16.msra.mxu0 %v1907
    %2010 = vmatprep.subr.bf16.mxu0 %v1912
    %2011 = vmatpush1.bf16.msra.mxu0 %v1911
    %2012 = vmatprep.subr.bf16.mxu0 %v1916
    %2013 = vmatpush1.bf16.msra.mxu0 %v1915
    %2014 = vmatprep.subr.bf16.mxu0 %v1920
    %2015 = vmatpush1.bf16.msra.mxu0 %v1919
    %2016 = vmatprep.subr.bf16.mxu0 %v1924
    %2017 = vmatpush1.bf16.msra.mxu0 %v1923
    %2018 = vmatprep.subr.bf16.mxu0 %v1928
    %2019 = vmatpush1.bf16.msra.mxu0 %v1927
    %2020 = vmatprep.subr.bf16.mxu0 %v1932
    %2021 = vmatpush1.bf16.msra.mxu0 %v1931
    %2022 = vmatprep.subr.bf16.mxu0 0
    %2023 = vmatpush1.bf16.msra.mxu0 0
    %2024 = vmatprep.subr.bf16.mxu0 0
    %2025 = vmatpush1.bf16.msra.mxu0 0
    %2026 = vmatprep.subr.bf16.mxu0 0
    %2027 = vmatpush1.bf16.msra.mxu0 0
    %2028 = vmatprep.subr.bf16.mxu0 0
    %2029 = vmatpush1.bf16.msra.mxu0 0
    %2030 = vmatprep.subr.bf16.mxu0 0
    %2031 = vmatpush1.bf16.msra.mxu0 0
    %2032 = vmatprep.subr.bf16.mxu0 0
    %2033 = vmatpush1.bf16.msra.mxu0 0
    %2034 = vmatprep.subr.bf16.mxu0 0
    %2035 = vmatpush1.bf16.msra.mxu0 0
    %2036 = vmatprep.subr.bf16.mxu0 0
    %2037 = vmatpush1.bf16.msra.mxu0 0
    %2038 = vmatprep.mubr.bf16.mxu0 0
    %2039 = vmatmul.mubr.bf16.gmra.mrb[0].mxu0 %v1772
    %v2040 = vpop.f32.mrb[0].mxu0
    %v2041 = vadd.f32 0.0, %v2040
    %v2042 = vpop.f32.mrb[0].mxu0
    %v2043 = vadd.f32 0.0, %v2042
    %v2044 = vpop.f32.mrb[0].mxu0
    %v2045 = vpop.f32.mrb[0].mxu0
    %2046 = vdwg.mxu0
    %v2047 = vadd.f32 %v1768, %v2000
    %v2048 = vadd.f32 %v1769, %v2002
    %v2049 = vadd.f32 %v1770, %v2041
    %v2050 = vadd.f32 %v1771, %v2043
    %v2051 = vxor.u32 %v2047, 2147483648
    %v2052 = vmul.f32 %v2051, 1.442695
    %v2053 = vpow.pop %v2052
    %v2054 = vadd.f32 %v2053, 1.0
    %v2055 = vrcp.pop %v2054
    %v2056 = vmul.f32 1.0, %v2055
    %v2057 = vxor.u32 %v2048, 2147483648
    %v2058 = vmul.f32 %v2057, 1.442695
    %v2059 = vpow.pop %v2058
    %v2060 = vadd.f32 %v2059, 1.0
    %v2061 = vrcp.pop %v2060
    %v2062 = vmul.f32 1.0, %v2061
    %v2063 = vtanh.pop %v2049
    %v2064 = vxor.u32 %v2050, 2147483648
    %v2065 = vmul.f32 %v2064, 1.442695
    %v2066 = vpow.pop %v2065
    %v2067 = vadd.f32 %v2066, 1.0
    %v2068 = vrcp.pop %v2067
    %v2069 = vmul.f32 1.0, %v2068
    %v2070 = vmul.f32 %v2062, %v1760
    %v2071 = vmul.f32 %v2056, %v2063
    %v2072 = vadd.f32 %v2070, %v2071
    %v2073 = vtanh.pop %v2072
    %v2074 = vmul.f32 %v2069, %v2073
    %s2075 = scalar_lea.vmem [#allocation5], 32
    %2076 = vst [vmem:[%s2075] sm:$0xff] %v2074
    %s2077 = smul.u32 5, 4
    %s2078 = smul.addr %s2077, 8
    %s2079 = scalar_lea.vmem [#allocation4], %s2078
    %v2080 = vld [vmem:[%s2079] sm:$0xff]
    %v2081 = vld [vmem:[%s2079 + $0x8] sm:$0xff]
    %v2082 = vld [vmem:[%s2079 + $0x10] sm:$0xff]
    %v2083 = vld [vmem:[%s2079 + $0x18] sm:$0xff]
    %v2084 = vpack.c.bf16 %v2074, %v2074
    %v2085 = vld [vmem:[#allocation14] sm:$0xff]
    %v2086 = vld [vmem:[#allocation14 + $0x8] sm:$0xff]
    %v2087 = vld [vmem:[#allocation14 + $0x10] sm:$0xff]
    %v2088 = vld [vmem:[#allocation14 + $0x18] sm:$0xff]
    %v2089 = vld [vmem:[#allocation14 + $0x20] sm:$0xff]
    %v2090 = vld [vmem:[#allocation14 + $0x28] sm:$0xff]
    %v2091 = vld [vmem:[#allocation14 + $0x30] sm:$0xff]
    %v2092 = vld [vmem:[#allocation14 + $0x38] sm:$0xff]
    %v2093 = vld [vmem:[#allocation14 + $0x40] sm:$0xff]
    %v2094 = vld [vmem:[#allocation14 + $0x48] sm:$0xff]
    %v2095 = vld [vmem:[#allocation14 + $0x50] sm:$0xff]
    %v2096 = vld [vmem:[#allocation14 + $0x58] sm:$0xff]
    %v2097 = vld [vmem:[#allocation14 + $0x60] sm:$0xff]
    %v2098 = vld [vmem:[#allocation14 + $0x68] sm:$0xff]
    %v2099 = vld [vmem:[#allocation14 + $0x70] sm:$0xff]
    %v2100 = vld [vmem:[#allocation14 + $0x78] sm:$0xff]
    %v2101 = vld [vmem:[#allocation14 + $0x80] sm:$0xff]
    %v2102 = vld [vmem:[#allocation14 + $0x88] sm:$0xff]
    %v2103 = vld [vmem:[#allocation14 + $0x90] sm:$0xff]
    %v2104 = vld [vmem:[#allocation14 + $0x98] sm:$0xff]
    %v2105 = vld [vmem:[#allocation14 + $0xa0] sm:$0xff]
    %v2106 = vld [vmem:[#allocation14 + $0xa8] sm:$0xff]
    %v2107 = vld [vmem:[#allocation14 + $0xb0] sm:$0xff]
    %v2108 = vld [vmem:[#allocation14 + $0xb8] sm:$0xff]
    %v2109 = vld [vmem:[#allocation14 + $0xc0] sm:$0xff]
    %v2110 = vld [vmem:[#allocation14 + $0xc8] sm:$0xff]
    %v2111 = vld [vmem:[#allocation14 + $0xd0] sm:$0xff]
    %v2112 = vld [vmem:[#allocation14 + $0xd8] sm:$0xff]
    %v2113 = vld [vmem:[#allocation14 + $0xe0] sm:$0xff]
    %v2114 = vld [vmem:[#allocation14 + $0xe8] sm:$0xff]
    %v2115 = vld [vmem:[#allocation14 + $0xf0] sm:$0xff]
    %v2116 = vld [vmem:[#allocation14 + $0xf8] sm:$0xff]
    %v2149 = vunpack.c.l.b16 %v2085
    %v2150 = vunpack.c.h.b16 %v2085
    %v2151 = vunpack.c.l.b16 %v2086
    %v2152 = vunpack.c.h.b16 %v2086
    %v2153 = vunpack.c.l.b16 %v2087
    %v2154 = vunpack.c.h.b16 %v2087
    %v2155 = vunpack.c.l.b16 %v2088
    %v2156 = vunpack.c.h.b16 %v2088
    %v2157 = vunpack.c.l.b16 %v2089
    %v2158 = vunpack.c.h.b16 %v2089
    %v2159 = vunpack.c.l.b16 %v2090
    %v2160 = vunpack.c.h.b16 %v2090
    %v2161 = vunpack.c.l.b16 %v2091
    %v2162 = vunpack.c.h.b16 %v2091
    %v2163 = vunpack.c.l.b16 %v2092
    %v2164 = vunpack.c.h.b16 %v2092
    %v2165 = vunpack.c.l.b16 %v2093
    %v2166 = vunpack.c.h.b16 %v2093
    %v2167 = vunpack.c.l.b16 %v2094
    %v2168 = vunpack.c.h.b16 %v2094
    %v2169 = vunpack.c.l.b16 %v2095
    %v2170 = vunpack.c.h.b16 %v2095
    %v2171 = vunpack.c.l.b16 %v2096
    %v2172 = vunpack.c.h.b16 %v2096
    %v2173 = vunpack.c.l.b16 %v2097
    %v2174 = vunpack.c.h.b16 %v2097
    %v2175 = vunpack.c.l.b16 %v2098
    %v2176 = vunpack.c.h.b16 %v2098
    %v2177 = vunpack.c.l.b16 %v2099
    %v2178 = vunpack.c.h.b16 %v2099
    %v2179 = vunpack.c.l.b16 %v2100
    %v2180 = vunpack.c.h.b16 %v2100
    %v2181 = vunpack.c.l.b16 %v2101
    %v2182 = vunpack.c.h.b16 %v2101
    %v2183 = vunpack.c.l.b16 %v2102
    %v2184 = vunpack.c.h.b16 %v2102
    %v2185 = vunpack.c.l.b16 %v2103
    %v2186 = vunpack.c.h.b16 %v2103
    %v2187 = vunpack.c.l.b16 %v2104
    %v2188 = vunpack.c.h.b16 %v2104
    %v2189 = vunpack.c.l.b16 %v2105
    %v2190 = vunpack.c.h.b16 %v2105
    %v2191 = vunpack.c.l.b16 %v2106
    %v2192 = vunpack.c.h.b16 %v2106
    %v2193 = vunpack.c.l.b16 %v2107
    %v2194 = vunpack.c.h.b16 %v2107
    %v2195 = vunpack.c.l.b16 %v2108
    %v2196 = vunpack.c.h.b16 %v2108
    %v2197 = vunpack.c.l.b16 %v2109
    %v2198 = vunpack.c.h.b16 %v2109
    %v2199 = vunpack.c.l.b16 %v2110
    %v2200 = vunpack.c.h.b16 %v2110
    %v2201 = vunpack.c.l.b16 %v2111
    %v2202 = vunpack.c.h.b16 %v2111
    %v2203 = vunpack.c.l.b16 %v2112
    %v2204 = vunpack.c.h.b16 %v2112
    %v2205 = vunpack.c.l.b16 %v2113
    %v2206 = vunpack.c.h.b16 %v2113
    %v2207 = vunpack.c.l.b16 %v2114
    %v2208 = vunpack.c.h.b16 %v2114
    %v2209 = vunpack.c.l.b16 %v2115
    %v2210 = vunpack.c.h.b16 %v2115
    %v2211 = vunpack.c.l.b16 %v2116
    %v2212 = vunpack.c.h.b16 %v2116
    %v2213 = vpack.c.b16 %v2153, %v2149
    %v2214 = vpack.c.b16 %v2154, %v2150
    %v2215 = vpack.c.b16 %v2155, %v2151
    %v2216 = vpack.c.b16 %v2156, %v2152
    %v2217 = vpack.c.b16 %v2161, %v2157
    %v2218 = vpack.c.b16 %v2162, %v2158
    %v2219 = vpack.c.b16 %v2163, %v2159
    %v2220 = vpack.c.b16 %v2164, %v2160
    %v2221 = vpack.c.b16 %v2169, %v2165
    %v2222 = vpack.c.b16 %v2170, %v2166
    %v2223 = vpack.c.b16 %v2171, %v2167
    %v2224 = vpack.c.b16 %v2172, %v2168
    %v2225 = vpack.c.b16 %v2177, %v2173
    %v2226 = vpack.c.b16 %v2178, %v2174
    %v2227 = vpack.c.b16 %v2179, %v2175
    %v2228 = vpack.c.b16 %v2180, %v2176
    %v2229 = vpack.c.b16 %v2185, %v2181
    %v2230 = vpack.c.b16 %v2186, %v2182
    %v2231 = vpack.c.b16 %v2187, %v2183
    %v2232 = vpack.c.b16 %v2188, %v2184
    %v2233 = vpack.c.b16 %v2193, %v2189
    %v2234 = vpack.c.b16 %v2194, %v2190
    %v2235 = vpack.c.b16 %v2195, %v2191
    %v2236 = vpack.c.b16 %v2196, %v2192
    %v2237 = vpack.c.b16 %v2201, %v2197
    %v2238 = vpack.c.b16 %v2202, %v2198
    %v2239 = vpack.c.b16 %v2203, %v2199
    %v2240 = vpack.c.b16 %v2204, %v2200
    %v2241 = vpack.c.b16 %v2209, %v2205
    %v2242 = vpack.c.b16 %v2210, %v2206
    %v2243 = vpack.c.b16 %v2211, %v2207
    %v2244 = vpack.c.b16 %v2212, %v2208
    %2277 = vmatprep.subr.bf16.mxu0 %v2214
    %2278 = vmatpush1.bf16.msra.mxu0 %v2213
    %2279 = vmatprep.subr.bf16.mxu0 %v2218
    %2280 = vmatpush1.bf16.msra.mxu0 %v2217
    %2281 = vmatprep.subr.bf16.mxu0 %v2222
    %2282 = vmatpush1.bf16.msra.mxu0 %v2221
    %2283 = vmatprep.subr.bf16.mxu0 %v2226
    %2284 = vmatpush1.bf16.msra.mxu0 %v2225
    %2285 = vmatprep.subr.bf16.mxu0 %v2230
    %2286 = vmatpush1.bf16.msra.mxu0 %v2229
    %2287 = vmatprep.subr.bf16.mxu0 %v2234
    %2288 = vmatpush1.bf16.msra.mxu0 %v2233
    %2289 = vmatprep.subr.bf16.mxu0 %v2238
    %2290 = vmatpush1.bf16.msra.mxu0 %v2237
    %2291 = vmatprep.subr.bf16.mxu0 %v2242
    %2292 = vmatpush1.bf16.msra.mxu0 %v2241
    %2293 = vmatprep.subr.bf16.mxu0 0
    %2294 = vmatpush1.bf16.msra.mxu0 0
    %2295 = vmatprep.subr.bf16.mxu0 0
    %2296 = vmatpush1.bf16.msra.mxu0 0
    %2297 = vmatprep.subr.bf16.mxu0 0
    %2298 = vmatpush1.bf16.msra.mxu0 0
    %2299 = vmatprep.subr.bf16.mxu0 0
    %2300 = vmatpush1.bf16.msra.mxu0 0
    %2301 = vmatprep.subr.bf16.mxu0 0
    %2302 = vmatpush1.bf16.msra.mxu0 0
    %2303 = vmatprep.subr.bf16.mxu0 0
    %2304 = vmatpush1.bf16.msra.mxu0 0
    %2305 = vmatprep.subr.bf16.mxu0 0
    %2306 = vmatpush1.bf16.msra.mxu0 0
    %2307 = vmatprep.subr.bf16.mxu0 0
    %2308 = vmatpush1.bf16.msra.mxu0 0
    %2309 = vmatprep.mubr.bf16.mxu0 0
    %2310 = vmatmul.mubr.bf16.gmra.mrb[0].mxu0 %v2084
    %v2311 = vpop.f32.mrb[0].mxu0
    %v2312 = vadd.f32 0.0, %v2311
    %v2313 = vpop.f32.mrb[0].mxu0
    %v2314 = vadd.f32 0.0, %v2313
    %v2315 = vpop.f32.mrb[0].mxu0
    %v2316 = vpop.f32.mrb[0].mxu0
    %2317 = vdwg.mxu0
    %2318 = vmatprep.subr.bf16.mxu0 %v2216
    %2319 = vmatpush1.bf16.msra.mxu0 %v2215
    %2320 = vmatprep.subr.bf16.mxu0 %v2220
    %2321 = vmatpush1.bf16.msra.mxu0 %v2219
    %2322 = vmatprep.subr.bf16.mxu0 %v2224
    %2323 = vmatpush1.bf16.msra.mxu0 %v2223
    %2324 = vmatprep.subr.bf16.mxu0 %v2228
    %2325 = vmatpush1.bf16.msra.mxu0 %v2227
    %2326 = vmatprep.subr.bf16.mxu0 %v2232
    %2327 = vmatpush1.bf16.msra.mxu0 %v2231
    %2328 = vmatprep.subr.bf16.mxu0 %v2236
    %2329 = vmatpush1.bf16.msra.mxu0 %v2235
    %2330 = vmatprep.subr.bf16.mxu0 %v2240
    %2331 = vmatpush1.bf16.msra.mxu0 %v2239
    %2332 = vmatprep.subr.bf16.mxu0 %v2244
    %2333 = vmatpush1.bf16.msra.mxu0 %v2243
    %2334 = vmatprep.subr.bf16.mxu0 0
    %2335 = vmatpush1.bf16.msra.mxu0 0
    %2336 = vmatprep.subr.bf16.mxu0 0
    %2337 = vmatpush1.bf16.msra.mxu0 0
    %2338 = vmatprep.subr.bf16.mxu0 0
    %2339 = vmatpush1.bf16.msra.mxu0 0
    %2340 = vmatprep.subr.bf16.mxu0 0
    %2341 = vmatpush1.bf16.msra.mxu0 0
    %2342 = vmatprep.subr.bf16.mxu0 0
    %2343 = vmatpush1.bf16.msra.mxu0 0
    %2344 = vmatprep.subr.bf16.mxu0 0
    %2345 = vmatpush1.bf16.msra.mxu0 0
    %2346 = vmatprep.subr.bf16.mxu0 0
    %2347 = vmatpush1.bf16.msra.mxu0 0
    %2348 = vmatprep.subr.bf16.mxu0 0
    %2349 = vmatpush1.bf16.msra.mxu0 0
    %2350 = vmatprep.mubr.bf16.mxu0 0
    %2351 = vmatmul.mubr.bf16.gmra.mrb[0].mxu0 %v2084
    %v2352 = vpop.f32.mrb[0].mxu0
    %v2353 = vadd.f32 0.0, %v2352
    %v2354 = vpop.f32.mrb[0].mxu0
    %v2355 = vadd.f32 0.0, %v2354
    %v2356 = vpop.f32.mrb[0].mxu0
    %v2357 = vpop.f32.mrb[0].mxu0
    %2358 = vdwg.mxu0
    %v2359 = vadd.f32 %v2080, %v2312
    %v2360 = vadd.f32 %v2081, %v2314
    %v2361 = vadd.f32 %v2082, %v2353
    %v2362 = vadd.f32 %v2083, %v2355
    %v2363 = vxor.u32 %v2359, 2147483648
    %v2364 = vmul.f32 %v2363, 1.442695
    %v2365 = vpow.pop %v2364
    %v2366 = vadd.f32 %v2365, 1.0
    %v2367 = vrcp.pop %v2366
    %v2368 = vmul.f32 1.0, %v2367
    %v2369 = vxor.u32 %v2360, 2147483648
    %v2370 = vmul.f32 %v2369, 1.442695
    %v2371 = vpow.pop %v2370
    %v2372 = vadd.f32 %v2371, 1.0
    %v2373 = vrcp.pop %v2372
    %v2374 = vmul.f32 1.0, %v2373
    %v2375 = vtanh.pop %v2361
    %v2376 = vxor.u32 %v2362, 2147483648
    %v2377 = vmul.f32 %v2376, 1.442695
    %v2378 = vpow.pop %v2377
    %v2379 = vadd.f32 %v2378, 1.0
    %v2380 = vrcp.pop %v2379
    %v2381 = vmul.f32 1.0, %v2380
    %v2382 = vmul.f32 %v2374, %v2072
    %v2383 = vmul.f32 %v2368, %v2375
    %v2384 = vadd.f32 %v2382, %v2383
    %v2385 = vtanh.pop %v2384
    %v2386 = vmul.f32 %v2381, %v2385
    %s2387 = scalar_lea.vmem [#allocation5], 40
    %2388 = vst [vmem:[%s2387] sm:$0xff] %v2386
    %s2389 = smul.u32 6, 4
    %s2390 = smul.addr %s2389, 8
    %s2391 = scalar_lea.vmem [#allocation4], %s2390
    %v2392 = vld [vmem:[%s2391] sm:$0xff]
    %v2393 = vld [vmem:[%s2391 + $0x8] sm:$0xff]
    %v2394 = vld [vmem:[%s2391 + $0x10] sm:$0xff]
    %v2395 = vld [vmem:[%s2391 + $0x18] sm:$0xff]
    %v2396 = vpack.c.bf16 %v2386, %v2386
    %v2397 = vld [vmem:[#allocation14] sm:$0xff]
    %v2398 = vld [vmem:[#allocation14 + $0x8] sm:$0xff]
    %v2399 = vld [vmem:[#allocation14 + $0x10] sm:$0xff]
    %v2400 = vld [vmem:[#allocation14 + $0x18] sm:$0xff]
    %v2401 = vld [vmem:[#allocation14 + $0x20] sm:$0xff]
    %v2402 = vld [vmem:[#allocation14 + $0x28] sm:$0xff]
    %v2403 = vld [vmem:[#allocation14 + $0x30] sm:$0xff]
    %v2404 = vld [vmem:[#allocation14 + $0x38] sm:$0xff]
    %v2405 = vld [vmem:[#allocation14 + $0x40] sm:$0xff]
    %v2406 = vld [vmem:[#allocation14 + $0x48] sm:$0xff]
    %v2407 = vld [vmem:[#allocation14 + $0x50] sm:$0xff]
    %v2408 = vld [vmem:[#allocation14 + $0x58] sm:$0xff]
    %v2409 = vld [vmem:[#allocation14 + $0x60] sm:$0xff]
    %v2410 = vld [vmem:[#allocation14 + $0x68] sm:$0xff]
    %v2411 = vld [vmem:[#allocation14 + $0x70] sm:$0xff]
    %v2412 = vld [vmem:[#allocation14 + $0x78] sm:$0xff]
    %v2413 = vld [vmem:[#allocation14 + $0x80] sm:$0xff]
    %v2414 = vld [vmem:[#allocation14 + $0x88] sm:$0xff]
    %v2415 = vld [vmem:[#allocation14 + $0x90] sm:$0xff]
    %v2416 = vld [vmem:[#allocation14 + $0x98] sm:$0xff]
    %v2417 = vld [vmem:[#allocation14 + $0xa0] sm:$0xff]
    %v2418 = vld [vmem:[#allocation14 + $0xa8] sm:$0xff]
    %v2419 = vld [vmem:[#allocation14 + $0xb0] sm:$0xff]
    %v2420 = vld [vmem:[#allocation14 + $0xb8] sm:$0xff]
    %v2421 = vld [vmem:[#allocation14 + $0xc0] sm:$0xff]
    %v2422 = vld [vmem:[#allocation14 + $0xc8] sm:$0xff]
    %v2423 = vld [vmem:[#allocation14 + $0xd0] sm:$0xff]
    %v2424 = vld [vmem:[#allocation14 + $0xd8] sm:$0xff]
    %v2425 = vld [vmem:[#allocation14 + $0xe0] sm:$0xff]
    %v2426 = vld [vmem:[#allocation14 + $0xe8] sm:$0xff]
    %v2427 = vld [vmem:[#allocation14 + $0xf0] sm:$0xff]
    %v2428 = vld [vmem:[#allocation14 + $0xf8] sm:$0xff]
    %v2461 = vunpack.c.l.b16 %v2397
    %v2462 = vunpack.c.h.b16 %v2397
    %v2463 = vunpack.c.l.b16 %v2398
    %v2464 = vunpack.c.h.b16 %v2398
    %v2465 = vunpack.c.l.b16 %v2399
    %v2466 = vunpack.c.h.b16 %v2399
    %v2467 = vunpack.c.l.b16 %v2400
    %v2468 = vunpack.c.h.b16 %v2400
    %v2469 = vunpack.c.l.b16 %v2401
    %v2470 = vunpack.c.h.b16 %v2401
    %v2471 = vunpack.c.l.b16 %v2402
    %v2472 = vunpack.c.h.b16 %v2402
    %v2473 = vunpack.c.l.b16 %v2403
    %v2474 = vunpack.c.h.b16 %v2403
    %v2475 = vunpack.c.l.b16 %v2404
    %v2476 = vunpack.c.h.b16 %v2404
    %v2477 = vunpack.c.l.b16 %v2405
    %v2478 = vunpack.c.h.b16 %v2405
    %v2479 = vunpack.c.l.b16 %v2406
    %v2480 = vunpack.c.h.b16 %v2406
    %v2481 = vunpack.c.l.b16 %v2407
    %v2482 = vunpack.c.h.b16 %v2407
    %v2483 = vunpack.c.l.b16 %v2408
    %v2484 = vunpack.c.h.b16 %v2408
    %v2485 = vunpack.c.l.b16 %v2409
    %v2486 = vunpack.c.h.b16 %v2409
    %v2487 = vunpack.c.l.b16 %v2410
    %v2488 = vunpack.c.h.b16 %v2410
    %v2489 = vunpack.c.l.b16 %v2411
    %v2490 = vunpack.c.h.b16 %v2411
    %v2491 = vunpack.c.l.b16 %v2412
    %v2492 = vunpack.c.h.b16 %v2412
    %v2493 = vunpack.c.l.b16 %v2413
    %v2494 = vunpack.c.h.b16 %v2413
    %v2495 = vunpack.c.l.b16 %v2414
    %v2496 = vunpack.c.h.b16 %v2414
    %v2497 = vunpack.c.l.b16 %v2415
    %v2498 = vunpack.c.h.b16 %v2415
    %v2499 = vunpack.c.l.b16 %v2416
    %v2500 = vunpack.c.h.b16 %v2416
    %v2501 = vunpack.c.l.b16 %v2417
    %v2502 = vunpack.c.h.b16 %v2417
    %v2503 = vunpack.c.l.b16 %v2418
    %v2504 = vunpack.c.h.b16 %v2418
    %v2505 = vunpack.c.l.b16 %v2419
    %v2506 = vunpack.c.h.b16 %v2419
    %v2507 = vunpack.c.l.b16 %v2420
    %v2508 = vunpack.c.h.b16 %v2420
    %v2509 = vunpack.c.l.b16 %v2421
    %v2510 = vunpack.c.h.b16 %v2421
    %v2511 = vunpack.c.l.b16 %v2422
    %v2512 = vunpack.c.h.b16 %v2422
    %v2513 = vunpack.c.l.b16 %v2423
    %v2514 = vunpack.c.h.b16 %v2423
    %v2515 = vunpack.c.l.b16 %v2424
    %v2516 = vunpack.c.h.b16 %v2424
    %v2517 = vunpack.c.l.b16 %v2425
    %v2518 = vunpack.c.h.b16 %v2425
    %v2519 = vunpack.c.l.b16 %v2426
    %v2520 = vunpack.c.h.b16 %v2426
    %v2521 = vunpack.c.l.b16 %v2427
    %v2522 = vunpack.c.h.b16 %v2427
    %v2523 = vunpack.c.l.b16 %v2428
    %v2524 = vunpack.c.h.b16 %v2428
    %v2525 = vpack.c.b16 %v2465, %v2461
    %v2526 = vpack.c.b16 %v2466, %v2462
    %v2527 = vpack.c.b16 %v2467, %v2463
    %v2528 = vpack.c.b16 %v2468, %v2464
    %v2529 = vpack.c.b16 %v2473, %v2469
    %v2530 = vpack.c.b16 %v2474, %v2470
    %v2531 = vpack.c.b16 %v2475, %v2471
    %v2532 = vpack.c.b16 %v2476, %v2472
    %v2533 = vpack.c.b16 %v2481, %v2477
    %v2534 = vpack.c.b16 %v2482, %v2478
    %v2535 = vpack.c.b16 %v2483, %v2479
    %v2536 = vpack.c.b16 %v2484, %v2480
    %v2537 = vpack.c.b16 %v2489, %v2485
    %v2538 = vpack.c.b16 %v2490, %v2486
    %v2539 = vpack.c.b16 %v2491, %v2487
    %v2540 = vpack.c.b16 %v2492, %v2488
    %v2541 = vpack.c.b16 %v2497, %v2493
    %v2542 = vpack.c.b16 %v2498, %v2494
    %v2543 = vpack.c.b16 %v2499, %v2495
    %v2544 = vpack.c.b16 %v2500, %v2496
    %v2545 = vpack.c.b16 %v2505, %v2501
    %v2546 = vpack.c.b16 %v2506, %v2502
    %v2547 = vpack.c.b16 %v2507, %v2503
    %v2548 = vpack.c.b16 %v2508, %v2504
    %v2549 = vpack.c.b16 %v2513, %v2509
    %v2550 = vpack.c.b16 %v2514, %v2510
    %v2551 = vpack.c.b16 %v2515, %v2511
    %v2552 = vpack.c.b16 %v2516, %v2512
    %v2553 = vpack.c.b16 %v2521, %v2517
    %v2554 = vpack.c.b16 %v2522, %v2518
    %v2555 = vpack.c.b16 %v2523, %v2519
    %v2556 = vpack.c.b16 %v2524, %v2520
    %2589 = vmatprep.subr.bf16.mxu0 %v2526
    %2590 = vmatpush1.bf16.msra.mxu0 %v2525
    %2591 = vmatprep.subr.bf16.mxu0 %v2530
    %2592 = vmatpush1.bf16.msra.mxu0 %v2529
    %2593 = vmatprep.subr.bf16.mxu0 %v2534
    %2594 = vmatpush1.bf16.msra.mxu0 %v2533
    %2595 = vmatprep.subr.bf16.mxu0 %v2538
    %2596 = vmatpush1.bf16.msra.mxu0 %v2537
    %2597 = vmatprep.subr.bf16.mxu0 %v2542
    %2598 = vmatpush1.bf16.msra.mxu0 %v2541
    %2599 = vmatprep.subr.bf16.mxu0 %v2546
    %2600 = vmatpush1.bf16.msra.mxu0 %v2545
    %2601 = vmatprep.subr.bf16.mxu0 %v2550
    %2602 = vmatpush1.bf16.msra.mxu0 %v2549
    %2603 = vmatprep.subr.bf16.mxu0 %v2554
    %2604 = vmatpush1.bf16.msra.mxu0 %v2553
    %2605 = vmatprep.subr.bf16.mxu0 0
    %2606 = vmatpush1.bf16.msra.mxu0 0
    %2607 = vmatprep.subr.bf16.mxu0 0
    %2608 = vmatpush1.bf16.msra.mxu0 0
    %2609 = vmatprep.subr.bf16.mxu0 0
    %2610 = vmatpush1.bf16.msra.mxu0 0
    %2611 = vmatprep.subr.bf16.mxu0 0
    %2612 = vmatpush1.bf16.msra.mxu0 0
    %2613 = vmatprep.subr.bf16.mxu0 0
    %2614 = vmatpush1.bf16.msra.mxu0 0
    %2615 = vmatprep.subr.bf16.mxu0 0
    %2616 = vmatpush1.bf16.msra.mxu0 0
    %2617 = vmatprep.subr.bf16.mxu0 0
    %2618 = vmatpush1.bf16.msra.mxu0 0
    %2619 = vmatprep.subr.bf16.mxu0 0
    %2620 = vmatpush1.bf16.msra.mxu0 0
    %2621 = vmatprep.mubr.bf16.mxu0 0
    %2622 = vmatmul.mubr.bf16.gmra.mrb[0].mxu0 %v2396
    %v2623 = vpop.f32.mrb[0].mxu0
    %v2624 = vadd.f32 0.0, %v2623
    %v2625 = vpop.f32.mrb[0].mxu0
    %v2626 = vadd.f32 0.0, %v2625
    %v2627 = vpop.f32.mrb[0].mxu0
    %v2628 = vpop.f32.mrb[0].mxu0
    %2629 = vdwg.mxu0
    %2630 = vmatprep.subr.bf16.mxu0 %v2528
    %2631 = vmatpush1.bf16.msra.mxu0 %v2527
    %2632 = vmatprep.subr.bf16.mxu0 %v2532
    %2633 = vmatpush1.bf16.msra.mxu0 %v2531
    %2634 = vmatprep.subr.bf16.mxu0 %v2536
    %2635 = vmatpush1.bf16.msra.mxu0 %v2535
    %2636 = vmatprep.subr.bf16.mxu0 %v2540
    %2637 = vmatpush1.bf16.msra.mxu0 %v2539
    %2638 = vmatprep.subr.bf16.mxu0 %v2544
    %2639 = vmatpush1.bf16.msra.mxu0 %v2543
    %2640 = vmatprep.subr.bf16.mxu0 %v2548
    %2641 = vmatpush1.bf16.msra.mxu0 %v2547
    %2642 = vmatprep.subr.bf16.mxu0 %v2552
    %2643 = vmatpush1.bf16.msra.mxu0 %v2551
    %2644 = vmatprep.subr.bf16.mxu0 %v2556
    %2645 = vmatpush1.bf16.msra.mxu0 %v2555
    %2646 = vmatprep.subr.bf16.mxu0 0
    %2647 = vmatpush1.bf16.msra.mxu0 0
    %2648 = vmatprep.subr.bf16.mxu0 0
    %2649 = vmatpush1.bf16.msra.mxu0 0
    %2650 = vmatprep.subr.bf16.mxu0 0
    %2651 = vmatpush1.bf16.msra.mxu0 0
    %2652 = vmatprep.subr.bf16.mxu0 0
    %2653 = vmatpush1.bf16.msra.mxu0 0
    %2654 = vmatprep.subr.bf16.mxu0 0
    %2655 = vmatpush1.bf16.msra.mxu0 0
    %2656 = vmatprep.subr.bf16.mxu0 0
    %2657 = vmatpush1.bf16.msra.mxu0 0
    %2658 = vmatprep.subr.bf16.mxu0 0
    %2659 = vmatpush1.bf16.msra.mxu0 0
    %2660 = vmatprep.subr.bf16.mxu0 0
    %2661 = vmatpush1.bf16.msra.mxu0 0
    %2662 = vmatprep.mubr.bf16.mxu0 0
    %2663 = vmatmul.mubr.bf16.gmra.mrb[0].mxu0 %v2396
    %v2664 = vpop.f32.mrb[0].mxu0
    %v2665 = vadd.f32 0.0, %v2664
    %v2666 = vpop.f32.mrb[0].mxu0
    %v2667 = vadd.f32 0.0, %v2666
    %v2668 = vpop.f32.mrb[0].mxu0
    %v2669 = vpop.f32.mrb[0].mxu0
    %2670 = vdwg.mxu0
    %v2671 = vadd.f32 %v2392, %v2624
    %v2672 = vadd.f32 %v2393, %v2626
    %v2673 = vadd.f32 %v2394, %v2665
    %v2674 = vadd.f32 %v2395, %v2667
    %v2675 = vxor.u32 %v2671, 2147483648
    %v2676 = vmul.f32 %v2675, 1.442695
    %v2677 = vpow.pop %v2676
    %v2678 = vadd.f32 %v2677, 1.0
    %v2679 = vrcp.pop %v2678
    %v2680 = vmul.f32 1.0, %v2679
    %v2681 = vxor.u32 %v2672, 2147483648
    %v2682 = vmul.f32 %v2681, 1.442695
    %v2683 = vpow.pop %v2682
    %v2684 = vadd.f32 %v2683, 1.0
    %v2685 = vrcp.pop %v2684
    %v2686 = vmul.f32 1.0, %v2685
    %v2687 = vtanh.pop %v2673
    %v2688 = vxor.u32 %v2674, 2147483648
    %v2689 = vmul.f32 %v2688, 1.442695
    %v2690 = vpow.pop %v2689
    %v2691 = vadd.f32 %v2690, 1.0
    %v2692 = vrcp.pop %v2691
    %v2693 = vmul.f32 1.0, %v2692
    %v2694 = vmul.f32 %v2686, %v2384
    %v2695 = vmul.f32 %v2680, %v2687
    %v2696 = vadd.f32 %v2694, %v2695
    %v2697 = vtanh.pop %v2696
    %v2698 = vmul.f32 %v2693, %v2697
    %s2699 = scalar_lea.vmem [#allocation5], 48
    %2700 = vst [vmem:[%s2699] sm:$0xff] %v2698
    %s2701 = smul.u32 7, 4
    %s2702 = smul.addr %s2701, 8
    %s2703 = scalar_lea.vmem [#allocation4], %s2702
    %v2704 = vld [vmem:[%s2703] sm:$0xff]
    %v2705 = vld [vmem:[%s2703 + $0x8] sm:$0xff]
    %v2706 = vld [vmem:[%s2703 + $0x10] sm:$0xff]
    %v2707 = vld [vmem:[%s2703 + $0x18] sm:$0xff]
    %v2708 = vpack.c.bf16 %v2698, %v2698
    %v2709 = vld [vmem:[#allocation14] sm:$0xff]
    %v2710 = vld [vmem:[#allocation14 + $0x8] sm:$0xff]
    %v2711 = vld [vmem:[#allocation14 + $0x10] sm:$0xff]
    %v2712 = vld [vmem:[#allocation14 + $0x18] sm:$0xff]
    %v2713 = vld [vmem:[#allocation14 + $0x20] sm:$0xff]
    %v2714 = vld [vmem:[#allocation14 + $0x28] sm:$0xff]
    %v2715 = vld [vmem:[#allocation14 + $0x30] sm:$0xff]
    %v2716 = vld [vmem:[#allocation14 + $0x38] sm:$0xff]
    %v2717 = vld [vmem:[#allocation14 + $0x40] sm:$0xff]
    %v2718 = vld [vmem:[#allocation14 + $0x48] sm:$0xff]
    %v2719 = vld [vmem:[#allocation14 + $0x50] sm:$0xff]
    %v2720 = vld [vmem:[#allocation14 + $0x58] sm:$0xff]
    %v2721 = vld [vmem:[#allocation14 + $0x60] sm:$0xff]
    %v2722 = vld [vmem:[#allocation14 + $0x68] sm:$0xff]
    %v2723 = vld [vmem:[#allocation14 + $0x70] sm:$0xff]
    %v2724 = vld [vmem:[#allocation14 + $0x78] sm:$0xff]
    %v2725 = vld [vmem:[#allocation14 + $0x80] sm:$0xff]
    %v2726 = vld [vmem:[#allocation14 + $0x88] sm:$0xff]
    %v2727 = vld [vmem:[#allocation14 + $0x90] sm:$0xff]
    %v2728 = vld [vmem:[#allocation14 + $0x98] sm:$0xff]
    %v2729 = vld [vmem:[#allocation14 + $0xa0] sm:$0xff]
    %v2730 = vld [vmem:[#allocation14 + $0xa8] sm:$0xff]
    %v2731 = vld [vmem:[#allocation14 + $0xb0] sm:$0xff]
    %v2732 = vld [vmem:[#allocation14 + $0xb8] sm:$0xff]
    %v2733 = vld [vmem:[#allocation14 + $0xc0] sm:$0xff]
    %v2734 = vld [vmem:[#allocation14 + $0xc8] sm:$0xff]
    %v2735 = vld [vmem:[#allocation14 + $0xd0] sm:$0xff]
    %v2736 = vld [vmem:[#allocation14 + $0xd8] sm:$0xff]
    %v2737 = vld [vmem:[#allocation14 + $0xe0] sm:$0xff]
    %v2738 = vld [vmem:[#allocation14 + $0xe8] sm:$0xff]
    %v2739 = vld [vmem:[#allocation14 + $0xf0] sm:$0xff]
    %v2740 = vld [vmem:[#allocation14 + $0xf8] sm:$0xff]
    %v2773 = vunpack.c.l.b16 %v2709
    %v2774 = vunpack.c.h.b16 %v2709
    %v2775 = vunpack.c.l.b16 %v2710
    %v2776 = vunpack.c.h.b16 %v2710
    %v2777 = vunpack.c.l.b16 %v2711
    %v2778 = vunpack.c.h.b16 %v2711
    %v2779 = vunpack.c.l.b16 %v2712
    %v2780 = vunpack.c.h.b16 %v2712
    %v2781 = vunpack.c.l.b16 %v2713
    %v2782 = vunpack.c.h.b16 %v2713
    %v2783 = vunpack.c.l.b16 %v2714
    %v2784 = vunpack.c.h.b16 %v2714
    %v2785 = vunpack.c.l.b16 %v2715
    %v2786 = vunpack.c.h.b16 %v2715
    %v2787 = vunpack.c.l.b16 %v2716
    %v2788 = vunpack.c.h.b16 %v2716
    %v2789 = vunpack.c.l.b16 %v2717
    %v2790 = vunpack.c.h.b16 %v2717
    %v2791 = vunpack.c.l.b16 %v2718
    %v2792 = vunpack.c.h.b16 %v2718
    %v2793 = vunpack.c.l.b16 %v2719
    %v2794 = vunpack.c.h.b16 %v2719
    %v2795 = vunpack.c.l.b16 %v2720
    %v2796 = vunpack.c.h.b16 %v2720
    %v2797 = vunpack.c.l.b16 %v2721
    %v2798 = vunpack.c.h.b16 %v2721
    %v2799 = vunpack.c.l.b16 %v2722
    %v2800 = vunpack.c.h.b16 %v2722
    %v2801 = vunpack.c.l.b16 %v2723
    %v2802 = vunpack.c.h.b16 %v2723
    %v2803 = vunpack.c.l.b16 %v2724
    %v2804 = vunpack.c.h.b16 %v2724
    %v2805 = vunpack.c.l.b16 %v2725
    %v2806 = vunpack.c.h.b16 %v2725
    %v2807 = vunpack.c.l.b16 %v2726
    %v2808 = vunpack.c.h.b16 %v2726
    %v2809 = vunpack.c.l.b16 %v2727
    %v2810 = vunpack.c.h.b16 %v2727
    %v2811 = vunpack.c.l.b16 %v2728
    %v2812 = vunpack.c.h.b16 %v2728
    %v2813 = vunpack.c.l.b16 %v2729
    %v2814 = vunpack.c.h.b16 %v2729
    %v2815 = vunpack.c.l.b16 %v2730
    %v2816 = vunpack.c.h.b16 %v2730
    %v2817 = vunpack.c.l.b16 %v2731
    %v2818 = vunpack.c.h.b16 %v2731
    %v2819 = vunpack.c.l.b16 %v2732
    %v2820 = vunpack.c.h.b16 %v2732
    %v2821 = vunpack.c.l.b16 %v2733
    %v2822 = vunpack.c.h.b16 %v2733
    %v2823 = vunpack.c.l.b16 %v2734
    %v2824 = vunpack.c.h.b16 %v2734
    %v2825 = vunpack.c.l.b16 %v2735
    %v2826 = vunpack.c.h.b16 %v2735
    %v2827 = vunpack.c.l.b16 %v2736
    %v2828 = vunpack.c.h.b16 %v2736
    %v2829 = vunpack.c.l.b16 %v2737
    %v2830 = vunpack.c.h.b16 %v2737
    %v2831 = vunpack.c.l.b16 %v2738
    %v2832 = vunpack.c.h.b16 %v2738
    %v2833 = vunpack.c.l.b16 %v2739
    %v2834 = vunpack.c.h.b16 %v2739
    %v2835 = vunpack.c.l.b16 %v2740
    %v2836 = vunpack.c.h.b16 %v2740
    %v2837 = vpack.c.b16 %v2777, %v2773
    %v2838 = vpack.c.b16 %v2778, %v2774
    %v2839 = vpack.c.b16 %v2779, %v2775
    %v2840 = vpack.c.b16 %v2780, %v2776
    %v2841 = vpack.c.b16 %v2785, %v2781
    %v2842 = vpack.c.b16 %v2786, %v2782
    %v2843 = vpack.c.b16 %v2787, %v2783
    %v2844 = vpack.c.b16 %v2788, %v2784
    %v2845 = vpack.c.b16 %v2793, %v2789
    %v2846 = vpack.c.b16 %v2794, %v2790
    %v2847 = vpack.c.b16 %v2795, %v2791
    %v2848 = vpack.c.b16 %v2796, %v2792
    %v2849 = vpack.c.b16 %v2801, %v2797
    %v2850 = vpack.c.b16 %v2802, %v2798
    %v2851 = vpack.c.b16 %v2803, %v2799
    %v2852 = vpack.c.b16 %v2804, %v2800
    %v2853 = vpack.c.b16 %v2809, %v2805
    %v2854 = vpack.c.b16 %v2810, %v2806
    %v2855 = vpack.c.b16 %v2811, %v2807
    %v2856 = vpack.c.b16 %v2812, %v2808
    %v2857 = vpack.c.b16 %v2817, %v2813
    %v2858 = vpack.c.b16 %v2818, %v2814
    %v2859 = vpack.c.b16 %v2819, %v2815
    %v2860 = vpack.c.b16 %v2820, %v2816
    %v2861 = vpack.c.b16 %v2825, %v2821
    %v2862 = vpack.c.b16 %v2826, %v2822
    %v2863 = vpack.c.b16 %v2827, %v2823
    %v2864 = vpack.c.b16 %v2828, %v2824
    %v2865 = vpack.c.b16 %v2833, %v2829
    %v2866 = vpack.c.b16 %v2834, %v2830
    %v2867 = vpack.c.b16 %v2835, %v2831
    %v2868 = vpack.c.b16 %v2836, %v2832
    %2901 = vmatprep.subr.bf16.mxu0 %v2838
    %2902 = vmatpush1.bf16.msra.mxu0 %v2837
    %2903 = vmatprep.subr.bf16.mxu0 %v2842
    %2904 = vmatpush1.bf16.msra.mxu0 %v2841
    %2905 = vmatprep.subr.bf16.mxu0 %v2846
    %2906 = vmatpush1.bf16.msra.mxu0 %v2845
    %2907 = vmatprep.subr.bf16.mxu0 %v2850
    %2908 = vmatpush1.bf16.msra.mxu0 %v2849
    %2909 = vmatprep.subr.bf16.mxu0 %v2854
    %2910 = vmatpush1.bf16.msra.mxu0 %v2853
    %2911 = vmatprep.subr.bf16.mxu0 %v2858
    %2912 = vmatpush1.bf16.msra.mxu0 %v2857
    %2913 = vmatprep.subr.bf16.mxu0 %v2862
    %2914 = vmatpush1.bf16.msra.mxu0 %v2861
    %2915 = vmatprep.subr.bf16.mxu0 %v2866
    %2916 = vmatpush1.bf16.msra.mxu0 %v2865
    %2917 = vmatprep.subr.bf16.mxu0 0
    %2918 = vmatpush1.bf16.msra.mxu0 0
    %2919 = vmatprep.subr.bf16.mxu0 0
    %2920 = vmatpush1.bf16.msra.mxu0 0
    %2921 = vmatprep.subr.bf16.mxu0 0
    %2922 = vmatpush1.bf16.msra.mxu0 0
    %2923 = vmatprep.subr.bf16.mxu0 0
    %2924 = vmatpush1.bf16.msra.mxu0 0
    %2925 = vmatprep.subr.bf16.mxu0 0
    %2926 = vmatpush1.bf16.msra.mxu0 0
    %2927 = vmatprep.subr.bf16.mxu0 0
    %2928 = vmatpush1.bf16.msra.mxu0 0
    %2929 = vmatprep.subr.bf16.mxu0 0
    %2930 = vmatpush1.bf16.msra.mxu0 0
    %2931 = vmatprep.subr.bf16.mxu0 0
    %2932 = vmatpush1.bf16.msra.mxu0 0
    %2933 = vmatprep.mubr.bf16.mxu0 0
    %2934 = vmatmul.mubr.bf16.gmra.mrb[0].mxu0 %v2708
    %v2935 = vpop.f32.mrb[0].mxu0
    %v2936 = vadd.f32 0.0, %v2935
    %v2937 = vpop.f32.mrb[0].mxu0
    %v2938 = vadd.f32 0.0, %v2937
    %v2939 = vpop.f32.mrb[0].mxu0
    %v2940 = vpop.f32.mrb[0].mxu0
    %2941 = vdwg.mxu0
    %2942 = vmatprep.subr.bf16.mxu0 %v2840
    %2943 = vmatpush1.bf16.msra.mxu0 %v2839
    %2944 = vmatprep.subr.bf16.mxu0 %v2844
    %2945 = vmatpush1.bf16.msra.mxu0 %v2843
    %2946 = vmatprep.subr.bf16.mxu0 %v2848
    %2947 = vmatpush1.bf16.msra.mxu0 %v2847
    %2948 = vmatprep.subr.bf16.mxu0 %v2852
    %2949 = vmatpush1.bf16.msra.mxu0 %v2851
    %2950 = vmatprep.subr.bf16.mxu0 %v2856
    %2951 = vmatpush1.bf16.msra.mxu0 %v2855
    %2952 = vmatprep.subr.bf16.mxu0 %v2860
    %2953 = vmatpush1.bf16.msra.mxu0 %v2859
    %2954 = vmatprep.subr.bf16.mxu0 %v2864
    %2955 = vmatpush1.bf16.msra.mxu0 %v2863
    %2956 = vmatprep.subr.bf16.mxu0 %v2868
    %2957 = vmatpush1.bf16.msra.mxu0 %v2867
    %2958 = vmatprep.subr.bf16.mxu0 0
    %2959 = vmatpush1.bf16.msra.mxu0 0
    %2960 = vmatprep.subr.bf16.mxu0 0
    %2961 = vmatpush1.bf16.msra.mxu0 0
    %2962 = vmatprep.subr.bf16.mxu0 0
    %2963 = vmatpush1.bf16.msra.mxu0 0
    %2964 = vmatprep.subr.bf16.mxu0 0
    %2965 = vmatpush1.bf16.msra.mxu0 0
    %2966 = vmatprep.subr.bf16.mxu0 0
    %2967 = vmatpush1.bf16.msra.mxu0 0
    %2968 = vmatprep.subr.bf16.mxu0 0
    %2969 = vmatpush1.bf16.msra.mxu0 0
    %2970 = vmatprep.subr.bf16.mxu0 0
    %2971 = vmatpush1.bf16.msra.mxu0 0
    %2972 = vmatprep.subr.bf16.mxu0 0
    %2973 = vmatpush1.bf16.msra.mxu0 0
    %2974 = vmatprep.mubr.bf16.mxu0 0
    %2975 = vmatmul.mubr.bf16.gmra.mrb[0].mxu0 %v2708
    %v2976 = vpop.f32.mrb[0].mxu0
    %v2977 = vadd.f32 0.0, %v2976
    %v2978 = vpop.f32.mrb[0].mxu0
    %v2979 = vadd.f32 0.0, %v2978
    %v2980 = vpop.f32.mrb[0].mxu0
    %v2981 = vpop.f32.mrb[0].mxu0
    %2982 = vdwg.mxu0
    %v2983 = vadd.f32 %v2704, %v2936
    %v2984 = vadd.f32 %v2705, %v2938
    %v2985 = vadd.f32 %v2706, %v2977
    %v2986 = vadd.f32 %v2707, %v2979
    %v2987 = vxor.u32 %v2983, 2147483648
    %v2988 = vmul.f32 %v2987, 1.442695
    %v2989 = vpow.pop %v2988
    %v2990 = vadd.f32 %v2989, 1.0
    %v2991 = vrcp.pop %v2990
    %v2992 = vmul.f32 1.0, %v2991
    %v2993 = vxor.u32 %v2984, 2147483648
    %v2994 = vmul.f32 %v2993, 1.442695
    %v2995 = vpow.pop %v2994
    %v2996 = vadd.f32 %v2995, 1.0
    %v2997 = vrcp.pop %v2996
    %v2998 = vmul.f32 1.0, %v2997
    %v2999 = vtanh.pop %v2985
    %v3000 = vxor.u32 %v2986, 2147483648
    %v3001 = vmul.f32 %v3000, 1.442695
    %v3002 = vpow.pop %v3001
    %v3003 = vadd.f32 %v3002, 1.0
    %v3004 = vrcp.pop %v3003
    %v3005 = vmul.f32 1.0, %v3004
    %v3006 = vmul.f32 %v2998, %v2696
    %v3007 = vmul.f32 %v2992, %v2999
    %v3008 = vadd.f32 %v3006, %v3007
    %v3009 = vtanh.pop %v3008
    %v3010 = vmul.f32 %v3005, %v3009
    %s3011 = scalar_lea.vmem [#allocation5], 56
    %3012 = vst [vmem:[%s3011] sm:$0xff] %v3010
    %3013 = vst [vmem:[#allocation2] sm:$0xff] %v3010
    %3014 = vst [vmem:[#allocation3] sm:$0xff] %v3008
    %v3015 = vld [vmem:[#allocation5] sm:$0xff]
    %v3016 = vld [vmem:[#allocation5 + $0x8] sm:$0xff]
    %v3017 = vld [vmem:[#allocation5 + $0x10] sm:$0xff]
    %v3018 = vld [vmem:[#allocation5 + $0x18] sm:$0xff]
    %v3019 = vld [vmem:[#allocation5 + $0x20] sm:$0xff]
    %v3020 = vld [vmem:[#allocation5 + $0x28] sm:$0xff]
    %v3021 = vld [vmem:[#allocation5 + $0x30] sm:$0xff]
    %v3022 = vld [vmem:[#allocation5 + $0x38] sm:$0xff]
    %v3023 = vpack.c.bf16 %v3016, %v3015
    %v3024 = vpack.c.bf16 %v3018, %v3017
    %v3025 = vpack.c.bf16 %v3020, %v3019
    %v3026 = vpack.c.bf16 %v3022, %v3021
    %v3027 = vld [vmem:[#allocation15] sm:$0xf]
    %v3028 = vld [vmem:[#allocation15 + $0x4] sm:$0xf]
    %v3029 = vld [vmem:[#allocation15 + $0x8] sm:$0xf]
    %v3030 = vld [vmem:[#allocation15 + $0xc] sm:$0xf]
    %v3031 = vld [vmem:[#allocation15 + $0x10] sm:$0xf]
    %v3032 = vld [vmem:[#allocation15 + $0x14] sm:$0xf]
    %v3033 = vld [vmem:[#allocation15 + $0x18] sm:$0xf]
    %v3034 = vld [vmem:[#allocation15 + $0x1c] sm:$0xf]
    %v3035 = vld [vmem:[#allocation15 + $0x20] sm:$0xf]
    %v3036 = vld [vmem:[#allocation15 + $0x24] sm:$0xf]
    %v3037 = vld [vmem:[#allocation15 + $0x28] sm:$0xf]
    %v3038 = vld [vmem:[#allocation15 + $0x2c] sm:$0xf]
    %v3039 = vld [vmem:[#allocation15 + $0x30] sm:$0xf]
    %v3040 = vld [vmem:[#allocation15 + $0x34] sm:$0xf]
    %v3041 = vld [vmem:[#allocation15 + $0x38] sm:$0xf]
    %v3042 = vld [vmem:[#allocation15 + $0x3c] sm:$0xf]
    %v3043 = vld [vmem:[%s6] sm:$0x1]
    %v3045 = vlaneseq
    %v3046 = vshrl.u32 %v3045, 7
    %v3047 = vsub.s32 0, %v3046
    %v3048 = vrot.slane %v3043, %v3047
    %v3066 = vunpack.c.l.b16 %v3027
    %v3067 = vunpack.c.l.b16 %v3028
    %v3068 = vunpack.c.l.b16 %v3029
    %v3069 = vunpack.c.l.b16 %v3030
    %v3070 = vunpack.c.l.b16 %v3031
    %v3071 = vunpack.c.l.b16 %v3032
    %v3072 = vunpack.c.l.b16 %v3033
    %v3073 = vunpack.c.l.b16 %v3034
    %v3074 = vunpack.c.l.b16 %v3035
    %v3075 = vunpack.c.l.b16 %v3036
    %v3076 = vunpack.c.l.b16 %v3037
    %v3077 = vunpack.c.l.b16 %v3038
    %v3078 = vunpack.c.l.b16 %v3039
    %v3079 = vunpack.c.l.b16 %v3040
    %v3080 = vunpack.c.l.b16 %v3041
    %v3081 = vunpack.c.l.b16 %v3042
    %v3082 = vpack.c.b16 %v3067, %v3066
    %v3083 = vpack.c.b16 %v3069, %v3068
    %v3084 = vpack.c.b16 %v3071, %v3070
    %v3085 = vpack.c.b16 %v3073, %v3072
    %v3086 = vpack.c.b16 %v3075, %v3074
    %v3087 = vpack.c.b16 %v3077, %v3076
    %v3088 = vpack.c.b16 %v3079, %v3078
    %v3089 = vpack.c.b16 %v3081, %v3080
    %3098 = vmatprep.subr.bf16.mxu0 0
    %3099 = vmatpush1.bf16.msra.mxu0 %v3082
    %3100 = vmatprep.subr.bf16.mxu0 0
    %3101 = vmatpush1.bf16.msra.mxu0 %v3083
    %3102 = vmatprep.subr.bf16.mxu0 0
    %3103 = vmatpush1.bf16.msra.mxu0 %v3084
    %3104 = vmatprep.subr.bf16.mxu0 0
    %3105 = vmatpush1.bf16.msra.mxu0 %v3085
    %3106 = vmatprep.subr.bf16.mxu0 0
    %3107 = vmatpush1.bf16.msra.mxu0 %v3086
    %3108 = vmatprep.subr.bf16.mxu0 0
    %3109 = vmatpush1.bf16.msra.mxu0 %v3087
    %3110 = vmatprep.subr.bf16.mxu0 0
    %3111 = vmatpush1.bf16.msra.mxu0 %v3088
    %3112 = vmatprep.subr.bf16.mxu0 0
    %3113 = vmatpush1.bf16.msra.mxu0 %v3089
    %3114 = vmatprep.subr.bf16.mxu0 0
    %3115 = vmatpush1.bf16.msra.mxu0 0
    %3116 = vmatprep.subr.bf16.mxu0 0
    %3117 = vmatpush1.bf16.msra.mxu0 0
    %3118 = vmatprep.subr.bf16.mxu0 0
    %3119 = vmatpush1.bf16.msra.mxu0 0
    %3120 = vmatprep.subr.bf16.mxu0 0
    %3121 = vmatpush1.bf16.msra.mxu0 0
    %3122 = vmatprep.subr.bf16.mxu0 0
    %3123 = vmatpush1.bf16.msra.mxu0 0
    %3124 = vmatprep.subr.bf16.mxu0 0
    %3125 = vmatpush1.bf16.msra.mxu0 0
    %3126 = vmatprep.subr.bf16.mxu0 0
    %3127 = vmatpush1.bf16.msra.mxu0 0
    %3128 = vmatprep.subr.bf16.mxu0 0
    %3129 = vmatpush1.bf16.msra.mxu0 0
    %3130 = vmatprep.mubr.bf16.mxu0 0
    %3131 = vmatmul.mubr.bf16.gmra.mrb[0].mxu0 %v3023
    %v3132 = vpop.f32.mrb[0].mxu0
    %v3133 = vadd.f32 %v3048, %v3132
    %v3134 = vpop.f32.mrb[0].mxu0
    %v3135 = vpop.f32.mrb[0].mxu0
    %v3136 = vadd.f32 %v3048, %v3135
    %v3137 = vpop.f32.mrb[0].mxu0
    %3138 = vmatprep.mubr.bf16.mxu0 0
    %3139 = vmatmul.mubr.bf16.gmra.mrb[0].mxu0 %v3024
    %v3140 = vpop.f32.mrb[0].mxu0
    %v3141 = vadd.f32 %v3048, %v3140
    %v3142 = vpop.f32.mrb[0].mxu0
    %v3143 = vpop.f32.mrb[0].mxu0
    %v3144 = vadd.f32 %v3048, %v3143
    %v3145 = vpop.f32.mrb[0].mxu0
    %3146 = vmatprep.mubr.bf16.mxu0 0
    %3147 = vmatmul.mubr.bf16.gmra.mrb[0].mxu0 %v3025
    %v3148 = vpop.f32.mrb[0].mxu0
    %v3149 = vadd.f32 %v3048, %v3148
    %v3150 = vpop.f32.mrb[0].mxu0
    %v3151 = vpop.f32.mrb[0].mxu0
    %v3152 = vadd.f32 %v3048, %v3151
    %v3153 = vpop.f32.mrb[0].mxu0
    %3154 = vmatprep.mubr.bf16.mxu0 0
    %3155 = vmatmul.mubr.bf16.gmra.mrb[0].mxu0 %v3026
    %v3156 = vpop.f32.mrb[0].mxu0
    %v3157 = vadd.f32 %v3048, %v3156
    %v3158 = vpop.f32.mrb[0].mxu0
    %v3159 = vpop.f32.mrb[0].mxu0
    %v3160 = vadd.f32 %v3048, %v3159
    %v3161 = vpop.f32.mrb[0].mxu0
    %3162 = vdwg.mxu0
    %3163 = vst [vmem:[#allocation17] sm:$0xff] %v3133
    %3164 = vst [vmem:[#allocation17 + $0x8] sm:$0xff] %v3136
    %3165 = vst [vmem:[#allocation17 + $0x10] sm:$0xff] %v3141
    %3166 = vst [vmem:[#allocation17 + $0x18] sm:$0xff] %v3144
    %3167 = vst [vmem:[#allocation17 + $0x20] sm:$0xff] %v3149
    %3168 = vst [vmem:[#allocation17 + $0x28] sm:$0xff] %v3152
    %3169 = vst [vmem:[#allocation17 + $0x30] sm:$0xff] %v3157
    %3170 = vst [vmem:[#allocation17 + $0x38] sm:$0xff] %v3160
    // Predicated region
    $region58: #{tpu_custom_call.1} parent=1 // pred_check
      _
    $region59: #{tpu_custom_call.1} parent=1 // pred_check_branch
      %3172 = sbr.rel (0) target = $region61
    $region60: #{tpu_custom_call.1} parent=1 // pred_region
      %s3174 = ssub.s32 1024, 1024
      %3175 = vsyncadd [#allocation8], %s3174
      %s3176 = sshll.u32 [#allocation17], 4
      %s3177 = int_to_ptr.vmem [resolvable:$true] %s3176
      %3182 = dma.vmem_to_hbm [thread:$0]  %s3177, 1024, %s7, [#allocation8], 128, 128, 8
    $region61: #{tpu_custom_call.1} parent=1 // pred_fallthru
      _
    // Predicated region
    $region62: #{tpu_custom_call.1} parent=1 // pred_check
      _
    $region63: #{tpu_custom_call.1} parent=1 // pred_check_branch
      %3184 = sbr.rel (0) target = $region65
    $region64: #{tpu_custom_call.1} parent=1 // pred_region
      %3185 = dma.done [#allocation8], 1024
    $region65: #{tpu_custom_call.1} parent=1 // pred_fallthru
      _
    %3186 = vsyncpa [#allocation7], 1
    %3187 = vsyncpa [#allocation10], 1
    %3188 = vsyncpa [#allocation13], 1
    %3189 = vsyncpa [#allocation16], 1
    %3190 = vsyncpa [#allocation8], 1

</llo_original>
